<compile_context>
chip_gen: v7x
topology: tpu7x:2x2x1
jax: 0.10.0
libtpu: 0.0.40
codegen_flags: <defaults>
</compile_context>

<pallas_src>
import functools
import math

import numpy as np
import jax
import jax.numpy as jnp
from jax.experimental import pallas as pl
from jax.experimental.pallas import tpu as pltpu


# ----------------------------------------------------------------------------
# In-kernel helpers
# ----------------------------------------------------------------------------

def _layernorm(h, g, b):
    mean = jnp.mean(h, axis=-1, keepdims=True)
    var = jnp.mean((h - mean) ** 2, axis=-1, keepdims=True)
    return (h - mean) * jax.lax.rsqrt(var + 1e-5) * g + b


# ----------------------------------------------------------------------------
# Pallas kernels
# ----------------------------------------------------------------------------

def _fused_block_kernel(*refs, heads: int, causal: bool, with_ff: bool):
    """Fused MHA (+ optional FF) transformer sub-block, one batch per grid step.

    with_ff=True : out = LN2(FF(LN1(MHA(xq, xkv) + xq)) + LN1(...))
    with_ff=False: out = LN1(MHA(xq, xkv) + xq)
    """
    if with_ff:
        (xq_ref, xkv_ref, wq_ref, bq_ref, wk_ref, bk_ref, wv_ref, bv_ref,
         wo_ref, bo_ref, g1_ref, b1_ref,
         w1_ref, fb1_ref, w2_ref, fb2_ref, g2_ref, b2_ref, o_ref) = refs
    else:
        (xq_ref, xkv_ref, wq_ref, bq_ref, wk_ref, bk_ref, wv_ref, bv_ref,
         wo_ref, bo_ref, g1_ref, b1_ref, o_ref) = refs

    xq = xq_ref[0]                            # (Sq, E) f32
    xkv = xkv_ref[0]                          # (Sk, E) f32
    Sq, E = xq.shape
    Sk = xkv.shape[0]
    H = heads
    Dh = E // H
    scale = 1.0 / math.sqrt(Dh)

    bmm = functools.partial(jax.lax.dot_general,
                            preferred_element_type=jnp.float32)
    dn_proj = (((2,), (1,)), ((0,), (0,)))    # (H,S,A) x (H,A,B) -> (H,S,B)
    dn_qkt = (((2,), (2,)), ((0,), (0,)))     # (H,Sq,D) x (H,Sk,D) -> (H,Sq,Sk)
    dn_pv = (((2,), (1,)), ((0,), (0,)))      # (H,Sq,Sk) x (H,Sk,D) -> (H,Sq,D)

    # Head-batched projections: activations broadcast on a leading head axis,
    # weights pre-arranged head-major at init.  bf16 MXU operands, f32 accum.
    xq_b = jnp.broadcast_to(xq.astype(jnp.bfloat16)[None], (H, Sq, E))
    xkv_b = jnp.broadcast_to(xkv.astype(jnp.bfloat16)[None], (H, Sk, E))

    q = bmm(xq_b, wq_ref[...], dn_proj) + bq_ref[...]      # (H, Sq, Dh) f32
    k = bmm(xkv_b, wk_ref[...], dn_proj) + bk_ref[...]     # (H, Sk, Dh)
    v = bmm(xkv_b, wv_ref[...], dn_proj) + bv_ref[...]     # (H, Sk, Dh)

    # Scores: one batched contraction over all heads (no per-head loop).
    s = bmm(q.astype(jnp.bfloat16), k.astype(jnp.bfloat16), dn_qkt) * scale
    if causal:
        rows = jax.lax.broadcasted_iota(jnp.int32, (H, Sq, Sk), 1)
        cols = jax.lax.broadcasted_iota(jnp.int32, (H, Sq, Sk), 2)
        s = jnp.where(cols <= rows, s, -1e9)  # torch.tril look-ahead mask
    s = s - jnp.max(s, axis=-1, keepdims=True)
    p = jnp.exp(s)
    # Exact normalisation (approx=True is off by ~1e-3; review concern).
    p = p * pl.reciprocal(jnp.sum(p, axis=-1, keepdims=True), approx=False)

    o = bmm(p.astype(jnp.bfloat16), v.astype(jnp.bfloat16), dn_pv)  # (H,Sq,Dh)

    # Output projection in the head-batched layout: per-head (Dh,E) matmul
    # then a reduction over heads  ==  concat(head_outs) @ Wo.
    proj = jnp.sum(bmm(o.astype(jnp.bfloat16), wo_ref[...], dn_proj), axis=0)
    proj = proj + bo_ref[...]                                # (Sq, E) f32

    x1 = _layernorm(proj + xq, g1_ref[...], b1_ref[...])     # add & norm

    if with_ff:
        ffh = jnp.dot(x1.astype(jnp.bfloat16), w1_ref[...],
                      preferred_element_type=jnp.float32) + fb1_ref[...]
        ffh = jnp.maximum(ffh, 0.0)                          # ReLU in f32
        ff = jnp.dot(ffh.astype(jnp.bfloat16), w2_ref[...],
                     preferred_element_type=jnp.float32) + fb2_ref[...]
        x1 = _layernorm(ff + x1, g2_ref[...], b2_ref[...])

    o_ref[0] = x1


def _fc_softmax_kernel(y_ref, w_ref, b_ref, o_ref):
    """Final projection to the target vocabulary fused with softmax."""
    logits = jnp.dot(y_ref[...].astype(jnp.bfloat16), w_ref[...],
                     preferred_element_type=jnp.float32) + b_ref[...]
    logits = logits - jnp.max(logits, axis=-1, keepdims=True)
    e = jnp.exp(logits)
    o_ref[...] = e * pl.reciprocal(jnp.sum(e, axis=-1, keepdims=True),
                                   approx=False)


# ----------------------------------------------------------------------------
# Pallas wrappers
# ----------------------------------------------------------------------------

def _compiler_params(resident_bytes):
    # Explicit scoped-VMEM request: resident blocks x headroom for double
    # buffering + intermediates, clamped to sane bounds (review item 6).
    limit = int(min(96 << 20, max(8 << 20, 4 * resident_bytes + (2 << 20))))
    return pltpu.CompilerParams(dimension_semantics=("parallel",),
                                vmem_limit_bytes=limit)


def fused_attention_block(xq, xkv, attn, ln1_g, ln1_b,
                          ff=None, ln2_g=None, ln2_b=None,
                          *, heads, causal):
    """xq: (B, Sq, E) query stream, xkv: (B, Sk, E) key/value stream."""
    B, Sq, E = xq.shape
    Sk = xkv.shape[1]
    H = heads
    Dh = E // H
    with_ff = ff is not None

    def const(shape):
        # Grid-invariant block (whole array, same block every grid step).
        return pl.BlockSpec(shape, lambda i, _r=len(shape): (0,) * _r)

    args = [xq, xkv,
            attn["wq"], attn["bq"], attn["wk"], attn["bk"],
            attn["wv"], attn["bv"], attn["wo"], attn["bo"],
            ln1_g.reshape(1, E), ln1_b.reshape(1, E)]
    in_specs = [
        pl.BlockSpec((1, Sq, E), lambda i: (i, 0, 0)),
        pl.BlockSpec((1, Sk, E), lambda i: (i, 0, 0)),
        const((H, E, Dh)), const((H, 1, Dh)),
        const((H, E, Dh)), const((H, 1, Dh)),
        const((H, E, Dh)), const((H, 1, Dh)),
        const((H, Dh, E)), const((1, E)),
        const((1, E)), const((1, E)),
    ]
    if with_ff:
        F = ff["w1"].shape[1]
        args += [ff["w1"], ff["b1"].reshape(1, F),
                 ff["w2"], ff["b2"].reshape(1, E),
                 ln2_g.reshape(1, E), ln2_b.reshape(1, E)]
        in_specs += [const((E, F)), const((1, F)),
                     const((F, E)), const((1, E)),
                     const((1, E)), const((1, E))]

    kernel = functools.partial(_fused_block_kernel, heads=heads,
                               causal=causal, with_ff=with_ff)

    resident = ((2 * Sq + Sk) * E * 4                 # xq tile + out tile + xkv tile
                + sum(int(a.size) * a.dtype.itemsize for a in args[2:]))
    return pl.pallas_call(
        kernel,
        out_shape=jax.ShapeDtypeStruct((B, Sq, E), jnp.float32),
        grid=(B,),
        in_specs=in_specs,
        out_specs=pl.BlockSpec((1, Sq, E), lambda i: (i, 0, 0)),
        compiler_params=_compiler_params(resident),
    )(*args)


def fc_softmax(y, w, b):
    """softmax(y @ w + b, axis=-1); y: (B, S, E), w: (E, V) bf16, b: (V,)."""
    B, S, E = y.shape
    V = w.shape[1]
    M = B * S
    tm = M
    for cand in (512, 256, 128, 64, 32, 16, 8):
        if M >= cand and M % cand == 0:
            tm = cand
            break
    # TODO(synk): at real vocab sizes tile V on a second grid axis with an
    #             online max/sum and pad V to a multiple of 128.
    resident = tm * E * 4 + int(w.size) * w.dtype.itemsize + V * 4 + tm * V * 4
    out = pl.pallas_call(
        _fc_softmax_kernel,
        out_shape=jax.ShapeDtypeStruct((M, V), jnp.float32),
        grid=(pl.cdiv(M, tm),),
        in_specs=[
            pl.BlockSpec((tm, E), lambda i: (i, 0)),
            pl.BlockSpec((E, V), lambda i: (0, 0)),
            pl.BlockSpec((1, V), lambda i: (0, 0)),
        ],
        out_specs=pl.BlockSpec((tm, V), lambda i: (i, 0)),
        compiler_params=_compiler_params(resident),
    )(y.reshape(M, E), w, b.reshape(1, V))
    return out.reshape(B, S, V)


# ----------------------------------------------------------------------------
# Model (glue around the fused Pallas kernels)
# ----------------------------------------------------------------------------

def encoder_block(x, p, heads):
    return fused_attention_block(
        x, x, p["attn"], p["ln1_g"], p["ln1_b"],
        ff=dict(w1=p["ff_w1"], b1=p["ff_b1"], w2=p["ff_w2"], b2=p["ff_b2"]),
        ln2_g=p["ln2_g"], ln2_b=p["ln2_b"],
        heads=heads, causal=False)


def decoder_block(x, enc_out, p, heads):
    # Masked self-attention + add&norm (single fused kernel).
    x = fused_attention_block(x, x, p["self_attn"], p["ln1_g"], p["ln1_b"],
                              heads=heads, causal=True)
    # Cross-attention + add&norm + FF + add&norm (single fused kernel).
    x = fused_attention_block(
        x, enc_out, p["cross_attn"], p["ln2_g"], p["ln2_b"],
        ff=dict(w1=p["ff_w1"], b1=p["ff_b1"], w2=p["ff_w2"], b2=p["ff_b2"]),
        ln2_g=p["ln3_g"], ln2_b=p["ln3_b"],
        heads=heads, causal=False)
    return x


def positional_encoding(S, E):
    pos = np.arange(S)[:, None].astype(np.float32)
    i = np.arange(E)[None, :].astype(np.float32)
    angle = pos / np.power(10000.0, (2.0 * np.floor(i / 2.0)) / E)
    pe = np.zeros((S, E), dtype=np.float32)
    pe[:, 0::2] = np.sin(angle[:, 0::2])
    pe[:, 1::2] = np.cos(angle[:, 1::2])
    return jnp.asarray(pe)


def transformer_forward(params, sumber, target, heads):
    """sumber: (B, Ss) int32, target: (B, St) int32 ->
       (B, St, tgt_vocab) float32 probabilities (softmax over last dim)."""
    B, Ss = sumber.shape
    St = target.shape[1]
    E = params["src_emb"].shape[1]
    pe = positional_encoding(max(Ss, St), E)

    # Encoder (embedding gather + PE stay in plain JAX).
    x = params["src_emb"][sumber] + pe[None, :Ss, :]
    for p in params["enc_blocks"]:
        x = encoder_block(x, p, heads)
    enc_out = x

    # Decoder (look-ahead mask generated inside the kernel via iota).
    y = params["tgt_emb"][target] + pe[None, :St, :]
    for p in params["dec_blocks"]:
        y = decoder_block(y, enc_out, p, heads)

    return fc_softmax(y, params["fc_w"], params["fc_b"])


# ----------------------------------------------------------------------------
# Deterministic parameter initialization (PyTorch-style)
# ----------------------------------------------------------------------------

def _init_linear(key, fan_in, fan_out):
    k1, k2 = jax.random.split(key)
    bound = 1.0 / math.sqrt(fan_in)
    w = jax.random.uniform(k1, (fan_in, fan_out), jnp.float32, -bound, bound)
    b = jax.random.uniform(k2, (fan_out,), jnp.float32, -bound, bound)
    return w, b


def _init_mha(key, E, heads):
    Dh = E // heads
    ks = jax.random.split(key, 4)
    wq, bq = _init_linear(ks[0], E, E)
    wk, bk = _init_linear(ks[1], E, E)
    wv, bv = _init_linear(ks[2], E, E)
    wo, bo = _init_linear(ks[3], E, E)

    def head_major(w):  # columns h*Dh+d -> (H, E, Dh); bf16 weight storage
        return jnp.transpose(w.reshape(E, heads, Dh), (1, 0, 2)).astype(jnp.bfloat16)

    return dict(wq=head_major(wq), bq=bq.reshape(heads, 1, Dh),
                wk=head_major(wk), bk=bk.reshape(heads, 1, Dh),
                wv=head_major(wv), bv=bv.reshape(heads, 1, Dh),
                wo=wo.reshape(heads, Dh, E).astype(jnp.bfloat16),
                bo=bo.reshape(1, E))


def _init_enc_block(key, E, exp, heads):
    ks = jax.random.split(key, 3)
    w1, b1 = _init_linear(ks[1], E, exp * E)
    w2, b2 = _init_linear(ks[2], exp * E, E)
    return dict(attn=_init_mha(ks[0], E, heads),
                ln1_g=jnp.ones((E,), jnp.float32), ln1_b=jnp.zeros((E,), jnp.float32),
                ff_w1=w1.astype(jnp.bfloat16), ff_b1=b1,
                ff_w2=w2.astype(jnp.bfloat16), ff_b2=b2,
                ln2_g=jnp.ones((E,), jnp.float32), ln2_b=jnp.zeros((E,), jnp.float32))


def _init_dec_block(key, E, exp, heads):
    ks = jax.random.split(key, 4)
    w1, b1 = _init_linear(ks[2], E, exp * E)
    w2, b2 = _init_linear(ks[3], exp * E, E)
    return dict(self_attn=_init_mha(ks[0], E, heads),
                cross_attn=_init_mha(ks[1], E, heads),
                ln1_g=jnp.ones((E,), jnp.float32), ln1_b=jnp.zeros((E,), jnp.float32),
                ln2_g=jnp.ones((E,), jnp.float32), ln2_b=jnp.zeros((E,), jnp.float32),
                ff_w1=w1.astype(jnp.bfloat16), ff_b1=b1,
                ff_w2=w2.astype(jnp.bfloat16), ff_b2=b2,
                ln3_g=jnp.ones((E,), jnp.float32), ln3_b=jnp.zeros((E,), jnp.float32))


def init_transformer(key, E, src_vocab, tgt_vocab, n_blocks, exp, heads):
    ks = jax.random.split(key, 3 + 2 * n_blocks)
    src_emb = jax.random.normal(ks[0], (src_vocab, E), jnp.float32)
    tgt_emb = jax.random.normal(ks[1], (tgt_vocab, E), jnp.float32)
    fc_w, fc_b = _init_linear(ks[2], E, tgt_vocab)
    enc_blocks = [_init_enc_block(ks[3 + i], E, exp, heads) for i in range(n_blocks)]
    dec_blocks = [_init_dec_block(ks[3 + n_blocks + i], E, exp, heads)
                  for i in range(n_blocks)]
    return dict(src_emb=src_emb, tgt_emb=tgt_emb,
                fc_w=fc_w.astype(jnp.bfloat16), fc_b=fc_b,
                enc_blocks=enc_blocks, dec_blocks=dec_blocks)


# ----------------------------------------------------------------------------
# Main
# ----------------------------------------------------------------------------

if __name__ == "__main__":
    # Small synthetic configuration consistent with the module signature.
    dimensi_embedding = 32
    ukuran_sumber_vocab = 16
    ukuran_target_vocab = 16
    panjang_sekuens = 8
    jumlah_block = 2
    faktor_ekspansi = 4
    heads = 4
    batch = 2

    key = jax.random.PRNGKey(0)
    k_params, k_src, k_tgt = jax.random.split(key, 3)

    params = init_transformer(k_params, dimensi_embedding, ukuran_sumber_vocab,
                              ukuran_target_vocab, jumlah_block,
                              faktor_ekspansi, heads)

    sumber = jax.random.randint(k_src, (batch, panjang_sekuens), 0,
                                ukuran_sumber_vocab, dtype=jnp.int32)
    target = jax.random.randint(k_tgt, (batch, panjang_sekuens), 0,
                                ukuran_target_vocab, dtype=jnp.int32)

    fwd = jax.jit(functools.partial(transformer_forward, heads=heads))
    out = fwd(params, sumber, target)
    out = jax.block_until_ready(out)

    assert out.shape == (batch, panjang_sekuens, ukuran_target_vocab)
    assert bool(jnp.all(jnp.isfinite(out)))
    # softmax rows sum to 1 (exact normalisation in the fc+softmax kernel)
    assert bool(jnp.allclose(jnp.sum(out, axis=-1), 1.0, atol=1e-3))
    print("KERNEL_OK")
</pallas_src>

<mosaic_0001>
module attributes {stable_mosaic.version = 11 : i64} {
  func.func @_fused_block_kernel(%arg0: i32, %arg1: memref<1x8x32xf32, #tpu.memory_space<vmem>>, %arg2: memref<1x8x32xf32, #tpu.memory_space<vmem>>, %arg3: memref<4x32x8xbf16, #tpu.memory_space<vmem>>, %arg4: memref<4x1x8xf32, #tpu.memory_space<vmem>>, %arg5: memref<4x32x8xbf16, #tpu.memory_space<vmem>>, %arg6: memref<4x1x8xf32, #tpu.memory_space<vmem>>, %arg7: memref<4x32x8xbf16, #tpu.memory_space<vmem>>, %arg8: memref<4x1x8xf32, #tpu.memory_space<vmem>>, %arg9: memref<4x8x32xbf16, #tpu.memory_space<vmem>>, %arg10: memref<1x32xf32, #tpu.memory_space<vmem>>, %arg11: memref<1x32xf32, #tpu.memory_space<vmem>>, %arg12: memref<1x32xf32, #tpu.memory_space<vmem>>, %arg13: memref<1x8x32xf32, #tpu.memory_space<vmem>>) attributes {dimension_semantics = [#tpu.dimension_semantics<parallel>], iteration_bounds = array<i64: 2>, scalar_prefetch = 0 : i64, scratch_operands = 0 : i64, tpu.core_type = #tpu.core_type<tc>, window_params = [{transform_indices = @transform_0, window_bounds = array<i64: 1, 8, 32>}, {transform_indices = @transform_1, window_bounds = array<i64: 1, 8, 32>}, {pipeline_mode = #tpu.pipeline_mode<synchronous>, transform_indices = @transform_2, window_bounds = array<i64: 4, 32, 8>}, {pipeline_mode = #tpu.pipeline_mode<synchronous>, transform_indices = @transform_3, window_bounds = array<i64: 4, 1, 8>}, {pipeline_mode = #tpu.pipeline_mode<synchronous>, transform_indices = @transform_4, window_bounds = array<i64: 4, 32, 8>}, {pipeline_mode = #tpu.pipeline_mode<synchronous>, transform_indices = @transform_5, window_bounds = array<i64: 4, 1, 8>}, {pipeline_mode = #tpu.pipeline_mode<synchronous>, transform_indices = @transform_6, window_bounds = array<i64: 4, 32, 8>}, {pipeline_mode = #tpu.pipeline_mode<synchronous>, transform_indices = @transform_7, window_bounds = array<i64: 4, 1, 8>}, {pipeline_mode = #tpu.pipeline_mode<synchronous>, transform_indices = @transform_8, window_bounds = array<i64: 4, 8, 32>}, {pipeline_mode = #tpu.pipeline_mode<synchronous>, transform_indices = @transform_9, window_bounds = array<i64: 1, 32>}, {pipeline_mode = #tpu.pipeline_mode<synchronous>, transform_indices = @transform_10, window_bounds = array<i64: 1, 32>}, {pipeline_mode = #tpu.pipeline_mode<synchronous>, transform_indices = @transform_11, window_bounds = array<i64: 1, 32>}, {transform_indices = @transform_12, window_bounds = array<i64: 1, 8, 32>}]} {
    %c0 = arith.constant 0 : index
    %c0_0 = arith.constant 0 : index
    %c0_1 = arith.constant 0 : index
    %0 = vector.load %arg1[%c0, %c0_0, %c0_1] : memref<1x8x32xf32, #tpu.memory_space<vmem>>, vector<1x8x32xf32>
    %1 = vector.shape_cast %0 : vector<1x8x32xf32> to vector<8x32xf32>
    %c0_2 = arith.constant 0 : index
    %c0_3 = arith.constant 0 : index
    %c0_4 = arith.constant 0 : index
    %2 = vector.load %arg2[%c0_2, %c0_3, %c0_4] : memref<1x8x32xf32, #tpu.memory_space<vmem>>, vector<1x8x32xf32>
    %3 = vector.shape_cast %2 : vector<1x8x32xf32> to vector<8x32xf32>
    %4 = arith.truncf %1 : vector<8x32xf32> to vector<8x32xbf16>
    %5 = vector.shape_cast %4 : vector<8x32xbf16> to vector<1x8x32xbf16>
    %6 = vector.shape_cast %5 : vector<1x8x32xbf16> to vector<1x8x32xbf16>
    %7 = vector.broadcast %6 : vector<1x8x32xbf16> to vector<4x8x32xbf16>
    %8 = arith.truncf %3 : vector<8x32xf32> to vector<8x32xbf16>
    %9 = vector.shape_cast %8 : vector<8x32xbf16> to vector<1x8x32xbf16>
    %10 = vector.shape_cast %9 : vector<1x8x32xbf16> to vector<1x8x32xbf16>
    %11 = vector.broadcast %10 : vector<1x8x32xbf16> to vector<4x8x32xbf16>
    %c0_5 = arith.constant 0 : index
    %c0_6 = arith.constant 0 : index
    %c0_7 = arith.constant 0 : index
    %12 = vector.load %arg3[%c0_5, %c0_6, %c0_7] : memref<4x32x8xbf16, #tpu.memory_space<vmem>>, vector<4x32x8xbf16>
    %cst = arith.constant dense<0.000000e+00> : vector<4x8x8xf32>
    %13 = tpu.matmul %7, %12, %cst {dimension_numbers = #tpu.dot_dimension_numbers<[2], [1], [1], [2], [0, 0, 0, 1, 1, 2], [0], [0]>} : vector<4x8x32xbf16>, vector<4x32x8xbf16>, vector<4x8x8xf32> -> vector<4x8x8xf32>
    %c0_8 = arith.constant 0 : index
    %c0_9 = arith.constant 0 : index
    %c0_10 = arith.constant 0 : index
    %14 = vector.load %arg4[%c0_8, %c0_9, %c0_10] : memref<4x1x8xf32, #tpu.memory_space<vmem>>, vector<4x1x8xf32>
    %15 = vector.broadcast %14 : vector<4x1x8xf32> to vector<4x8x8xf32>
    %16 = arith.addf %13, %15 : vector<4x8x8xf32>
    %c0_11 = arith.constant 0 : index
    %c0_12 = arith.constant 0 : index
    %c0_13 = arith.constant 0 : index
    %17 = vector.load %arg5[%c0_11, %c0_12, %c0_13] : memref<4x32x8xbf16, #tpu.memory_space<vmem>>, vector<4x32x8xbf16>
    %cst_14 = arith.constant dense<0.000000e+00> : vector<4x8x8xf32>
    %18 = tpu.matmul %11, %17, %cst_14 {dimension_numbers = #tpu.dot_dimension_numbers<[2], [1], [1], [2], [0, 0, 0, 1, 1, 2], [0], [0]>} : vector<4x8x32xbf16>, vector<4x32x8xbf16>, vector<4x8x8xf32> -> vector<4x8x8xf32>
    %c0_15 = arith.constant 0 : index
    %c0_16 = arith.constant 0 : index
    %c0_17 = arith.constant 0 : index
    %19 = vector.load %arg6[%c0_15, %c0_16, %c0_17] : memref<4x1x8xf32, #tpu.memory_space<vmem>>, vector<4x1x8xf32>
    %20 = vector.broadcast %19 : vector<4x1x8xf32> to vector<4x8x8xf32>
    %21 = arith.addf %18, %20 : vector<4x8x8xf32>
    %c0_18 = arith.constant 0 : index
    %c0_19 = arith.constant 0 : index
    %c0_20 = arith.constant 0 : index
    %22 = vector.load %arg7[%c0_18, %c0_19, %c0_20] : memref<4x32x8xbf16, #tpu.memory_space<vmem>>, vector<4x32x8xbf16>
    %cst_21 = arith.constant dense<0.000000e+00> : vector<4x8x8xf32>
    %23 = tpu.matmul %11, %22, %cst_21 {dimension_numbers = #tpu.dot_dimension_numbers<[2], [1], [1], [2], [0, 0, 0, 1, 1, 2], [0], [0]>} : vector<4x8x32xbf16>, vector<4x32x8xbf16>, vector<4x8x8xf32> -> vector<4x8x8xf32>
    %c0_22 = arith.constant 0 : index
    %c0_23 = arith.constant 0 : index
    %c0_24 = arith.constant 0 : index
    %24 = vector.load %arg8[%c0_22, %c0_23, %c0_24] : memref<4x1x8xf32, #tpu.memory_space<vmem>>, vector<4x1x8xf32>
    %25 = vector.broadcast %24 : vector<4x1x8xf32> to vector<4x8x8xf32>
    %26 = arith.addf %23, %25 : vector<4x8x8xf32>
    %27 = arith.truncf %16 : vector<4x8x8xf32> to vector<4x8x8xbf16>
    %28 = arith.truncf %21 : vector<4x8x8xf32> to vector<4x8x8xbf16>
    %cst_25 = arith.constant dense<0.000000e+00> : vector<4x8x8xf32>
    %29 = tpu.matmul %27, %28, %cst_25 {dimension_numbers = #tpu.dot_dimension_numbers<[2], [2], [1], [1], [0, 0, 0, 1, 1, 1], [0], [0]>} : vector<4x8x8xbf16>, vector<4x8x8xbf16>, vector<4x8x8xf32> -> vector<4x8x8xf32>
    %cst_26 = arith.constant 0.353553385 : f32
    %30 = vector.broadcast %cst_26 : f32 to vector<4x8x8xf32>
    %31 = arith.mulf %29, %30 : vector<4x8x8xf32>
    %32 = tpu.iota {dimensions = array<i32: 1>} : vector<4x8x8xi32>
    %33 = tpu.iota {dimensions = array<i32: 2>} : vector<4x8x8xi32>
    %34 = arith.cmpi sle, %33, %32 : vector<4x8x8xi32>
    %cst_27 = arith.constant -1.000000e+09 : f32
    %35 = vector.broadcast %cst_27 : f32 to vector<4x8x8xf32>
    %36 = arith.select %34, %31, %35 : vector<4x8x8xi1>, vector<4x8x8xf32>
    %cst_28 = arith.constant dense<0xFF800000> : vector<4x8xf32>
    %37 = vector.multi_reduction <maximumf>, %36, %cst_28 [2] : vector<4x8x8xf32> to vector<4x8xf32>
    %38 = vector.shape_cast %37 : vector<4x8xf32> to vector<4x8x1xf32>
    %39 = vector.broadcast %38 : vector<4x8x1xf32> to vector<4x8x8xf32>
    %40 = arith.subf %36, %39 : vector<4x8x8xf32>
    %41 = math.exp %40 : vector<4x8x8xf32>
    %cst_29 = arith.constant dense<0.000000e+00> : vector<4x8xf32>
    %42 = vector.multi_reduction <add>, %41, %cst_29 [2] : vector<4x8x8xf32> to vector<4x8xf32>
    %43 = vector.shape_cast %42 : vector<4x8xf32> to vector<4x8x1xf32>
    %44 = tpu.reciprocal %43 : vector<4x8x1xf32> -> vector<4x8x1xf32>
    %45 = vector.broadcast %44 : vector<4x8x1xf32> to vector<4x8x8xf32>
    %46 = arith.mulf %41, %45 : vector<4x8x8xf32>
    %47 = arith.truncf %46 : vector<4x8x8xf32> to vector<4x8x8xbf16>
    %48 = arith.truncf %26 : vector<4x8x8xf32> to vector<4x8x8xbf16>
    %cst_30 = arith.constant dense<0.000000e+00> : vector<4x8x8xf32>
    %49 = tpu.matmul %47, %48, %cst_30 {dimension_numbers = #tpu.dot_dimension_numbers<[2], [1], [1], [2], [0, 0, 0, 1, 1, 2], [0], [0]>} : vector<4x8x8xbf16>, vector<4x8x8xbf16>, vector<4x8x8xf32> -> vector<4x8x8xf32>
    %50 = arith.truncf %49 : vector<4x8x8xf32> to vector<4x8x8xbf16>
    %c0_31 = arith.constant 0 : index
    %c0_32 = arith.constant 0 : index
    %c0_33 = arith.constant 0 : index
    %51 = vector.load %arg9[%c0_31, %c0_32, %c0_33] : memref<4x8x32xbf16, #tpu.memory_space<vmem>>, vector<4x8x32xbf16>
    %cst_34 = arith.constant dense<0.000000e+00> : vector<4x8x32xf32>
    %52 = tpu.matmul %50, %51, %cst_34 {dimension_numbers = #tpu.dot_dimension_numbers<[2], [1], [1], [2], [0, 0, 0, 1, 1, 2], [0], [0]>} : vector<4x8x8xbf16>, vector<4x8x32xbf16>, vector<4x8x32xf32> -> vector<4x8x32xf32>
    %cst_35 = arith.constant dense<0.000000e+00> : vector<8x32xf32>
    %53 = vector.multi_reduction <add>, %52, %cst_35 [0] : vector<4x8x32xf32> to vector<8x32xf32>
    %c0_36 = arith.constant 0 : index
    %c0_37 = arith.constant 0 : index
    %54 = vector.load %arg10[%c0_36, %c0_37] : memref<1x32xf32, #tpu.memory_space<vmem>>, vector<1x32xf32>
    %55 = vector.broadcast %54 : vector<1x32xf32> to vector<8x32xf32>
    %56 = arith.addf %53, %55 : vector<8x32xf32>
    %57 = arith.addf %56, %1 : vector<8x32xf32>
    %c0_38 = arith.constant 0 : index
    %c0_39 = arith.constant 0 : index
    %58 = vector.load %arg11[%c0_38, %c0_39] : memref<1x32xf32, #tpu.memory_space<vmem>>, vector<1x32xf32>
    %c0_40 = arith.constant 0 : index
    %c0_41 = arith.constant 0 : index
    %59 = vector.load %arg12[%c0_40, %c0_41] : memref<1x32xf32, #tpu.memory_space<vmem>>, vector<1x32xf32>
    %cst_42 = arith.constant dense<0.000000e+00> : vector<8xf32>
    %60 = vector.multi_reduction <add>, %57, %cst_42 [1] : vector<8x32xf32> to vector<8xf32>
    %61 = vector.shape_cast %60 : vector<8xf32> to vector<8x1xf32>
    %cst_43 = arith.constant 3.200000e+01 : f32
    %62 = vector.broadcast %cst_43 : f32 to vector<8x1xf32>
    %63 = arith.divf %61, %62 : vector<8x1xf32>
    %64 = vector.broadcast %63 : vector<8x1xf32> to vector<8x32xf32>
    %65 = arith.subf %57, %64 : vector<8x32xf32>
    %66 = arith.mulf %65, %65 : vector<8x32xf32>
    %cst_44 = arith.constant dense<0.000000e+00> : vector<8xf32>
    %67 = vector.multi_reduction <add>, %66, %cst_44 [1] : vector<8x32xf32> to vector<8xf32>
    %68 = vector.shape_cast %67 : vector<8xf32> to vector<8x1xf32>
    %cst_45 = arith.constant 3.200000e+01 : f32
    %69 = vector.broadcast %cst_45 : f32 to vector<8x1xf32>
    %70 = arith.divf %68, %69 : vector<8x1xf32>
    %71 = vector.broadcast %63 : vector<8x1xf32> to vector<8x32xf32>
    %72 = arith.subf %57, %71 : vector<8x32xf32>
    %cst_46 = arith.constant 9.99999974E-6 : f32
    %73 = vector.broadcast %cst_46 : f32 to vector<8x1xf32>
    %74 = arith.addf %70, %73 : vector<8x1xf32>
    %75 = math.rsqrt %74 : vector<8x1xf32>
    %76 = vector.broadcast %75 : vector<8x1xf32> to vector<8x32xf32>
    %77 = arith.mulf %72, %76 : vector<8x32xf32>
    %78 = vector.broadcast %58 : vector<1x32xf32> to vector<8x32xf32>
    %79 = arith.mulf %77, %78 : vector<8x32xf32>
    %80 = vector.broadcast %59 : vector<1x32xf32> to vector<8x32xf32>
    %81 = arith.addf %79, %80 : vector<8x32xf32>
    %c0_47 = arith.constant 0 : index
    %c0_48 = arith.constant 0 : index
    %c0_49 = arith.constant 0 : index
    %82 = vector.load %arg13[%c0_47, %c0_48, %c0_49] : memref<1x8x32xf32, #tpu.memory_space<vmem>>, vector<1x8x32xf32>
    %83 = vector.shape_cast %82 : vector<1x8x32xf32> to vector<8x32xf32>
    %84 = vector.shape_cast %81 : vector<8x32xf32> to vector<1x8x32xf32>
    tpu.vector_store %arg13[%c0_47, %c0_48, %c0_49], %84 {strides = array<i32>} : memref<1x8x32xf32, #tpu.memory_space<vmem>>, vector<1x8x32xf32>,
    return
  }
  func.func @transform_0(%arg0: i32) -> (i32, i32, i32) {
    %c0_i32 = arith.constant 0 : i32
    %c0_i32_0 = arith.constant 0 : i32
    %c0_i32_1 = arith.constant 0 : i32
    return %arg0, %c0_i32, %c0_i32_0 : i32, i32, i32
  }
  func.func @transform_1(%arg0: i32) -> (i32, i32, i32) {
    %c0_i32 = arith.constant 0 : i32
    %c0_i32_0 = arith.constant 0 : i32
    %c0_i32_1 = arith.constant 0 : i32
    return %arg0, %c0_i32, %c0_i32_0 : i32, i32, i32
  }
  func.func @transform_2(%arg0: i32) -> (i32, i32, i32) {
    %c0_i32 = arith.constant 0 : i32
    %c0_i32_0 = arith.constant 0 : i32
    %c0_i32_1 = arith.constant 0 : i32
    %c0_i32_2 = arith.constant 0 : i32
    return %c0_i32, %c0_i32_0, %c0_i32_1 : i32, i32, i32
  }
  func.func @transform_3(%arg0: i32) -> (i32, i32, i32) {
    %c0_i32 = arith.constant 0 : i32
    %c0_i32_0 = arith.constant 0 : i32
    %c0_i32_1 = arith.constant 0 : i32
    %c0_i32_2 = arith.constant 0 : i32
    return %c0_i32, %c0_i32_0, %c0_i32_1 : i32, i32, i32
  }
  func.func @transform_4(%arg0: i32) -> (i32, i32, i32) {
    %c0_i32 = arith.constant 0 : i32
    %c0_i32_0 = arith.constant 0 : i32
    %c0_i32_1 = arith.constant 0 : i32
    %c0_i32_2 = arith.constant 0 : i32
    return %c0_i32, %c0_i32_0, %c0_i32_1 : i32, i32, i32
  }
  func.func @transform_5(%arg0: i32) -> (i32, i32, i32) {
    %c0_i32 = arith.constant 0 : i32
    %c0_i32_0 = arith.constant 0 : i32
    %c0_i32_1 = arith.constant 0 : i32
    %c0_i32_2 = arith.constant 0 : i32
    return %c0_i32, %c0_i32_0, %c0_i32_1 : i32, i32, i32
  }
  func.func @transform_6(%arg0: i32) -> (i32, i32, i32) {
    %c0_i32 = arith.constant 0 : i32
    %c0_i32_0 = arith.constant 0 : i32
    %c0_i32_1 = arith.constant 0 : i32
    %c0_i32_2 = arith.constant 0 : i32
    return %c0_i32, %c0_i32_0, %c0_i32_1 : i32, i32, i32
  }
  func.func @transform_7(%arg0: i32) -> (i32, i32, i32) {
    %c0_i32 = arith.constant 0 : i32
    %c0_i32_0 = arith.constant 0 : i32
    %c0_i32_1 = arith.constant 0 : i32
    %c0_i32_2 = arith.constant 0 : i32
    return %c0_i32, %c0_i32_0, %c0_i32_1 : i32, i32, i32
  }
  func.func @transform_8(%arg0: i32) -> (i32, i32, i32) {
    %c0_i32 = arith.constant 0 : i32
    %c0_i32_0 = arith.constant 0 : i32
    %c0_i32_1 = arith.constant 0 : i32
    %c0_i32_2 = arith.constant 0 : i32
    return %c0_i32, %c0_i32_0, %c0_i32_1 : i32, i32, i32
  }
  func.func @transform_9(%arg0: i32) -> (i32, i32) {
    %c0_i32 = arith.constant 0 : i32
    %c0_i32_0 = arith.constant 0 : i32
    %c0_i32_1 = arith.constant 0 : i32
    return %c0_i32, %c0_i32_0 : i32, i32
  }
  func.func @transform_10(%arg0: i32) -> (i32, i32) {
    %c0_i32 = arith.constant 0 : i32
    %c0_i32_0 = arith.constant 0 : i32
    %c0_i32_1 = arith.constant 0 : i32
    return %c0_i32, %c0_i32_0 : i32, i32
  }
  func.func @transform_11(%arg0: i32) -> (i32, i32) {
    %c0_i32 = arith.constant 0 : i32
    %c0_i32_0 = arith.constant 0 : i32
    %c0_i32_1 = arith.constant 0 : i32
    return %c0_i32, %c0_i32_0 : i32, i32
  }
  func.func @transform_12(%arg0: i32) -> (i32, i32, i32) {
    %c0_i32 = arith.constant 0 : i32
    %c0_i32_0 = arith.constant 0 : i32
    %c0_i32_1 = arith.constant 0 : i32
    return %arg0, %c0_i32, %c0_i32_0 : i32, i32, i32
  }
}

module attributes {stable_mosaic.version = 11 : i64} {
  func.func @_fc_softmax_kernel(%arg0: i32, %arg1: memref<16x32xf32, #tpu.memory_space<vmem>>, %arg2: memref<32x16xbf16, #tpu.memory_space<vmem>>, %arg3: memref<1x16xf32, #tpu.memory_space<vmem>>, %arg4: memref<16x16xf32, #tpu.memory_space<vmem>>) attributes {dimension_semantics = [#tpu.dimension_semantics<parallel>], iteration_bounds = array<i64: 1>, scalar_prefetch = 0 : i64, scratch_operands = 0 : i64, tpu.core_type = #tpu.core_type<tc>, window_params = [{transform_indices = @transform_0, window_bounds = array<i64: 16, 32>}, {pipeline_mode = #tpu.pipeline_mode<synchronous>, transform_indices = @transform_1, window_bounds = array<i64: 32, 16>}, {pipeline_mode = #tpu.pipeline_mode<synchronous>, transform_indices = @transform_2, window_bounds = array<i64: 1, 16>}, {transform_indices = @transform_3, window_bounds = array<i64: 16, 16>}]} {
    %c0 = arith.constant 0 : index
    %c0_0 = arith.constant 0 : index
    %0 = vector.load %arg1[%c0, %c0_0] : memref<16x32xf32, #tpu.memory_space<vmem>>, vector<16x32xf32>
    %1 = arith.truncf %0 : vector<16x32xf32> to vector<16x32xbf16>
    %c0_1 = arith.constant 0 : index
    %c0_2 = arith.constant 0 : index
    %2 = vector.load %arg2[%c0_1, %c0_2] : memref<32x16xbf16, #tpu.memory_space<vmem>>, vector<32x16xbf16>
    %cst = arith.constant dense<0.000000e+00> : vector<16x16xf32>
    %3 = tpu.matmul %1, %2, %cst {dimension_numbers = #tpu.dot_dimension_numbers<[1], [0], [0], [1], [0, 0, 1, 1], [], []>} : vector<16x32xbf16>, vector<32x16xbf16>, vector<16x16xf32> -> vector<16x16xf32>
    %c0_3 = arith.constant 0 : index
    %c0_4 = arith.constant 0 : index
    %4 = vector.load %arg3[%c0_3, %c0_4] : memref<1x16xf32, #tpu.memory_space<vmem>>, vector<1x16xf32>
    %5 = vector.broadcast %4 : vector<1x16xf32> to vector<16x16xf32>
    %6 = arith.addf %3, %5 : vector<16x16xf32>
    %cst_5 = arith.constant dense<0xFF800000> : vector<16xf32>
    %7 = vector.multi_reduction <maximumf>, %6, %cst_5 [1] : vector<16x16xf32> to vector<16xf32>
    %8 = vector.shape_cast %7 : vector<16xf32> to vector<16x1xf32>
    %9 = vector.broadcast %8 : vector<16x1xf32> to vector<16x16xf32>
    %10 = arith.subf %6, %9 : vector<16x16xf32>
    %11 = math.exp %10 : vector<16x16xf32>
    %cst_6 = arith.constant dense<0.000000e+00> : vector<16xf32>
    %12 = vector.multi_reduction <add>, %11, %cst_6 [1] : vector<16x16xf32> to vector<16xf32>
    %13 = vector.shape_cast %12 : vector<16xf32> to vector<16x1xf32>
    %14 = tpu.reciprocal %13 : vector<16x1xf32> -> vector<16x1xf32>
    %15 = vector.broadcast %14 : vector<16x1xf32> to vector<16x16xf32>
    %16 = arith.mulf %11, %15 : vector<16x16xf32>
    %c0_7 = arith.constant 0 : index
    %c0_8 = arith.constant 0 : index
    %17 = vector.load %arg4[%c0_7, %c0_8] : memref<16x16xf32, #tpu.memory_space<vmem>>, vector<16x16xf32>
    tpu.vector_store %arg4[%c0_7, %c0_8], %16 {strides = array<i32>} : memref<16x16xf32, #tpu.memory_space<vmem>>, vector<16x16xf32>,
    return
  }
  func.func @transform_0(%arg0: i32) -> (i32, i32) {
    %c0_i32 = arith.constant 0 : i32
    %c0_i32_0 = arith.constant 0 : i32
    return %arg0, %c0_i32 : i32, i32
  }
  func.func @transform_1(%arg0: i32) -> (i32, i32) {
    %c0_i32 = arith.constant 0 : i32
    %c0_i32_0 = arith.constant 0 : i32
    %c0_i32_1 = arith.constant 0 : i32
    return %c0_i32, %c0_i32_0 : i32, i32
  }
  func.func @transform_2(%arg0: i32) -> (i32, i32) {
    %c0_i32 = arith.constant 0 : i32
    %c0_i32_0 = arith.constant 0 : i32
    %c0_i32_1 = arith.constant 0 : i32
    return %c0_i32, %c0_i32_0 : i32, i32
  }
  func.func @transform_3(%arg0: i32) -> (i32, i32) {
    %c0_i32 = arith.constant 0 : i32
    %c0_i32_0 = arith.constant 0 : i32
    return %arg0, %c0_i32 : i32, i32
  }
}

module attributes {stable_mosaic.version = 11 : i64} {
  func.func @_fused_block_kernel(%arg0: i32, %arg1: memref<1x8x32xf32, #tpu.memory_space<vmem>>, %arg2: memref<1x8x32xf32, #tpu.memory_space<vmem>>, %arg3: memref<4x32x8xbf16, #tpu.memory_space<vmem>>, %arg4: memref<4x1x8xf32, #tpu.memory_space<vmem>>, %arg5: memref<4x32x8xbf16, #tpu.memory_space<vmem>>, %arg6: memref<4x1x8xf32, #tpu.memory_space<vmem>>, %arg7: memref<4x32x8xbf16, #tpu.memory_space<vmem>>, %arg8: memref<4x1x8xf32, #tpu.memory_space<vmem>>, %arg9: memref<4x8x32xbf16, #tpu.memory_space<vmem>>, %arg10: memref<1x32xf32, #tpu.memory_space<vmem>>, %arg11: memref<1x32xf32, #tpu.memory_space<vmem>>, %arg12: memref<1x32xf32, #tpu.memory_space<vmem>>, %arg13: memref<32x128xbf16, #tpu.memory_space<vmem>>, %arg14: memref<1x128xf32, #tpu.memory_space<vmem>>, %arg15: memref<128x32xbf16, #tpu.memory_space<vmem>>, %arg16: memref<1x32xf32, #tpu.memory_space<vmem>>, %arg17: memref<1x32xf32, #tpu.memory_space<vmem>>, %arg18: memref<1x32xf32, #tpu.memory_space<vmem>>, %arg19: memref<1x8x32xf32, #tpu.memory_space<vmem>>) attributes {dimension_semantics = [#tpu.dimension_semantics<parallel>], iteration_bounds = array<i64: 2>, scalar_prefetch = 0 : i64, scratch_operands = 0 : i64, tpu.core_type = #tpu.core_type<tc>, window_params = [{transform_indices = @transform_0, window_bounds = array<i64: 1, 8, 32>}, {transform_indices = @transform_1, window_bounds = array<i64: 1, 8, 32>}, {pipeline_mode = #tpu.pipeline_mode<synchronous>, transform_indices = @transform_2, window_bounds = array<i64: 4, 32, 8>}, {pipeline_mode = #tpu.pipeline_mode<synchronous>, transform_indices = @transform_3, window_bounds = array<i64: 4, 1, 8>}, {pipeline_mode = #tpu.pipeline_mode<synchronous>, transform_indices = @transform_4, window_bounds = array<i64: 4, 32, 8>}, {pipeline_mode = #tpu.pipeline_mode<synchronous>, transform_indices = @transform_5, window_bounds = array<i64: 4, 1, 8>}, {pipeline_mode = #tpu.pipeline_mode<synchronous>, transform_indices = @transform_6, window_bounds = array<i64: 4, 32, 8>}, {pipeline_mode = #tpu.pipeline_mode<synchronous>, transform_indices = @transform_7, window_bounds = array<i64: 4, 1, 8>}, {pipeline_mode = #tpu.pipeline_mode<synchronous>, transform_indices = @transform_8, window_bounds = array<i64: 4, 8, 32>}, {pipeline_mode = #tpu.pipeline_mode<synchronous>, transform_indices = @transform_9, window_bounds = array<i64: 1, 32>}, {pipeline_mode = #tpu.pipeline_mode<synchronous>, transform_indices = @transform_10, window_bounds = array<i64: 1, 32>}, {pipeline_mode = #tpu.pipeline_mode<synchronous>, transform_indices = @transform_11, window_bounds = array<i64: 1, 32>}, {pipeline_mode = #tpu.pipeline_mode<synchronous>, transform_indices = @transform_12, window_bounds = array<i64: 32, 128>}, {pipeline_mode = #tpu.pipeline_mode<synchronous>, transform_indices = @transform_13, window_bounds = array<i64: 1, 128>}, {pipeline_mode = #tpu.pipeline_mode<synchronous>, transform_indices = @transform_14, window_bounds = array<i64: 128, 32>}, {pipeline_mode = #tpu.pipeline_mode<synchronous>, transform_indices = @transform_15, window_bounds = array<i64: 1, 32>}, {pipeline_mode = #tpu.pipeline_mode<synchronous>, transform_indices = @transform_16, window_bounds = array<i64: 1, 32>}, {pipeline_mode = #tpu.pipeline_mode<synchronous>, transform_indices = @transform_17, window_bounds = array<i64: 1, 32>}, {transform_indices = @transform_18, window_bounds = array<i64: 1, 8, 32>}]} {
    %c0 = arith.constant 0 : index
    %c0_0 = arith.constant 0 : index
    %c0_1 = arith.constant 0 : index
    %0 = vector.load %arg1[%c0, %c0_0, %c0_1] : memref<1x8x32xf32, #tpu.memory_space<vmem>>, vector<1x8x32xf32>
    %1 = vector.shape_cast %0 : vector<1x8x32xf32> to vector<8x32xf32>
    %c0_2 = arith.constant 0 : index
    %c0_3 = arith.constant 0 : index
    %c0_4 = arith.constant 0 : index
    %2 = vector.load %arg2[%c0_2, %c0_3, %c0_4] : memref<1x8x32xf32, #tpu.memory_space<vmem>>, vector<1x8x32xf32>
    %3 = vector.shape_cast %2 : vector<1x8x32xf32> to vector<8x32xf32>
    %4 = arith.truncf %1 : vector<8x32xf32> to vector<8x32xbf16>
    %5 = vector.shape_cast %4 : vector<8x32xbf16> to vector<1x8x32xbf16>
    %6 = vector.shape_cast %5 : vector<1x8x32xbf16> to vector<1x8x32xbf16>
    %7 = vector.broadcast %6 : vector<1x8x32xbf16> to vector<4x8x32xbf16>
    %8 = arith.truncf %3 : vector<8x32xf32> to vector<8x32xbf16>
    %9 = vector.shape_cast %8 : vector<8x32xbf16> to vector<1x8x32xbf16>
    %10 = vector.shape_cast %9 : vector<1x8x32xbf16> to vector<1x8x32xbf16>
    %11 = vector.broadcast %10 : vector<1x8x32xbf16> to vector<4x8x32xbf16>
    %c0_5 = arith.constant 0 : index
    %c0_6 = arith.constant 0 : index
    %c0_7 = arith.constant 0 : index
    %12 = vector.load %arg3[%c0_5, %c0_6, %c0_7] : memref<4x32x8xbf16, #tpu.memory_space<vmem>>, vector<4x32x8xbf16>
    %cst = arith.constant dense<0.000000e+00> : vector<4x8x8xf32>
    %13 = tpu.matmul %7, %12, %cst {dimension_numbers = #tpu.dot_dimension_numbers<[2], [1], [1], [2], [0, 0, 0, 1, 1, 2], [0], [0]>} : vector<4x8x32xbf16>, vector<4x32x8xbf16>, vector<4x8x8xf32> -> vector<4x8x8xf32>
    %c0_8 = arith.constant 0 : index
    %c0_9 = arith.constant 0 : index
    %c0_10 = arith.constant 0 : index
    %14 = vector.load %arg4[%c0_8, %c0_9, %c0_10] : memref<4x1x8xf32, #tpu.memory_space<vmem>>, vector<4x1x8xf32>
    %15 = vector.broadcast %14 : vector<4x1x8xf32> to vector<4x8x8xf32>
    %16 = arith.addf %13, %15 : vector<4x8x8xf32>
    %c0_11 = arith.constant 0 : index
    %c0_12 = arith.constant 0 : index
    %c0_13 = arith.constant 0 : index
    %17 = vector.load %arg5[%c0_11, %c0_12, %c0_13] : memref<4x32x8xbf16, #tpu.memory_space<vmem>>, vector<4x32x8xbf16>
    %cst_14 = arith.constant dense<0.000000e+00> : vector<4x8x8xf32>
    %18 = tpu.matmul %11, %17, %cst_14 {dimension_numbers = #tpu.dot_dimension_numbers<[2], [1], [1], [2], [0, 0, 0, 1, 1, 2], [0], [0]>} : vector<4x8x32xbf16>, vector<4x32x8xbf16>, vector<4x8x8xf32> -> vector<4x8x8xf32>
    %c0_15 = arith.constant 0 : index
    %c0_16 = arith.constant 0 : index
    %c0_17 = arith.constant 0 : index
    %19 = vector.load %arg6[%c0_15, %c0_16, %c0_17] : memref<4x1x8xf32, #tpu.memory_space<vmem>>, vector<4x1x8xf32>
    %20 = vector.broadcast %19 : vector<4x1x8xf32> to vector<4x8x8xf32>
    %21 = arith.addf %18, %20 : vector<4x8x8xf32>
    %c0_18 = arith.constant 0 : index
    %c0_19 = arith.constant 0 : index
    %c0_20 = arith.constant 0 : index
    %22 = vector.load %arg7[%c0_18, %c0_19, %c0_20] : memref<4x32x8xbf16, #tpu.memory_space<vmem>>, vector<4x32x8xbf16>
    %cst_21 = arith.constant dense<0.000000e+00> : vector<4x8x8xf32>
    %23 = tpu.matmul %11, %22, %cst_21 {dimension_numbers = #tpu.dot_dimension_numbers<[2], [1], [1], [2], [0, 0, 0, 1, 1, 2], [0], [0]>} : vector<4x8x32xbf16>, vector<4x32x8xbf16>, vector<4x8x8xf32> -> vector<4x8x8xf32>
    %c0_22 = arith.constant 0 : index
    %c0_23 = arith.constant 0 : index
    %c0_24 = arith.constant 0 : index
    %24 = vector.load %arg8[%c0_22, %c0_23, %c0_24] : memref<4x1x8xf32, #tpu.memory_space<vmem>>, vector<4x1x8xf32>
    %25 = vector.broadcast %24 : vector<4x1x8xf32> to vector<4x8x8xf32>
    %26 = arith.addf %23, %25 : vector<4x8x8xf32>
    %27 = arith.truncf %16 : vector<4x8x8xf32> to vector<4x8x8xbf16>
    %28 = arith.truncf %21 : vector<4x8x8xf32> to vector<4x8x8xbf16>
    %cst_25 = arith.constant dense<0.000000e+00> : vector<4x8x8xf32>
    %29 = tpu.matmul %27, %28, %cst_25 {dimension_numbers = #tpu.dot_dimension_numbers<[2], [2], [1], [1], [0, 0, 0, 1, 1, 1], [0], [0]>} : vector<4x8x8xbf16>, vector<4x8x8xbf16>, vector<4x8x8xf32> -> vector<4x8x8xf32>
    %cst_26 = arith.constant 0.353553385 : f32
    %30 = vector.broadcast %cst_26 : f32 to vector<4x8x8xf32>
    %31 = arith.mulf %29, %30 : vector<4x8x8xf32>
    %cst_27 = arith.constant dense<0xFF800000> : vector<4x8xf32>
    %32 = vector.multi_reduction <maximumf>, %31, %cst_27 [2] : vector<4x8x8xf32> to vector<4x8xf32>
    %33 = vector.shape_cast %32 : vector<4x8xf32> to vector<4x8x1xf32>
    %34 = vector.broadcast %33 : vector<4x8x1xf32> to vector<4x8x8xf32>
    %35 = arith.subf %31, %34 : vector<4x8x8xf32>
    %36 = math.exp %35 : vector<4x8x8xf32>
    %cst_28 = arith.constant dense<0.000000e+00> : vector<4x8xf32>
    %37 = vector.multi_reduction <add>, %36, %cst_28 [2] : vector<4x8x8xf32> to vector<4x8xf32>
    %38 = vector.shape_cast %37 : vector<4x8xf32> to vector<4x8x1xf32>
    %39 = tpu.reciprocal %38 : vector<4x8x1xf32> -> vector<4x8x1xf32>
    %40 = vector.broadcast %39 : vector<4x8x1xf32> to vector<4x8x8xf32>
    %41 = arith.mulf %36, %40 : vector<4x8x8xf32>
    %42 = arith.truncf %41 : vector<4x8x8xf32> to vector<4x8x8xbf16>
    %43 = arith.truncf %26 : vector<4x8x8xf32> to vector<4x8x8xbf16>
    %cst_29 = arith.constant dense<0.000000e+00> : vector<4x8x8xf32>
    %44 = tpu.matmul %42, %43, %cst_29 {dimension_numbers = #tpu.dot_dimension_numbers<[2], [1], [1], [2], [0, 0, 0, 1, 1, 2], [0], [0]>} : vector<4x8x8xbf16>, vector<4x8x8xbf16>, vector<4x8x8xf32> -> vector<4x8x8xf32>
    %45 = arith.truncf %44 : vector<4x8x8xf32> to vector<4x8x8xbf16>
    %c0_30 = arith.constant 0 : index
    %c0_31 = arith.constant 0 : index
    %c0_32 = arith.constant 0 : index
    %46 = vector.load %arg9[%c0_30, %c0_31, %c0_32] : memref<4x8x32xbf16, #tpu.memory_space<vmem>>, vector<4x8x32xbf16>
    %cst_33 = arith.constant dense<0.000000e+00> : vector<4x8x32xf32>
    %47 = tpu.matmul %45, %46, %cst_33 {dimension_numbers = #tpu.dot_dimension_numbers<[2], [1], [1], [2], [0, 0, 0, 1, 1, 2], [0], [0]>} : vector<4x8x8xbf16>, vector<4x8x32xbf16>, vector<4x8x32xf32> -> vector<4x8x32xf32>
    %cst_34 = arith.constant dense<0.000000e+00> : vector<8x32xf32>
    %48 = vector.multi_reduction <add>, %47, %cst_34 [0] : vector<4x8x32xf32> to vector<8x32xf32>
    %c0_35 = arith.constant 0 : index
    %c0_36 = arith.constant 0 : index
    %49 = vector.load %arg10[%c0_35, %c0_36] : memref<1x32xf32, #tpu.memory_space<vmem>>, vector<1x32xf32>
    %50 = vector.broadcast %49 : vector<1x32xf32> to vector<8x32xf32>
    %51 = arith.addf %48, %50 : vector<8x32xf32>
    %52 = arith.addf %51, %1 : vector<8x32xf32>
    %c0_37 = arith.constant 0 : index
    %c0_38 = arith.constant 0 : index
    %53 = vector.load %arg11[%c0_37, %c0_38] : memref<1x32xf32, #tpu.memory_space<vmem>>, vector<1x32xf32>
    %c0_39 = arith.constant 0 : index
    %c0_40 = arith.constant 0 : index
    %54 = vector.load %arg12[%c0_39, %c0_40] : memref<1x32xf32, #tpu.memory_space<vmem>>, vector<1x32xf32>
    %cst_41 = arith.constant dense<0.000000e+00> : vector<8xf32>
    %55 = vector.multi_reduction <add>, %52, %cst_41 [1] : vector<8x32xf32> to vector<8xf32>
    %56 = vector.shape_cast %55 : vector<8xf32> to vector<8x1xf32>
    %cst_42 = arith.constant 3.200000e+01 : f32
    %57 = vector.broadcast %cst_42 : f32 to vector<8x1xf32>
    %58 = arith.divf %56, %57 : vector<8x1xf32>
    %59 = vector.broadcast %58 : vector<8x1xf32> to vector<8x32xf32>
    %60 = arith.subf %52, %59 : vector<8x32xf32>
    %61 = arith.mulf %60, %60 : vector<8x32xf32>
    %cst_43 = arith.constant dense<0.000000e+00> : vector<8xf32>
    %62 = vector.multi_reduction <add>, %61, %cst_43 [1] : vector<8x32xf32> to vector<8xf32>
    %63 = vector.shape_cast %62 : vector<8xf32> to vector<8x1xf32>
    %cst_44 = arith.constant 3.200000e+01 : f32
    %64 = vector.broadcast %cst_44 : f32 to vector<8x1xf32>
    %65 = arith.divf %63, %64 : vector<8x1xf32>
    %66 = vector.broadcast %58 : vector<8x1xf32> to vector<8x32xf32>
    %67 = arith.subf %52, %66 : vector<8x32xf32>
    %cst_45 = arith.constant 9.99999974E-6 : f32
    %68 = vector.broadcast %cst_45 : f32 to vector<8x1xf32>
    %69 = arith.addf %65, %68 : vector<8x1xf32>
    %70 = math.rsqrt %69 : vector<8x1xf32>
    %71 = vector.broadcast %70 : vector<8x1xf32> to vector<8x32xf32>
    %72 = arith.mulf %67, %71 : vector<8x32xf32>
    %73 = vector.broadcast %53 : vector<1x32xf32> to vector<8x32xf32>
    %74 = arith.mulf %72, %73 : vector<8x32xf32>
    %75 = vector.broadcast %54 : vector<1x32xf32> to vector<8x32xf32>
    %76 = arith.addf %74, %75 : vector<8x32xf32>
    %77 = arith.truncf %76 : vector<8x32xf32> to vector<8x32xbf16>
    %c0_46 = arith.constant 0 : index
    %c0_47 = arith.constant 0 : index
    %78 = vector.load %arg13[%c0_46, %c0_47] : memref<32x128xbf16, #tpu.memory_space<vmem>>, vector<32x128xbf16>
    %cst_48 = arith.constant dense<0.000000e+00> : vector<8x128xf32>
    %79 = tpu.matmul %77, %78, %cst_48 {dimension_numbers = #tpu.dot_dimension_numbers<[1], [0], [0], [1], [0, 0, 1, 1], [], []>} : vector<8x32xbf16>, vector<32x128xbf16>, vector<8x128xf32> -> vector<8x128xf32>
    %c0_49 = arith.constant 0 : index
    %c0_50 = arith.constant 0 : index
    %80 = vector.load %arg14[%c0_49, %c0_50] : memref<1x128xf32, #tpu.memory_space<vmem>>, vector<1x128xf32>
    %81 = vector.broadcast %80 : vector<1x128xf32> to vector<8x128xf32>
    %82 = arith.addf %79, %81 : vector<8x128xf32>
    %cst_51 = arith.constant 0.000000e+00 : f32
    %83 = vector.broadcast %cst_51 : f32 to vector<8x128xf32>
    %84 = arith.maximumf %82, %83 : vector<8x128xf32>
    %85 = arith.truncf %84 : vector<8x128xf32> to vector<8x128xbf16>
    %c0_52 = arith.constant 0 : index
    %c0_53 = arith.constant 0 : index
    %86 = vector.load %arg15[%c0_52, %c0_53] : memref<128x32xbf16, #tpu.memory_space<vmem>>, vector<128x32xbf16>
    %cst_54 = arith.constant dense<0.000000e+00> : vector<8x32xf32>
    %87 = tpu.matmul %85, %86, %cst_54 {dimension_numbers = #tpu.dot_dimension_numbers<[1], [0], [0], [1], [0, 0, 1, 1], [], []>} : vector<8x128xbf16>, vector<128x32xbf16>, vector<8x32xf32> -> vector<8x32xf32>
    %c0_55 = arith.constant 0 : index
    %c0_56 = arith.constant 0 : index
    %88 = vector.load %arg16[%c0_55, %c0_56] : memref<1x32xf32, #tpu.memory_space<vmem>>, vector<1x32xf32>
    %89 = vector.broadcast %88 : vector<1x32xf32> to vector<8x32xf32>
    %90 = arith.addf %87, %89 : vector<8x32xf32>
    %91 = arith.addf %90, %76 : vector<8x32xf32>
    %c0_57 = arith.constant 0 : index
    %c0_58 = arith.constant 0 : index
    %92 = vector.load %arg17[%c0_57, %c0_58] : memref<1x32xf32, #tpu.memory_space<vmem>>, vector<1x32xf32>
    %c0_59 = arith.constant 0 : index
    %c0_60 = arith.constant 0 : index
    %93 = vector.load %arg18[%c0_59, %c0_60] : memref<1x32xf32, #tpu.memory_space<vmem>>, vector<1x32xf32>
    %cst_61 = arith.constant dense<0.000000e+00> : vector<8xf32>
    %94 = vector.multi_reduction <add>, %91, %cst_61 [1] : vector<8x32xf32> to vector<8xf32>
    %95 = vector.shape_cast %94 : vector<8xf32> to vector<8x1xf32>
    %cst_62 = arith.constant 3.200000e+01 : f32
    %96 = vector.broadcast %cst_62 : f32 to vector<8x1xf32>
    %97 = arith.divf %95, %96 : vector<8x1xf32>
    %98 = vector.broadcast %97 : vector<8x1xf32> to vector<8x32xf32>
    %99 = arith.subf %91, %98 : vector<8x32xf32>
    %100 = arith.mulf %99, %99 : vector<8x32xf32>
    %cst_63 = arith.constant dense<0.000000e+00> : vector<8xf32>
    %101 = vector.multi_reduction <add>, %100, %cst_63 [1] : vector<8x32xf32> to vector<8xf32>
    %102 = vector.shape_cast %101 : vector<8xf32> to vector<8x1xf32>
    %cst_64 = arith.constant 3.200000e+01 : f32
    %103 = vector.broadcast %cst_64 : f32 to vector<8x1xf32>
    %104 = arith.divf %102, %103 : vector<8x1xf32>
    %105 = vector.broadcast %97 : vector<8x1xf32> to vector<8x32xf32>
    %106 = arith.subf %91, %105 : vector<8x32xf32>
    %cst_65 = arith.constant 9.99999974E-6 : f32
    %107 = vector.broadcast %cst_65 : f32 to vector<8x1xf32>
    %108 = arith.addf %104, %107 : vector<8x1xf32>
    %109 = math.rsqrt %108 : vector<8x1xf32>
    %110 = vector.broadcast %109 : vector<8x1xf32> to vector<8x32xf32>
    %111 = arith.mulf %106, %110 : vector<8x32xf32>
    %112 = vector.broadcast %92 : vector<1x32xf32> to vector<8x32xf32>
    %113 = arith.mulf %111, %112 : vector<8x32xf32>
    %114 = vector.broadcast %93 : vector<1x32xf32> to vector<8x32xf32>
    %115 = arith.addf %113, %114 : vector<8x32xf32>
    %c0_66 = arith.constant 0 : index
    %c0_67 = arith.constant 0 : index
    %c0_68 = arith.constant 0 : index
    %116 = vector.load %arg19[%c0_66, %c0_67, %c0_68] : memref<1x8x32xf32, #tpu.memory_space<vmem>>, vector<1x8x32xf32>
    %117 = vector.shape_cast %116 : vector<1x8x32xf32> to vector<8x32xf32>
    %118 = vector.shape_cast %115 : vector<8x32xf32> to vector<1x8x32xf32>
    tpu.vector_store %arg19[%c0_66, %c0_67, %c0_68], %118 {strides = array<i32>} : memref<1x8x32xf32, #tpu.memory_space<vmem>>, vector<1x8x32xf32>,
    return
  }
  func.func @transform_0(%arg0: i32) -> (i32, i32, i32) {
    %c0_i32 = arith.constant 0 : i32
    %c0_i32_0 = arith.constant 0 : i32
    %c0_i32_1 = arith.constant 0 : i32
    return %arg0, %c0_i32, %c0_i32_0 : i32, i32, i32
  }
  func.func @transform_1(%arg0: i32) -> (i32, i32, i32) {
    %c0_i32 = arith.constant 0 : i32
    %c0_i32_0 = arith.constant 0 : i32
    %c0_i32_1 = arith.constant 0 : i32
    return %arg0, %c0_i32, %c0_i32_0 : i32, i32, i32
  }
  func.func @transform_2(%arg0: i32) -> (i32, i32, i32) {
    %c0_i32 = arith.constant 0 : i32
    %c0_i32_0 = arith.constant 0 : i32
    %c0_i32_1 = arith.constant 0 : i32
    %c0_i32_2 = arith.constant 0 : i32
    return %c0_i32, %c0_i32_0, %c0_i32_1 : i32, i32, i32
  }
  func.func @transform_3(%arg0: i32) -> (i32, i32, i32) {
    %c0_i32 = arith.constant 0 : i32
    %c0_i32_0 = arith.constant 0 : i32
    %c0_i32_1 = arith.constant 0 : i32
    %c0_i32_2 = arith.constant 0 : i32
    return %c0_i32, %c0_i32_0, %c0_i32_1 : i32, i32, i32
  }
  func.func @transform_4(%arg0: i32) -> (i32, i32, i32) {
    %c0_i32 = arith.constant 0 : i32
    %c0_i32_0 = arith.constant 0 : i32
    %c0_i32_1 = arith.constant 0 : i32
    %c0_i32_2 = arith.constant 0 : i32
    return %c0_i32, %c0_i32_0, %c0_i32_1 : i32, i32, i32
  }
  func.func @transform_5(%arg0: i32) -> (i32, i32, i32) {
    %c0_i32 = arith.constant 0 : i32
    %c0_i32_0 = arith.constant 0 : i32
    %c0_i32_1 = arith.constant 0 : i32
    %c0_i32_2 = arith.constant 0 : i32
    return %c0_i32, %c0_i32_0, %c0_i32_1 : i32, i32, i32
  }
  func.func @transform_6(%arg0: i32) -> (i32, i32, i32) {
    %c0_i32 = arith.constant 0 : i32
    %c0_i32_0 = arith.constant 0 : i32
    %c0_i32_1 = arith.constant 0 : i32
    %c0_i32_2 = arith.constant 0 : i32
    return %c0_i32, %c0_i32_0, %c0_i32_1 : i32, i32, i32
  }
  func.func @transform_7(%arg0: i32) -> (i32, i32, i32) {
    %c0_i32 = arith.constant 0 : i32
    %c0_i32_0 = arith.constant 0 : i32
    %c0_i32_1 = arith.constant 0 : i32
    %c0_i32_2 = arith.constant 0 : i32
    return %c0_i32, %c0_i32_0, %c0_i32_1 : i32, i32, i32
  }
  func.func @transform_8(%arg0: i32) -> (i32, i32, i32) {
    %c0_i32 = arith.constant 0 : i32
    %c0_i32_0 = arith.constant 0 : i32
    %c0_i32_1 = arith.constant 0 : i32
    %c0_i32_2 = arith.constant 0 : i32
    return %c0_i32, %c0_i32_0, %c0_i32_1 : i32, i32, i32
  }
  func.func @transform_9(%arg0: i32) -> (i32, i32) {
    %c0_i32 = arith.constant 0 : i32
    %c0_i32_0 = arith.constant 0 : i32
    %c0_i32_1 = arith.constant 0 : i32
    return %c0_i32, %c0_i32_0 : i32, i32
  }
  func.func @transform_10(%arg0: i32) -> (i32, i32) {
    %c0_i32 = arith.constant 0 : i32
    %c0_i32_0 = arith.constant 0 : i32
    %c0_i32_1 = arith.constant 0 : i32
    return %c0_i32, %c0_i32_0 : i32, i32
  }
  func.func @transform_11(%arg0: i32) -> (i32, i32) {
    %c0_i32 = arith.constant 0 : i32
    %c0_i32_0 = arith.constant 0 : i32
    %c0_i32_1 = arith.constant 0 : i32
    return %c0_i32, %c0_i32_0 : i32, i32
  }
  func.func @transform_12(%arg0: i32) -> (i32, i32) {
    %c0_i32 = arith.constant 0 : i32
    %c0_i32_0 = arith.constant 0 : i32
    %c0_i32_1 = arith.constant 0 : i32
    return %c0_i32, %c0_i32_0 : i32, i32
  }
  func.func @transform_13(%arg0: i32) -> (i32, i32) {
    %c0_i32 = arith.constant 0 : i32
    %c0_i32_0 = arith.constant 0 : i32
    %c0_i32_1 = arith.constant 0 : i32
    return %c0_i32, %c0_i32_0 : i32, i32
  }
  func.func @transform_14(%arg0: i32) -> (i32, i32) {
    %c0_i32 = arith.constant 0 : i32
    %c0_i32_0 = arith.constant 0 : i32
    %c0_i32_1 = arith.constant 0 : i32
    return %c0_i32, %c0_i32_0 : i32, i32
  }
  func.func @transform_15(%arg0: i32) -> (i32, i32) {
    %c0_i32 = arith.constant 0 : i32
    %c0_i32_0 = arith.constant 0 : i32
    %c0_i32_1 = arith.constant 0 : i32
    return %c0_i32, %c0_i32_0 : i32, i32
  }
  func.func @transform_16(%arg0: i32) -> (i32, i32) {
    %c0_i32 = arith.constant 0 : i32
    %c0_i32_0 = arith.constant 0 : i32
    %c0_i32_1 = arith.constant 0 : i32
    return %c0_i32, %c0_i32_0 : i32, i32
  }
  func.func @transform_17(%arg0: i32) -> (i32, i32) {
    %c0_i32 = arith.constant 0 : i32
    %c0_i32_0 = arith.constant 0 : i32
    %c0_i32_1 = arith.constant 0 : i32
    return %c0_i32, %c0_i32_0 : i32, i32
  }
  func.func @transform_18(%arg0: i32) -> (i32, i32, i32) {
    %c0_i32 = arith.constant 0 : i32
    %c0_i32_0 = arith.constant 0 : i32
    %c0_i32_1 = arith.constant 0 : i32
    return %arg0, %c0_i32, %c0_i32_0 : i32, i32, i32
  }
}

</mosaic_0001>

<llo_original>
// kernel: transformer_forward.13
$region0: #{transformer_forward.13}
  #allocation0 [shape = 'u32[]', space=smem, size = 0x4, offset = 0x4, fixed_abs, tag = 'smem constant byte address 0x4 - core index']
  #allocation1 [shape = 'u32[144,128]{1,0:T(1,128)}', space=vmem, size = 0x12000, scoped, tag = 'internal scratch']
  %s0 = inlined_call_operand.vmem [shape: f32[16,32], index: 0, kind: input, shape index: {}]
  %s1 = inlined_call_operand.vmem [shape: bf16[32,16], index: 1, kind: input, shape index: {}]
  %s2 = inlined_call_operand.vmem [shape: f32[1,16], index: 2, kind: input, shape index: {}]
  %s3 = inlined_call_operand.hbm [shape: f32[16,16], index: 3, kind: output, shape index: {}]
  %s4 = sld [smem:[#allocation0]]
  $region22: #{transformer_forward.13} parent=0
    _
  %s6 = ssub.s32 1, %s4
  %s7 = scalar_select 0, %s6, %s4
  $region1: #{transformer_forward.13} parent=0
    #allocation2 [shape = 'u8[8192]{0}', space=vmem, size = 0x2000, scoped, tag = 'output window, operand 0, single buffered']
    #allocation3 [shape = 's32[1]{0}', space=sflag, size = 0x4, scoped, tag = 'scoped memory for transformer_forward.13']
    %8 = vsyncpa [#allocation3], 0
    // Predicated region
    $region2: #{transformer_forward.13} parent=1 // pred_check
      _
    $region3: #{transformer_forward.13} parent=1 // pred_check_branch
      %10 = sbr.rel (0) target = $region5
    $region4: #{transformer_forward.13} parent=1 // pred_region
      _
    $region5: #{transformer_forward.13} parent=1 // pred_fallthru
      _
    // Predicated region
    $region6: #{transformer_forward.13} parent=1 // pred_check
      _
    $region7: #{transformer_forward.13} parent=1 // pred_check_branch
      %12 = sbr.rel (0) target = $region9
    $region8: #{transformer_forward.13} parent=1 // pred_region
      _
    $region9: #{transformer_forward.13} parent=1 // pred_fallthru
      _
    // Predicated region
    $region10: #{transformer_forward.13} parent=1 // pred_check
      _
    $region11: #{transformer_forward.13} parent=1 // pred_check_branch
      %14 = sbr.rel (0) target = $region13
    $region12: #{transformer_forward.13} parent=1 // pred_region
      _
    $region13: #{transformer_forward.13} parent=1 // pred_fallthru
      _
    %v16 = vld [vmem:[%s0] sm:$0xff]
    %v17 = vld [vmem:[%s0 + $0x8] sm:$0xff]
    %v18 = vpack.c.bf16 %v17, %v16
    %v19 = vld [vmem:[%s1] sm:$0xf]
    %v20 = vld [vmem:[%s1 + $0x4] sm:$0xf]
    %v21 = vld [vmem:[%s1 + $0x8] sm:$0xf]
    %v22 = vld [vmem:[%s1 + $0xc] sm:$0xf]
    %v23 = vld [vmem:[%s2] sm:$0x1]
    %v25 = vlaneseq
    %v26 = vshrl.u32 %v25, 7
    %v27 = vsub.s32 0, %v26
    %v28 = vrot.slane %v23, %v27
    %v34 = vunpack.c.l.b16 %v19
    %v35 = vunpack.c.l.b16 %v20
    %v36 = vunpack.c.l.b16 %v21
    %v37 = vunpack.c.l.b16 %v22
    %v38 = vpack.c.b16 %v35, %v34
    %v39 = vpack.c.b16 %v37, %v36
    %vm42 = vcmask 261120
    %v44 = vsel %vm42, %v18, 0
    %46 = vmatprep.subr.bf16.mxu0 0
    %47 = vmatpush1.bf16.msra.mxu0 %v38
    %48 = vmatprep.subr.bf16.mxu0 0
    %49 = vmatpush1.bf16.msra.mxu0 %v39
    %50 = vmatprep.subr.bf16.mxu0 0
    %51 = vmatpush1.bf16.msra.mxu0 0
    %52 = vmatprep.subr.bf16.mxu0 0
    %53 = vmatpush1.bf16.msra.mxu0 0
    %54 = vmatprep.subr.bf16.mxu0 0
    %55 = vmatpush1.bf16.msra.mxu0 0
    %56 = vmatprep.subr.bf16.mxu0 0
    %57 = vmatpush1.bf16.msra.mxu0 0
    %58 = vmatprep.subr.bf16.mxu0 0
    %59 = vmatpush1.bf16.msra.mxu0 0
    %60 = vmatprep.subr.bf16.mxu0 0
    %61 = vmatpush1.bf16.msra.mxu0 0
    %62 = vmatprep.subr.bf16.mxu0 0
    %63 = vmatpush1.bf16.msra.mxu0 0
    %64 = vmatprep.subr.bf16.mxu0 0
    %65 = vmatpush1.bf16.msra.mxu0 0
    %66 = vmatprep.subr.bf16.mxu0 0
    %67 = vmatpush1.bf16.msra.mxu0 0
    %68 = vmatprep.subr.bf16.mxu0 0
    %69 = vmatpush1.bf16.msra.mxu0 0
    %70 = vmatprep.subr.bf16.mxu0 0
    %71 = vmatpush1.bf16.msra.mxu0 0
    %72 = vmatprep.subr.bf16.mxu0 0
    %73 = vmatpush1.bf16.msra.mxu0 0
    %74 = vmatprep.subr.bf16.mxu0 0
    %75 = vmatpush1.bf16.msra.mxu0 0
    %76 = vmatprep.subr.bf16.mxu0 0
    %77 = vmatpush1.bf16.msra.mxu0 0
    %78 = vmatprep.mubr.bf16.mxu0 0
    %79 = vmatmul.mubr.bf16.gmra.mrb[0].mxu0 %v44
    %v80 = vpop.f32.mrb[0].mxu0
    %v81 = vadd.f32 %v28, %v80
    %v82 = vpop.f32.mrb[0].mxu0
    %v83 = vpop.f32.mrb[0].mxu0
    %v84 = vadd.f32 %v28, %v83
    %v85 = vpop.f32.mrb[0].mxu0
    %86 = vdwg.mxu0
    %vm87 = vcmask 130048
    %v88 = vsel %vm87, %v81, -inf
    %89 = vmax.xlane.f32.xlu0 %v88
    %v90 = vpop.xlane.xlu0 %89
    %v91 = vsel %vm87, %v84, -inf
    %92 = vmax.xlane.f32.xlu0 %v91
    %v93 = vpop.xlane.xlu0 %92
    %v94 = vsub.f32 %v81, %v90
    %v95 = vsub.f32 %v84, %v93
    %v96 = vmul.f32 %v94, 1.442695
    %v97 = vpow.pop %v96
    %v98 = vmul.f32 %v95, 1.442695
    %v99 = vpow.pop %v98
    %v100 = vsel %vm87, %v97, 0.0
    %101 = vadd.xlane.f32.xlu0 %v100
    %v102 = vpop.xlane.xlu0 %101
    %v103 = vsel %vm87, %v99, 0.0
    %104 = vadd.xlane.f32.xlu0 %v103
    %v105 = vpop.xlane.xlu0 %104
    %v106 = vrcp.pop %v102
    %v107 = vrcp.pop %v105
    %v108 = vmul.f32 %v97, %v106
    %v109 = vmul.f32 %v99, %v107
    %110 = vst.msk [vmem:[#allocation2] sm:$0xff] %vm87, %v108
    %111 = vst.msk [vmem:[#allocation2 + $0x8] sm:$0xff] %vm87, %v109
    // Predicated region
    $region14: #{transformer_forward.13} parent=1 // pred_check
      _
    $region15: #{transformer_forward.13} parent=1 // pred_check_branch
      %113 = sbr.rel (0) target = $region17
    $region16: #{transformer_forward.13} parent=1 // pred_region
      %s115 = ssub.s32 256, 256
      %116 = vsyncadd [#allocation3], %s115
      %s117 = sshll.u32 [#allocation2], 4
      %s118 = int_to_ptr.vmem [resolvable:$true] %s117
      %123 = dma.vmem_to_hbm [thread:$0]  %s118, 256, %s3, [#allocation3], 128, 128, 8
    $region17: #{transformer_forward.13} parent=1 // pred_fallthru
      _
    // Predicated region
    $region18: #{transformer_forward.13} parent=1 // pred_check
      _
    $region19: #{transformer_forward.13} parent=1 // pred_check_branch
      %125 = sbr.rel (0) target = $region21
    $region20: #{transformer_forward.13} parent=1 // pred_region
      %126 = dma.done [#allocation3], 256
    $region21: #{transformer_forward.13} parent=1 // pred_fallthru
      _
    %127 = vsyncpa [#allocation3], 1

// kernel: transformer_forward.9
$region0: #{transformer_forward.9}
  #allocation0 [shape = 'u32[]', space=smem, size = 0x4, offset = 0x4, fixed_abs, tag = 'smem constant byte address 0x4 - core index']
  #allocation1 [shape = 'u32[144,128]{1,0:T(1,128)}', space=vmem, size = 0x12000, scoped, tag = 'internal scratch']
  %s0 = inlined_call_operand.vmem [shape: f32[2,8,32], index: 0, kind: input, shape index: {}, may-alias: {0,1}]
  %s1 = inlined_call_operand.vmem [shape: f32[2,8,32], index: 1, kind: input, shape index: {}, may-alias: {0,1}]
  %s2 = inlined_call_operand.vmem [shape: bf16[4,32,8], index: 2, kind: input, shape index: {}]
  %s3 = inlined_call_operand.vmem [shape: f32[4,1,8], index: 3, kind: input, shape index: {}]
  %s4 = inlined_call_operand.vmem [shape: bf16[4,32,8], index: 4, kind: input, shape index: {}]
  %s5 = inlined_call_operand.vmem [shape: f32[4,1,8], index: 5, kind: input, shape index: {}]
  %s6 = inlined_call_operand.vmem [shape: bf16[4,32,8], index: 6, kind: input, shape index: {}]
  %s7 = inlined_call_operand.vmem [shape: f32[4,1,8], index: 7, kind: input, shape index: {}]
  %s8 = inlined_call_operand.vmem [shape: bf16[4,8,32], index: 8, kind: input, shape index: {}]
  %s9 = inlined_call_operand.vmem [shape: f32[1,32], index: 9, kind: input, shape index: {}]
  %s10 = inlined_call_operand.vmem [shape: f32[1,32], index: 10, kind: input, shape index: {}]
  %s11 = inlined_call_operand.vmem [shape: f32[1,32], index: 11, kind: input, shape index: {}]
  %s12 = inlined_call_operand.vmem [shape: f32[2,8,32], index: 12, kind: output, shape index: {}]
  %s13 = sld [smem:[#allocation0]]
  $region81: #{transformer_forward.9} parent=0
    _
  %s15 = ssub.s32 1, %s13
  %s16 = scalar_select 0, %s15, %s13
  loop: start=0, step=1, limit=4
  $region2: #{transformer_forward.9} parent=0 // loop_pre_header
    _
  $region3: #{transformer_forward.9} parent=0 // loop_header
    %s18 = sphi 0, %s22
    %p19 = scmp.ge.s32.totalorder %s18, 4
    %s28 = sphi 0, %s30
    %s31 = sphi 0, %s28
    %s32 = sphi 0, %s31
    %s48 = sphi 0, %s32
    %s54 = sphi 0, %s56
    %s57 = sphi 0, %s54
    %s58 = sphi 0, %s57
    %s74 = sphi 0, %s58
    %s78 = sphi 0, %s78
    %s80 = sphi 0, %s78
    %s81 = sphi 0, %s80
    %s95 = sphi 0, %s81
    %s99 = sphi 0, %s99
    %s101 = sphi 0, %s99
    %s102 = sphi 0, %s101
    %s116 = sphi 0, %s102
    %s120 = sphi 0, %s120
    %s122 = sphi 0, %s120
    %s123 = sphi 0, %s122
    %s137 = sphi 0, %s123
    %s141 = sphi 0, %s141
    %s143 = sphi 0, %s141
    %s144 = sphi 0, %s143
    %s158 = sphi 0, %s144
    %s162 = sphi 0, %s162
    %s164 = sphi 0, %s162
    %s165 = sphi 0, %s164
    %s179 = sphi 0, %s165
    %s183 = sphi 0, %s183
    %s185 = sphi 0, %s183
    %s186 = sphi 0, %s185
    %s200 = sphi 0, %s186
    %s204 = sphi 0, %s204
    %s206 = sphi 0, %s204
    %s207 = sphi 0, %s206
    %s221 = sphi 0, %s207
    %s225 = sphi 0, %s225
    %s227 = sphi 0, %s225
    %s228 = sphi 0, %s227
    %s242 = sphi 0, %s228
    %s246 = sphi 0, %s246
    %s248 = sphi 0, %s246
    %s249 = sphi 0, %s248
    %s263 = sphi 0, %s249
    %s267 = sphi 0, %s267
    %s269 = sphi 0, %s267
    %s270 = sphi 0, %s269
    %s284 = sphi 0, %s270
    %s290 = sphi 0, %s292
    %s293 = sphi 0, %s290
    %s294 = sphi 0, %s293
    %s310 = sphi 0, %s294
  $region4: #{transformer_forward.9} parent=0 // loop_header_branch
    %21 = sbr.rel (%p19) target = $region8
  $region5: #{transformer_forward.9} parent=0 // loop_body
    %s23 = ssub.s32 %s18, 1
    %s24 = ssub.s32 %s18, 2
    %s25 = sadd.s32 %s18, 1
    %s26 = ssub.s32 %s18, %s25
    %p27 = scmp.eq.s32.totalorder %s26, 0
    %s29 = sadd.s32 %s28, 1
    %s30 = scalar_select %p27, %s28, %s29
    %p33 = pneg %p27
    %p34 = scmp.eq.s32.totalorder %s18, 1
    %p35 = por %p33, %p34
    %p36 = scmp.ne.s32.totalorder %s28, %s31
    %p37 = scmp.eq.s32.totalorder %s18, 0
    %p38 = por %p36, %p37
    %p39 = scmp.ne.s32.totalorder %s28, %s31
    %p40 = scmp.eq.s32.totalorder %s23, 1
    %p41 = por %p39, %p40
    %p42 = scmp.ne.s32.totalorder %s31, %s32
    %p43 = scmp.eq.s32.totalorder %s23, 0
    %p44 = por %p42, %p43
    %p45 = scmp.ne.s32.totalorder %s31, %s32
    %p46 = scmp.eq.s32.totalorder %s24, 1
    %p47 = por %p45, %p46
    %p49 = scmp.ne.s32.totalorder %s32, %s48
    %p50 = scmp.eq.s32.totalorder %s24, 0
    %p51 = por %p49, %p50
    %s52 = ssub.s32 %s18, %s25
    %p53 = scmp.eq.s32.totalorder %s52, 0
    %s55 = sadd.s32 %s54, 1
    %s56 = scalar_select %p53, %s54, %s55
    %p59 = pneg %p53
    %p60 = scmp.eq.s32.totalorder %s18, 1
    %p61 = por %p59, %p60
    %p62 = scmp.ne.s32.totalorder %s54, %s57
    %p63 = scmp.eq.s32.totalorder %s18, 0
    %p64 = por %p62, %p63
    %p65 = scmp.ne.s32.totalorder %s54, %s57
    %p66 = scmp.eq.s32.totalorder %s23, 1
    %p67 = por %p65, %p66
    %p68 = scmp.ne.s32.totalorder %s57, %s58
    %p69 = scmp.eq.s32.totalorder %s23, 0
    %p70 = por %p68, %p69
    %p71 = scmp.ne.s32.totalorder %s57, %s58
    %p72 = scmp.eq.s32.totalorder %s24, 1
    %p73 = por %p71, %p72
    %p75 = scmp.ne.s32.totalorder %s58, %s74
    %p76 = scmp.eq.s32.totalorder %s24, 0
    %p77 = por %p75, %p76
    %s79 = sadd.s32 %s78, 1
    %p82 = scmp.eq.s32.totalorder %s18, 1
    %p83 = scmp.ne.s32.totalorder %s78, %s80
    %p84 = scmp.eq.s32.totalorder %s18, 0
    %p85 = por %p83, %p84
    %p86 = scmp.ne.s32.totalorder %s78, %s80
    %p87 = scmp.eq.s32.totalorder %s23, 1
    %p88 = por %p86, %p87
    %p89 = scmp.ne.s32.totalorder %s80, %s81
    %p90 = scmp.eq.s32.totalorder %s23, 0
    %p91 = por %p89, %p90
    %p92 = scmp.ne.s32.totalorder %s80, %s81
    %p93 = scmp.eq.s32.totalorder %s24, 1
    %p94 = por %p92, %p93
    %p96 = scmp.ne.s32.totalorder %s81, %s95
    %p97 = scmp.eq.s32.totalorder %s24, 0
    %p98 = por %p96, %p97
    %s100 = sadd.s32 %s99, 1
    %p103 = scmp.eq.s32.totalorder %s18, 1
    %p104 = scmp.ne.s32.totalorder %s99, %s101
    %p105 = scmp.eq.s32.totalorder %s18, 0
    %p106 = por %p104, %p105
    %p107 = scmp.ne.s32.totalorder %s99, %s101
    %p108 = scmp.eq.s32.totalorder %s23, 1
    %p109 = por %p107, %p108
    %p110 = scmp.ne.s32.totalorder %s101, %s102
    %p111 = scmp.eq.s32.totalorder %s23, 0
    %p112 = por %p110, %p111
    %p113 = scmp.ne.s32.totalorder %s101, %s102
    %p114 = scmp.eq.s32.totalorder %s24, 1
    %p115 = por %p113, %p114
    %p117 = scmp.ne.s32.totalorder %s102, %s116
    %p118 = scmp.eq.s32.totalorder %s24, 0
    %p119 = por %p117, %p118
    %s121 = sadd.s32 %s120, 1
    %p124 = scmp.eq.s32.totalorder %s18, 1
    %p125 = scmp.ne.s32.totalorder %s120, %s122
    %p126 = scmp.eq.s32.totalorder %s18, 0
    %p127 = por %p125, %p126
    %p128 = scmp.ne.s32.totalorder %s120, %s122
    %p129 = scmp.eq.s32.totalorder %s23, 1
    %p130 = por %p128, %p129
    %p131 = scmp.ne.s32.totalorder %s122, %s123
    %p132 = scmp.eq.s32.totalorder %s23, 0
    %p133 = por %p131, %p132
    %p134 = scmp.ne.s32.totalorder %s122, %s123
    %p135 = scmp.eq.s32.totalorder %s24, 1
    %p136 = por %p134, %p135
    %p138 = scmp.ne.s32.totalorder %s123, %s137
    %p139 = scmp.eq.s32.totalorder %s24, 0
    %p140 = por %p138, %p139
    %s142 = sadd.s32 %s141, 1
    %p145 = scmp.eq.s32.totalorder %s18, 1
    %p146 = scmp.ne.s32.totalorder %s141, %s143
    %p147 = scmp.eq.s32.totalorder %s18, 0
    %p148 = por %p146, %p147
    %p149 = scmp.ne.s32.totalorder %s141, %s143
    %p150 = scmp.eq.s32.totalorder %s23, 1
    %p151 = por %p149, %p150
    %p152 = scmp.ne.s32.totalorder %s143, %s144
    %p153 = scmp.eq.s32.totalorder %s23, 0
    %p154 = por %p152, %p153
    %p155 = scmp.ne.s32.totalorder %s143, %s144
    %p156 = scmp.eq.s32.totalorder %s24, 1
    %p157 = por %p155, %p156
    %p159 = scmp.ne.s32.totalorder %s144, %s158
    %p160 = scmp.eq.s32.totalorder %s24, 0
    %p161 = por %p159, %p160
    %s163 = sadd.s32 %s162, 1
    %p166 = scmp.eq.s32.totalorder %s18, 1
    %p167 = scmp.ne.s32.totalorder %s162, %s164
    %p168 = scmp.eq.s32.totalorder %s18, 0
    %p169 = por %p167, %p168
    %p170 = scmp.ne.s32.totalorder %s162, %s164
    %p171 = scmp.eq.s32.totalorder %s23, 1
    %p172 = por %p170, %p171
    %p173 = scmp.ne.s32.totalorder %s164, %s165
    %p174 = scmp.eq.s32.totalorder %s23, 0
    %p175 = por %p173, %p174
    %p176 = scmp.ne.s32.totalorder %s164, %s165
    %p177 = scmp.eq.s32.totalorder %s24, 1
    %p178 = por %p176, %p177
    %p180 = scmp.ne.s32.totalorder %s165, %s179
    %p181 = scmp.eq.s32.totalorder %s24, 0
    %p182 = por %p180, %p181
    %s184 = sadd.s32 %s183, 1
    %p187 = scmp.eq.s32.totalorder %s18, 1
    %p188 = scmp.ne.s32.totalorder %s183, %s185
    %p189 = scmp.eq.s32.totalorder %s18, 0
    %p190 = por %p188, %p189
    %p191 = scmp.ne.s32.totalorder %s183, %s185
    %p192 = scmp.eq.s32.totalorder %s23, 1
    %p193 = por %p191, %p192
    %p194 = scmp.ne.s32.totalorder %s185, %s186
    %p195 = scmp.eq.s32.totalorder %s23, 0
    %p196 = por %p194, %p195
    %p197 = scmp.ne.s32.totalorder %s185, %s186
    %p198 = scmp.eq.s32.totalorder %s24, 1
    %p199 = por %p197, %p198
    %p201 = scmp.ne.s32.totalorder %s186, %s200
    %p202 = scmp.eq.s32.totalorder %s24, 0
    %p203 = por %p201, %p202
    %s205 = sadd.s32 %s204, 1
    %p208 = scmp.eq.s32.totalorder %s18, 1
    %p209 = scmp.ne.s32.totalorder %s204, %s206
    %p210 = scmp.eq.s32.totalorder %s18, 0
    %p211 = por %p209, %p210
    %p212 = scmp.ne.s32.totalorder %s204, %s206
    %p213 = scmp.eq.s32.totalorder %s23, 1
    %p214 = por %p212, %p213
    %p215 = scmp.ne.s32.totalorder %s206, %s207
    %p216 = scmp.eq.s32.totalorder %s23, 0
    %p217 = por %p215, %p216
    %p218 = scmp.ne.s32.totalorder %s206, %s207
    %p219 = scmp.eq.s32.totalorder %s24, 1
    %p220 = por %p218, %p219
    %p222 = scmp.ne.s32.totalorder %s207, %s221
    %p223 = scmp.eq.s32.totalorder %s24, 0
    %p224 = por %p222, %p223
    %s226 = sadd.s32 %s225, 1
    %p229 = scmp.eq.s32.totalorder %s18, 1
    %p230 = scmp.ne.s32.totalorder %s225, %s227
    %p231 = scmp.eq.s32.totalorder %s18, 0
    %p232 = por %p230, %p231
    %p233 = scmp.ne.s32.totalorder %s225, %s227
    %p234 = scmp.eq.s32.totalorder %s23, 1
    %p235 = por %p233, %p234
    %p236 = scmp.ne.s32.totalorder %s227, %s228
    %p237 = scmp.eq.s32.totalorder %s23, 0
    %p238 = por %p236, %p237
    %p239 = scmp.ne.s32.totalorder %s227, %s228
    %p240 = scmp.eq.s32.totalorder %s24, 1
    %p241 = por %p239, %p240
    %p243 = scmp.ne.s32.totalorder %s228, %s242
    %p244 = scmp.eq.s32.totalorder %s24, 0
    %p245 = por %p243, %p244
    %s247 = sadd.s32 %s246, 1
    %p250 = scmp.eq.s32.totalorder %s18, 1
    %p251 = scmp.ne.s32.totalorder %s246, %s248
    %p252 = scmp.eq.s32.totalorder %s18, 0
    %p253 = por %p251, %p252
    %p254 = scmp.ne.s32.totalorder %s246, %s248
    %p255 = scmp.eq.s32.totalorder %s23, 1
    %p256 = por %p254, %p255
    %p257 = scmp.ne.s32.totalorder %s248, %s249
    %p258 = scmp.eq.s32.totalorder %s23, 0
    %p259 = por %p257, %p258
    %p260 = scmp.ne.s32.totalorder %s248, %s249
    %p261 = scmp.eq.s32.totalorder %s24, 1
    %p262 = por %p260, %p261
    %p264 = scmp.ne.s32.totalorder %s249, %s263
    %p265 = scmp.eq.s32.totalorder %s24, 0
    %p266 = por %p264, %p265
    %s268 = sadd.s32 %s267, 1
    %p271 = scmp.eq.s32.totalorder %s18, 1
    %p272 = scmp.ne.s32.totalorder %s267, %s269
    %p273 = scmp.eq.s32.totalorder %s18, 0
    %p274 = por %p272, %p273
    %p275 = scmp.ne.s32.totalorder %s267, %s269
    %p276 = scmp.eq.s32.totalorder %s23, 1
    %p277 = por %p275, %p276
    %p278 = scmp.ne.s32.totalorder %s269, %s270
    %p279 = scmp.eq.s32.totalorder %s23, 0
    %p280 = por %p278, %p279
    %p281 = scmp.ne.s32.totalorder %s269, %s270
    %p282 = scmp.eq.s32.totalorder %s24, 1
    %p283 = por %p281, %p282
    %p285 = scmp.ne.s32.totalorder %s270, %s284
    %p286 = scmp.eq.s32.totalorder %s24, 0
    %p287 = por %p285, %p286
    %s288 = ssub.s32 %s18, %s25
    %p289 = scmp.eq.s32.totalorder %s288, 0
    %s291 = sadd.s32 %s290, 1
    %s292 = scalar_select %p289, %s290, %s291
    %p295 = pneg %p289
    %p296 = scmp.eq.s32.totalorder %s18, 1
    %p297 = por %p295, %p296
    %p298 = scmp.ne.s32.totalorder %s290, %s293
    %p299 = scmp.eq.s32.totalorder %s18, 0
    %p300 = por %p298, %p299
    %p301 = scmp.ne.s32.totalorder %s290, %s293
    %p302 = scmp.eq.s32.totalorder %s23, 1
    %p303 = por %p301, %p302
    %p304 = scmp.ne.s32.totalorder %s293, %s294
    %p305 = scmp.eq.s32.totalorder %s23, 0
    %p306 = por %p304, %p305
    %p307 = scmp.ne.s32.totalorder %s293, %s294
    %p308 = scmp.eq.s32.totalorder %s24, 1
    %p309 = por %p307, %p308
    %p311 = scmp.ne.s32.totalorder %s294, %s310
    %p312 = scmp.eq.s32.totalorder %s24, 0
    %p313 = por %p311, %p312
    %p314 = scmp.le.s32.totalorder 1, %s18
    %p315 = scmp.lt.s32.totalorder %s18, 3
    %p316 = pnand %p314, %p315
    %p317 = pneg %p316
    // Predicated region
    $region9: #{transformer_forward.9} parent=5 // pred_check
      _
    $region10: #{transformer_forward.9} parent=5 // pred_check_branch
      %319 = sbr.rel (%p316) target = $region12
    $region11: #{transformer_forward.9} parent=5 // pred_region
      %s320 = ssub.s32 %s18, 1
      // Predicated region
      $region13: #{transformer_forward.9} parent=11 // pred_check
        %p321 = pneg %p91
      $region14: #{transformer_forward.9} parent=11 // pred_check_branch
        %323 = sbr.rel (%p321) target = $region16
      $region15: #{transformer_forward.9} parent=11 // pred_region
        _
      $region16: #{transformer_forward.9} parent=11 // pred_fallthru
        _
      // Predicated region
      $region17: #{transformer_forward.9} parent=11 // pred_check
        %p324 = pneg %p112
      $region18: #{transformer_forward.9} parent=11 // pred_check_branch
        %326 = sbr.rel (%p324) target = $region20
      $region19: #{transformer_forward.9} parent=11 // pred_region
        _
      $region20: #{transformer_forward.9} parent=11 // pred_fallthru
        _
      // Predicated region
      $region21: #{transformer_forward.9} parent=11 // pred_check
        %p327 = pneg %p133
      $region22: #{transformer_forward.9} parent=11 // pred_check_branch
        %329 = sbr.rel (%p327) target = $region24
      $region23: #{transformer_forward.9} parent=11 // pred_region
        _
      $region24: #{transformer_forward.9} parent=11 // pred_fallthru
        _
      // Predicated region
      $region25: #{transformer_forward.9} parent=11 // pred_check
        %p330 = pneg %p154
      $region26: #{transformer_forward.9} parent=11 // pred_check_branch
        %332 = sbr.rel (%p330) target = $region28
      $region27: #{transformer_forward.9} parent=11 // pred_region
        _
      $region28: #{transformer_forward.9} parent=11 // pred_fallthru
        _
      // Predicated region
      $region29: #{transformer_forward.9} parent=11 // pred_check
        %p333 = pneg %p175
      $region30: #{transformer_forward.9} parent=11 // pred_check_branch
        %335 = sbr.rel (%p333) target = $region32
      $region31: #{transformer_forward.9} parent=11 // pred_region
        _
      $region32: #{transformer_forward.9} parent=11 // pred_fallthru
        _
      // Predicated region
      $region33: #{transformer_forward.9} parent=11 // pred_check
        %p336 = pneg %p196
      $region34: #{transformer_forward.9} parent=11 // pred_check_branch
        %338 = sbr.rel (%p336) target = $region36
      $region35: #{transformer_forward.9} parent=11 // pred_region
        _
      $region36: #{transformer_forward.9} parent=11 // pred_fallthru
        _
      // Predicated region
      $region37: #{transformer_forward.9} parent=11 // pred_check
        %p339 = pneg %p217
      $region38: #{transformer_forward.9} parent=11 // pred_check_branch
        %341 = sbr.rel (%p339) target = $region40
      $region39: #{transformer_forward.9} parent=11 // pred_region
        _
      $region40: #{transformer_forward.9} parent=11 // pred_fallthru
        _
      // Predicated region
      $region41: #{transformer_forward.9} parent=11 // pred_check
        %p342 = pneg %p238
      $region42: #{transformer_forward.9} parent=11 // pred_check_branch
        %344 = sbr.rel (%p342) target = $region44
      $region43: #{transformer_forward.9} parent=11 // pred_region
        _
      $region44: #{transformer_forward.9} parent=11 // pred_fallthru
        _
      // Predicated region
      $region45: #{transformer_forward.9} parent=11 // pred_check
        %p345 = pneg %p259
      $region46: #{transformer_forward.9} parent=11 // pred_check_branch
        %347 = sbr.rel (%p345) target = $region48
      $region47: #{transformer_forward.9} parent=11 // pred_region
        _
      $region48: #{transformer_forward.9} parent=11 // pred_fallthru
        _
      // Predicated region
      $region49: #{transformer_forward.9} parent=11 // pred_check
        %p348 = pneg %p280
      $region50: #{transformer_forward.9} parent=11 // pred_check_branch
        %350 = sbr.rel (%p348) target = $region52
      $region51: #{transformer_forward.9} parent=11 // pred_region
        _
      $region52: #{transformer_forward.9} parent=11 // pred_fallthru
        _
    $region12: #{transformer_forward.9} parent=5 // pred_fallthru
      _
    %p351 = scmp.lt.s32.totalorder %s18, 2
    // Predicated region
    $region53: #{transformer_forward.9} parent=5 // pred_check
      %p352 = pneg %p351
    $region54: #{transformer_forward.9} parent=5 // pred_check_branch
      %354 = sbr.rel (%p352) target = $region56
    $region55: #{transformer_forward.9} parent=5 // pred_region
      // Predicated region
      $region57: #{transformer_forward.9} parent=55 // pred_check
        %p355 = pneg %p38
      $region58: #{transformer_forward.9} parent=55 // pred_check_branch
        %357 = sbr.rel (%p355) target = $region60
      $region59: #{transformer_forward.9} parent=55 // pred_region
        %p358 = scmp.lt.s32.totalorder %s18, 1
        %s359 = scalar_select %p358, %s18, 1
        %s360 = smul.addr %s359, 8
        %s361 = scalar_lea.vmem %s0, %s360
      $region60: #{transformer_forward.9} parent=55 // pred_fallthru
        _
      // Predicated region
      $region61: #{transformer_forward.9} parent=55 // pred_check
        %p362 = pneg %p64
      $region62: #{transformer_forward.9} parent=55 // pred_check_branch
        %364 = sbr.rel (%p362) target = $region64
      $region63: #{transformer_forward.9} parent=55 // pred_region
        %p365 = scmp.lt.s32.totalorder %s18, 1
        %s366 = scalar_select %p365, %s18, 1
        %s367 = smul.addr %s366, 8
        %s368 = scalar_lea.vmem %s1, %s367
      $region64: #{transformer_forward.9} parent=55 // pred_fallthru
        _
    $region56: #{transformer_forward.9} parent=5 // pred_fallthru
      _
    %p369 = scmp.le.s32.totalorder 1, %s18
    %p370 = scmp.lt.s32.totalorder %s18, 3
    %p371 = pnand %p369, %p370
    %p372 = pneg %p371
    // Predicated region
    $region65: #{transformer_forward.9} parent=5 // pred_check
      _
    $region66: #{transformer_forward.9} parent=5 // pred_check_branch
      %374 = sbr.rel (%p371) target = $region68
    $region67: #{transformer_forward.9} parent=5 // pred_region
      %s375 = ssub.s32 %s18, 1
      %p376 = scmp.lt.s32.totalorder %s23, 1
      %s377 = scalar_select %p376, %s23, 1
      %s378 = smul.addr %s377, 8
      %s379 = scalar_lea.vmem %s0, %s378
      %p380 = pneg %p44
      %p381 = pneg %p41
      %p382 = scmp.lt.s32.totalorder %s23, 1
      %s383 = scalar_select %p382, %s23, 1
      %s384 = smul.addr %s383, 8
      %s385 = scalar_lea.vmem %s1, %s384
      %p386 = pneg %p70
      %p387 = pneg %p67
      %p388 = pneg %p91
      %p389 = pneg %p88
      %p390 = pneg %p112
      %p391 = pneg %p109
      %p392 = pneg %p133
      %p393 = pneg %p130
      %p394 = pneg %p154
      %p395 = pneg %p151
      %p396 = pneg %p175
      %p397 = pneg %p172
      %p398 = pneg %p196
      %p399 = pneg %p193
      %p400 = pneg %p217
      %p401 = pneg %p214
      %p402 = pneg %p238
      %p403 = pneg %p235
      %p404 = pneg %p259
      %p405 = pneg %p256
      %p406 = pneg %p280
      %p407 = pneg %p277
      %p408 = pneg %p306
      %p409 = pneg %p303
      %p410 = scmp.lt.s32.totalorder %s23, 1
      %s411 = scalar_select %p410, %s23, 1
      %s412 = smul.addr %s411, 8
      %s413 = scalar_lea.vmem %s12, %s412
      %p414 = scmp.lt.s32.totalorder %s23, 1
      %s415 = scalar_select %p414, %s23, 1
      %s416 = smul.addr %s415, 8
      %s417 = scalar_lea.vmem %s0, %s416
      %p418 = scmp.lt.s32.totalorder %s23, 1
      %s419 = scalar_select %p418, %s23, 1
      %s420 = smul.addr %s419, 8
      %s421 = scalar_lea.vmem %s1, %s420
      %p422 = scmp.lt.s32.totalorder %s23, 1
      %s423 = scalar_select %p422, %s23, 1
      %s424 = smul.addr %s423, 8
      %s425 = scalar_lea.vmem %s12, %s424
      %v427 = vld [vmem:[%s417] sm:$0xff]
      %v428 = vld [vmem:[%s421] sm:$0xff]
      %v429 = vpack.c.bf16 %v427, %v427
      %v430 = vpack.c.bf16 %v428, %v428
      %v431 = vld [vmem:[%s2] sm:$0xf]
      %v432 = vld [vmem:[%s2 + $0x4] sm:$0xf]
      %v433 = vld [vmem:[%s2 + $0x8] sm:$0xf]
      %v434 = vld [vmem:[%s2 + $0xc] sm:$0xf]
      %v435 = vld [vmem:[%s2 + $0x10] sm:$0xf]
      %v436 = vld [vmem:[%s2 + $0x14] sm:$0xf]
      %v437 = vld [vmem:[%s2 + $0x18] sm:$0xf]
      %v438 = vld [vmem:[%s2 + $0x1c] sm:$0xf]
      %v439 = vld [vmem:[%s2 + $0x20] sm:$0xf]
      %v440 = vld [vmem:[%s2 + $0x24] sm:$0xf]
      %v441 = vld [vmem:[%s2 + $0x28] sm:$0xf]
      %v442 = vld [vmem:[%s2 + $0x2c] sm:$0xf]
      %v443 = vld [vmem:[%s2 + $0x30] sm:$0xf]
      %v444 = vld [vmem:[%s2 + $0x34] sm:$0xf]
      %v445 = vld [vmem:[%s2 + $0x38] sm:$0xf]
      %v446 = vld [vmem:[%s2 + $0x3c] sm:$0xf]
      %v447 = vld [vmem:[%s3] sm:$0x1]
      %v448 = vld [vmem:[%s3 + $0x1] sm:$0x1]
      %v449 = vld [vmem:[%s3 + $0x2] sm:$0x1]
      %v450 = vld [vmem:[%s3 + $0x3] sm:$0x1]
      %v455 = vlaneseq
      %v456 = vshrl.u32 %v455, 7
      %v457 = vsub.s32 0, %v456
      %v458 = vrot.slane %v447, %v457
      %v459 = vlaneseq
      %v460 = vshrl.u32 %v459, 7
      %v461 = vsub.s32 0, %v460
      %v462 = vrot.slane %v448, %v461
      %v463 = vlaneseq
      %v464 = vshrl.u32 %v463, 7
      %v465 = vsub.s32 0, %v464
      %v466 = vrot.slane %v449, %v465
      %v467 = vlaneseq
      %v468 = vshrl.u32 %v467, 7
      %v469 = vsub.s32 0, %v468
      %v470 = vrot.slane %v450, %v469
      %v479 = vunpack.c.l.b16 %v431
      %v480 = vunpack.c.l.b16 %v432
      %v481 = vunpack.c.l.b16 %v433
      %v482 = vunpack.c.l.b16 %v434
      %v483 = vpack.c.b16 %v480, %v479
      %v484 = vpack.c.b16 %v482, %v481
      %vm487 = vcmask 261120
      %v489 = vsel %vm487, %v429, 0
      %491 = vmatprep.subr.bf16.mxu0 0
      %492 = vmatpush1.bf16.msra.mxu0 %v483
      %493 = vmatprep.subr.bf16.mxu0 0
      %494 = vmatpush1.bf16.msra.mxu0 %v484
      %495 = vmatprep.subr.bf16.mxu0 0
      %496 = vmatpush1.bf16.msra.mxu0 0
      %497 = vmatprep.subr.bf16.mxu0 0
      %498 = vmatpush1.bf16.msra.mxu0 0
      %499 = vmatprep.subr.bf16.mxu0 0
      %500 = vmatpush1.bf16.msra.mxu0 0
      %501 = vmatprep.subr.bf16.mxu0 0
      %502 = vmatpush1.bf16.msra.mxu0 0
      %503 = vmatprep.subr.bf16.mxu0 0
      %504 = vmatpush1.bf16.msra.mxu0 0
      %505 = vmatprep.subr.bf16.mxu0 0
      %506 = vmatpush1.bf16.msra.mxu0 0
      %507 = vmatprep.subr.bf16.mxu0 0
      %508 = vmatpush1.bf16.msra.mxu0 0
      %509 = vmatprep.subr.bf16.mxu0 0
      %510 = vmatpush1.bf16.msra.mxu0 0
      %511 = vmatprep.subr.bf16.mxu0 0
      %512 = vmatpush1.bf16.msra.mxu0 0
      %513 = vmatprep.subr.bf16.mxu0 0
      %514 = vmatpush1.bf16.msra.mxu0 0
      %515 = vmatprep.subr.bf16.mxu0 0
      %516 = vmatpush1.bf16.msra.mxu0 0
      %517 = vmatprep.subr.bf16.mxu0 0
      %518 = vmatpush1.bf16.msra.mxu0 0
      %519 = vmatprep.subr.bf16.mxu0 0
      %520 = vmatpush1.bf16.msra.mxu0 0
      %521 = vmatprep.subr.bf16.mxu0 0
      %522 = vmatpush1.bf16.msra.mxu0 0
      %523 = vmatprep.mubr.bf16.mxu0 0
      %524 = vmatmul.mubr.bf16.gmra.mrb[0].mxu0 %v489
      %v525 = vpop.f32.mrb[0].mxu0
      %v526 = vadd.f32 %v458, %v525
      %v527 = vpop.f32.mrb[0].mxu0
      %v528 = vpop.f32.mrb[0].mxu0
      %v529 = vpop.f32.mrb[0].mxu0
      %530 = vdwg.mxu0
      %v535 = vunpack.c.l.b16 %v435
      %v536 = vunpack.c.l.b16 %v436
      %v537 = vunpack.c.l.b16 %v437
      %v538 = vunpack.c.l.b16 %v438
      %v539 = vpack.c.b16 %v536, %v535
      %v540 = vpack.c.b16 %v538, %v537
      %543 = vmatprep.subr.bf16.mxu0 0
      %544 = vmatpush1.bf16.msra.mxu0 %v539
      %545 = vmatprep.subr.bf16.mxu0 0
      %546 = vmatpush1.bf16.msra.mxu0 %v540
      %547 = vmatprep.subr.bf16.mxu0 0
      %548 = vmatpush1.bf16.msra.mxu0 0
      %549 = vmatprep.subr.bf16.mxu0 0
      %550 = vmatpush1.bf16.msra.mxu0 0
      %551 = vmatprep.subr.bf16.mxu0 0
      %552 = vmatpush1.bf16.msra.mxu0 0
      %553 = vmatprep.subr.bf16.mxu0 0
      %554 = vmatpush1.bf16.msra.mxu0 0
      %555 = vmatprep.subr.bf16.mxu0 0
      %556 = vmatpush1.bf16.msra.mxu0 0
      %557 = vmatprep.subr.bf16.mxu0 0
      %558 = vmatpush1.bf16.msra.mxu0 0
      %559 = vmatprep.subr.bf16.mxu0 0
      %560 = vmatpush1.bf16.msra.mxu0 0
      %561 = vmatprep.subr.bf16.mxu0 0
      %562 = vmatpush1.bf16.msra.mxu0 0
      %563 = vmatprep.subr.bf16.mxu0 0
      %564 = vmatpush1.bf16.msra.mxu0 0
      %565 = vmatprep.subr.bf16.mxu0 0
      %566 = vmatpush1.bf16.msra.mxu0 0
      %567 = vmatprep.subr.bf16.mxu0 0
      %568 = vmatpush1.bf16.msra.mxu0 0
      %569 = vmatprep.subr.bf16.mxu0 0
      %570 = vmatpush1.bf16.msra.mxu0 0
      %571 = vmatprep.subr.bf16.mxu0 0
      %572 = vmatpush1.bf16.msra.mxu0 0
      %573 = vmatprep.subr.bf16.mxu0 0
      %574 = vmatpush1.bf16.msra.mxu0 0
      %575 = vmatprep.mubr.bf16.mxu0 0
      %576 = vmatmul.mubr.bf16.gmra.mrb[0].mxu0 %v489
      %v577 = vpop.f32.mrb[0].mxu0
      %v578 = vadd.f32 %v462, %v577
      %v579 = vpop.f32.mrb[0].mxu0
      %v580 = vpop.f32.mrb[0].mxu0
      %v581 = vpop.f32.mrb[0].mxu0
      %582 = vdwg.mxu0
      %v587 = vunpack.c.l.b16 %v439
      %v588 = vunpack.c.l.b16 %v440
      %v589 = vunpack.c.l.b16 %v441
      %v590 = vunpack.c.l.b16 %v442
      %v591 = vpack.c.b16 %v588, %v587
      %v592 = vpack.c.b16 %v590, %v589
      %595 = vmatprep.subr.bf16.mxu0 0
      %596 = vmatpush1.bf16.msra.mxu0 %v591
      %597 = vmatprep.subr.bf16.mxu0 0
      %598 = vmatpush1.bf16.msra.mxu0 %v592
      %599 = vmatprep.subr.bf16.mxu0 0
      %600 = vmatpush1.bf16.msra.mxu0 0
      %601 = vmatprep.subr.bf16.mxu0 0
      %602 = vmatpush1.bf16.msra.mxu0 0
      %603 = vmatprep.subr.bf16.mxu0 0
      %604 = vmatpush1.bf16.msra.mxu0 0
      %605 = vmatprep.subr.bf16.mxu0 0
      %606 = vmatpush1.bf16.msra.mxu0 0
      %607 = vmatprep.subr.bf16.mxu0 0
      %608 = vmatpush1.bf16.msra.mxu0 0
      %609 = vmatprep.subr.bf16.mxu0 0
      %610 = vmatpush1.bf16.msra.mxu0 0
      %611 = vmatprep.subr.bf16.mxu0 0
      %612 = vmatpush1.bf16.msra.mxu0 0
      %613 = vmatprep.subr.bf16.mxu0 0
      %614 = vmatpush1.bf16.msra.mxu0 0
      %615 = vmatprep.subr.bf16.mxu0 0
      %616 = vmatpush1.bf16.msra.mxu0 0
      %617 = vmatprep.subr.bf16.mxu0 0
      %618 = vmatpush1.bf16.msra.mxu0 0
      %619 = vmatprep.subr.bf16.mxu0 0
      %620 = vmatpush1.bf16.msra.mxu0 0
      %621 = vmatprep.subr.bf16.mxu0 0
      %622 = vmatpush1.bf16.msra.mxu0 0
      %623 = vmatprep.subr.bf16.mxu0 0
      %624 = vmatpush1.bf16.msra.mxu0 0
      %625 = vmatprep.subr.bf16.mxu0 0
      %626 = vmatpush1.bf16.msra.mxu0 0
      %627 = vmatprep.mubr.bf16.mxu0 0
      %628 = vmatmul.mubr.bf16.gmra.mrb[0].mxu0 %v489
      %v629 = vpop.f32.mrb[0].mxu0
      %v630 = vadd.f32 %v466, %v629
      %v631 = vpop.f32.mrb[0].mxu0
      %v632 = vpop.f32.mrb[0].mxu0
      %v633 = vpop.f32.mrb[0].mxu0
      %634 = vdwg.mxu0
      %v639 = vunpack.c.l.b16 %v443
      %v640 = vunpack.c.l.b16 %v444
      %v641 = vunpack.c.l.b16 %v445
      %v642 = vunpack.c.l.b16 %v446
      %v643 = vpack.c.b16 %v640, %v639
      %v644 = vpack.c.b16 %v642, %v641
      %647 = vmatprep.subr.bf16.mxu0 0
      %648 = vmatpush1.bf16.msra.mxu0 %v643
      %649 = vmatprep.subr.bf16.mxu0 0
      %650 = vmatpush1.bf16.msra.mxu0 %v644
      %651 = vmatprep.subr.bf16.mxu0 0
      %652 = vmatpush1.bf16.msra.mxu0 0
      %653 = vmatprep.subr.bf16.mxu0 0
      %654 = vmatpush1.bf16.msra.mxu0 0
      %655 = vmatprep.subr.bf16.mxu0 0
      %656 = vmatpush1.bf16.msra.mxu0 0
      %657 = vmatprep.subr.bf16.mxu0 0
      %658 = vmatpush1.bf16.msra.mxu0 0
      %659 = vmatprep.subr.bf16.mxu0 0
      %660 = vmatpush1.bf16.msra.mxu0 0
      %661 = vmatprep.subr.bf16.mxu0 0
      %662 = vmatpush1.bf16.msra.mxu0 0
      %663 = vmatprep.subr.bf16.mxu0 0
      %664 = vmatpush1.bf16.msra.mxu0 0
      %665 = vmatprep.subr.bf16.mxu0 0
      %666 = vmatpush1.bf16.msra.mxu0 0
      %667 = vmatprep.subr.bf16.mxu0 0
      %668 = vmatpush1.bf16.msra.mxu0 0
      %669 = vmatprep.subr.bf16.mxu0 0
      %670 = vmatpush1.bf16.msra.mxu0 0
      %671 = vmatprep.subr.bf16.mxu0 0
      %672 = vmatpush1.bf16.msra.mxu0 0
      %673 = vmatprep.subr.bf16.mxu0 0
      %674 = vmatpush1.bf16.msra.mxu0 0
      %675 = vmatprep.subr.bf16.mxu0 0
      %676 = vmatpush1.bf16.msra.mxu0 0
      %677 = vmatprep.subr.bf16.mxu0 0
      %678 = vmatpush1.bf16.msra.mxu0 0
      %679 = vmatprep.mubr.bf16.mxu0 0
      %680 = vmatmul.mubr.bf16.gmra.mrb[0].mxu0 %v489
      %v681 = vpop.f32.mrb[0].mxu0
      %v682 = vadd.f32 %v470, %v681
      %v683 = vpop.f32.mrb[0].mxu0
      %v684 = vpop.f32.mrb[0].mxu0
      %v685 = vpop.f32.mrb[0].mxu0
      %686 = vdwg.mxu0
      %v687 = vld [vmem:[%s4] sm:$0xf]
      %v688 = vld [vmem:[%s4 + $0x4] sm:$0xf]
      %v689 = vld [vmem:[%s4 + $0x8] sm:$0xf]
      %v690 = vld [vmem:[%s4 + $0xc] sm:$0xf]
      %v691 = vld [vmem:[%s4 + $0x10] sm:$0xf]
      %v692 = vld [vmem:[%s4 + $0x14] sm:$0xf]
      %v693 = vld [vmem:[%s4 + $0x18] sm:$0xf]
      %v694 = vld [vmem:[%s4 + $0x1c] sm:$0xf]
      %v695 = vld [vmem:[%s4 + $0x20] sm:$0xf]
      %v696 = vld [vmem:[%s4 + $0x24] sm:$0xf]
      %v697 = vld [vmem:[%s4 + $0x28] sm:$0xf]
      %v698 = vld [vmem:[%s4 + $0x2c] sm:$0xf]
      %v699 = vld [vmem:[%s4 + $0x30] sm:$0xf]
      %v700 = vld [vmem:[%s4 + $0x34] sm:$0xf]
      %v701 = vld [vmem:[%s4 + $0x38] sm:$0xf]
      %v702 = vld [vmem:[%s4 + $0x3c] sm:$0xf]
      %v703 = vld [vmem:[%s5] sm:$0x1]
      %v704 = vld [vmem:[%s5 + $0x1] sm:$0x1]
      %v705 = vld [vmem:[%s5 + $0x2] sm:$0x1]
      %v706 = vld [vmem:[%s5 + $0x3] sm:$0x1]
      %v711 = vlaneseq
      %v712 = vshrl.u32 %v711, 7
      %v713 = vsub.s32 0, %v712
      %v714 = vrot.slane %v703, %v713
      %v715 = vlaneseq
      %v716 = vshrl.u32 %v715, 7
      %v717 = vsub.s32 0, %v716
      %v718 = vrot.slane %v704, %v717
      %v719 = vlaneseq
      %v720 = vshrl.u32 %v719, 7
      %v721 = vsub.s32 0, %v720
      %v722 = vrot.slane %v705, %v721
      %v723 = vlaneseq
      %v724 = vshrl.u32 %v723, 7
      %v725 = vsub.s32 0, %v724
      %v726 = vrot.slane %v706, %v725
      %v735 = vunpack.c.l.b16 %v687
      %v736 = vunpack.c.l.b16 %v688
      %v737 = vunpack.c.l.b16 %v689
      %v738 = vunpack.c.l.b16 %v690
      %v739 = vpack.c.b16 %v736, %v735
      %v740 = vpack.c.b16 %v738, %v737
      %v744 = vsel %vm487, %v430, 0
      %746 = vmatprep.subr.bf16.mxu0 0
      %747 = vmatpush1.bf16.msra.mxu0 %v739
      %748 = vmatprep.subr.bf16.mxu0 0
      %749 = vmatpush1.bf16.msra.mxu0 %v740
      %750 = vmatprep.subr.bf16.mxu0 0
      %751 = vmatpush1.bf16.msra.mxu0 0
      %752 = vmatprep.subr.bf16.mxu0 0
      %753 = vmatpush1.bf16.msra.mxu0 0
      %754 = vmatprep.subr.bf16.mxu0 0
      %755 = vmatpush1.bf16.msra.mxu0 0
      %756 = vmatprep.subr.bf16.mxu0 0
      %757 = vmatpush1.bf16.msra.mxu0 0
      %758 = vmatprep.subr.bf16.mxu0 0
      %759 = vmatpush1.bf16.msra.mxu0 0
      %760 = vmatprep.subr.bf16.mxu0 0
      %761 = vmatpush1.bf16.msra.mxu0 0
      %762 = vmatprep.subr.bf16.mxu0 0
      %763 = vmatpush1.bf16.msra.mxu0 0
      %764 = vmatprep.subr.bf16.mxu0 0
      %765 = vmatpush1.bf16.msra.mxu0 0
      %766 = vmatprep.subr.bf16.mxu0 0
      %767 = vmatpush1.bf16.msra.mxu0 0
      %768 = vmatprep.subr.bf16.mxu0 0
      %769 = vmatpush1.bf16.msra.mxu0 0
      %770 = vmatprep.subr.bf16.mxu0 0
      %771 = vmatpush1.bf16.msra.mxu0 0
      %772 = vmatprep.subr.bf16.mxu0 0
      %773 = vmatpush1.bf16.msra.mxu0 0
      %774 = vmatprep.subr.bf16.mxu0 0
      %775 = vmatpush1.bf16.msra.mxu0 0
      %776 = vmatprep.subr.bf16.mxu0 0
      %777 = vmatpush1.bf16.msra.mxu0 0
      %778 = vmatprep.mubr.bf16.mxu0 0
      %779 = vmatmul.mubr.bf16.gmra.mrb[0].mxu0 %v744
      %v780 = vpop.f32.mrb[0].mxu0
      %v781 = vadd.f32 %v714, %v780
      %v782 = vpop.f32.mrb[0].mxu0
      %v783 = vpop.f32.mrb[0].mxu0
      %v784 = vpop.f32.mrb[0].mxu0
      %785 = vdwg.mxu0
      %v790 = vunpack.c.l.b16 %v691
      %v791 = vunpack.c.l.b16 %v692
      %v792 = vunpack.c.l.b16 %v693
      %v793 = vunpack.c.l.b16 %v694
      %v794 = vpack.c.b16 %v791, %v790
      %v795 = vpack.c.b16 %v793, %v792
      %798 = vmatprep.subr.bf16.mxu0 0
      %799 = vmatpush1.bf16.msra.mxu0 %v794
      %800 = vmatprep.subr.bf16.mxu0 0
      %801 = vmatpush1.bf16.msra.mxu0 %v795
      %802 = vmatprep.subr.bf16.mxu0 0
      %803 = vmatpush1.bf16.msra.mxu0 0
      %804 = vmatprep.subr.bf16.mxu0 0
      %805 = vmatpush1.bf16.msra.mxu0 0
      %806 = vmatprep.subr.bf16.mxu0 0
      %807 = vmatpush1.bf16.msra.mxu0 0
      %808 = vmatprep.subr.bf16.mxu0 0
      %809 = vmatpush1.bf16.msra.mxu0 0
      %810 = vmatprep.subr.bf16.mxu0 0
      %811 = vmatpush1.bf16.msra.mxu0 0
      %812 = vmatprep.subr.bf16.mxu0 0
      %813 = vmatpush1.bf16.msra.mxu0 0
      %814 = vmatprep.subr.bf16.mxu0 0
      %815 = vmatpush1.bf16.msra.mxu0 0
      %816 = vmatprep.subr.bf16.mxu0 0
      %817 = vmatpush1.bf16.msra.mxu0 0
      %818 = vmatprep.subr.bf16.mxu0 0
      %819 = vmatpush1.bf16.msra.mxu0 0
      %820 = vmatprep.subr.bf16.mxu0 0
      %821 = vmatpush1.bf16.msra.mxu0 0
      %822 = vmatprep.subr.bf16.mxu0 0
      %823 = vmatpush1.bf16.msra.mxu0 0
      %824 = vmatprep.subr.bf16.mxu0 0
      %825 = vmatpush1.bf16.msra.mxu0 0
      %826 = vmatprep.subr.bf16.mxu0 0
      %827 = vmatpush1.bf16.msra.mxu0 0
      %828 = vmatprep.subr.bf16.mxu0 0
      %829 = vmatpush1.bf16.msra.mxu0 0
      %830 = vmatprep.mubr.bf16.mxu0 0
      %831 = vmatmul.mubr.bf16.gmra.mrb[0].mxu0 %v744
      %v832 = vpop.f32.mrb[0].mxu0
      %v833 = vadd.f32 %v718, %v832
      %v834 = vpop.f32.mrb[0].mxu0
      %v835 = vpop.f32.mrb[0].mxu0
      %v836 = vpop.f32.mrb[0].mxu0
      %837 = vdwg.mxu0
      %v842 = vunpack.c.l.b16 %v695
      %v843 = vunpack.c.l.b16 %v696
      %v844 = vunpack.c.l.b16 %v697
      %v845 = vunpack.c.l.b16 %v698
      %v846 = vpack.c.b16 %v843, %v842
      %v847 = vpack.c.b16 %v845, %v844
      %850 = vmatprep.subr.bf16.mxu0 0
      %851 = vmatpush1.bf16.msra.mxu0 %v846
      %852 = vmatprep.subr.bf16.mxu0 0
      %853 = vmatpush1.bf16.msra.mxu0 %v847
      %854 = vmatprep.subr.bf16.mxu0 0
      %855 = vmatpush1.bf16.msra.mxu0 0
      %856 = vmatprep.subr.bf16.mxu0 0
      %857 = vmatpush1.bf16.msra.mxu0 0
      %858 = vmatprep.subr.bf16.mxu0 0
      %859 = vmatpush1.bf16.msra.mxu0 0
      %860 = vmatprep.subr.bf16.mxu0 0
      %861 = vmatpush1.bf16.msra.mxu0 0
      %862 = vmatprep.subr.bf16.mxu0 0
      %863 = vmatpush1.bf16.msra.mxu0 0
      %864 = vmatprep.subr.bf16.mxu0 0
      %865 = vmatpush1.bf16.msra.mxu0 0
      %866 = vmatprep.subr.bf16.mxu0 0
      %867 = vmatpush1.bf16.msra.mxu0 0
      %868 = vmatprep.subr.bf16.mxu0 0
      %869 = vmatpush1.bf16.msra.mxu0 0
      %870 = vmatprep.subr.bf16.mxu0 0
      %871 = vmatpush1.bf16.msra.mxu0 0
      %872 = vmatprep.subr.bf16.mxu0 0
      %873 = vmatpush1.bf16.msra.mxu0 0
      %874 = vmatprep.subr.bf16.mxu0 0
      %875 = vmatpush1.bf16.msra.mxu0 0
      %876 = vmatprep.subr.bf16.mxu0 0
      %877 = vmatpush1.bf16.msra.mxu0 0
      %878 = vmatprep.subr.bf16.mxu0 0
      %879 = vmatpush1.bf16.msra.mxu0 0
      %880 = vmatprep.subr.bf16.mxu0 0
      %881 = vmatpush1.bf16.msra.mxu0 0
      %882 = vmatprep.mubr.bf16.mxu0 0
      %883 = vmatmul.mubr.bf16.gmra.mrb[0].mxu0 %v744
      %v884 = vpop.f32.mrb[0].mxu0
      %v885 = vadd.f32 %v722, %v884
      %v886 = vpop.f32.mrb[0].mxu0
      %v887 = vpop.f32.mrb[0].mxu0
      %v888 = vpop.f32.mrb[0].mxu0
      %889 = vdwg.mxu0
      %v894 = vunpack.c.l.b16 %v699
      %v895 = vunpack.c.l.b16 %v700
      %v896 = vunpack.c.l.b16 %v701
      %v897 = vunpack.c.l.b16 %v702
      %v898 = vpack.c.b16 %v895, %v894
      %v899 = vpack.c.b16 %v897, %v896
      %902 = vmatprep.subr.bf16.mxu0 0
      %903 = vmatpush1.bf16.msra.mxu0 %v898
      %904 = vmatprep.subr.bf16.mxu0 0
      %905 = vmatpush1.bf16.msra.mxu0 %v899
      %906 = vmatprep.subr.bf16.mxu0 0
      %907 = vmatpush1.bf16.msra.mxu0 0
      %908 = vmatprep.subr.bf16.mxu0 0
      %909 = vmatpush1.bf16.msra.mxu0 0
      %910 = vmatprep.subr.bf16.mxu0 0
      %911 = vmatpush1.bf16.msra.mxu0 0
      %912 = vmatprep.subr.bf16.mxu0 0
      %913 = vmatpush1.bf16.msra.mxu0 0
      %914 = vmatprep.subr.bf16.mxu0 0
      %915 = vmatpush1.bf16.msra.mxu0 0
      %916 = vmatprep.subr.bf16.mxu0 0
      %917 = vmatpush1.bf16.msra.mxu0 0
      %918 = vmatprep.subr.bf16.mxu0 0
      %919 = vmatpush1.bf16.msra.mxu0 0
      %920 = vmatprep.subr.bf16.mxu0 0
      %921 = vmatpush1.bf16.msra.mxu0 0
      %922 = vmatprep.subr.bf16.mxu0 0
      %923 = vmatpush1.bf16.msra.mxu0 0
      %924 = vmatprep.subr.bf16.mxu0 0
      %925 = vmatpush1.bf16.msra.mxu0 0
      %926 = vmatprep.subr.bf16.mxu0 0
      %927 = vmatpush1.bf16.msra.mxu0 0
      %928 = vmatprep.subr.bf16.mxu0 0
      %929 = vmatpush1.bf16.msra.mxu0 0
      %930 = vmatprep.subr.bf16.mxu0 0
      %931 = vmatpush1.bf16.msra.mxu0 0
      %932 = vmatprep.subr.bf16.mxu0 0
      %933 = vmatpush1.bf16.msra.mxu0 0
      %934 = vmatprep.mubr.bf16.mxu0 0
      %935 = vmatmul.mubr.bf16.gmra.mrb[0].mxu0 %v744
      %v936 = vpop.f32.mrb[0].mxu0
      %v937 = vadd.f32 %v726, %v936
      %v938 = vpop.f32.mrb[0].mxu0
      %v939 = vpop.f32.mrb[0].mxu0
      %v940 = vpop.f32.mrb[0].mxu0
      %941 = vdwg.mxu0
      %v942 = vld [vmem:[%s6] sm:$0xf]
      %v943 = vld [vmem:[%s6 + $0x4] sm:$0xf]
      %v944 = vld [vmem:[%s6 + $0x8] sm:$0xf]
      %v945 = vld [vmem:[%s6 + $0xc] sm:$0xf]
      %v946 = vld [vmem:[%s6 + $0x10] sm:$0xf]
      %v947 = vld [vmem:[%s6 + $0x14] sm:$0xf]
      %v948 = vld [vmem:[%s6 + $0x18] sm:$0xf]
      %v949 = vld [vmem:[%s6 + $0x1c] sm:$0xf]
      %v950 = vld [vmem:[%s6 + $0x20] sm:$0xf]
      %v951 = vld [vmem:[%s6 + $0x24] sm:$0xf]
      %v952 = vld [vmem:[%s6 + $0x28] sm:$0xf]
      %v953 = vld [vmem:[%s6 + $0x2c] sm:$0xf]
      %v954 = vld [vmem:[%s6 + $0x30] sm:$0xf]
      %v955 = vld [vmem:[%s6 + $0x34] sm:$0xf]
      %v956 = vld [vmem:[%s6 + $0x38] sm:$0xf]
      %v957 = vld [vmem:[%s6 + $0x3c] sm:$0xf]
      %v958 = vld [vmem:[%s7] sm:$0x1]
      %v959 = vld [vmem:[%s7 + $0x1] sm:$0x1]
      %v960 = vld [vmem:[%s7 + $0x2] sm:$0x1]
      %v961 = vld [vmem:[%s7 + $0x3] sm:$0x1]
      %v966 = vlaneseq
      %v967 = vshrl.u32 %v966, 7
      %v968 = vsub.s32 0, %v967
      %v969 = vrot.slane %v958, %v968
      %v970 = vlaneseq
      %v971 = vshrl.u32 %v970, 7
      %v972 = vsub.s32 0, %v971
      %v973 = vrot.slane %v959, %v972
      %v974 = vlaneseq
      %v975 = vshrl.u32 %v974, 7
      %v976 = vsub.s32 0, %v975
      %v977 = vrot.slane %v960, %v976
      %v978 = vlaneseq
      %v979 = vshrl.u32 %v978, 7
      %v980 = vsub.s32 0, %v979
      %v981 = vrot.slane %v961, %v980
      %v990 = vunpack.c.l.b16 %v942
      %v991 = vunpack.c.l.b16 %v943
      %v992 = vunpack.c.l.b16 %v944
      %v993 = vunpack.c.l.b16 %v945
      %v994 = vpack.c.b16 %v991, %v990
      %v995 = vpack.c.b16 %v993, %v992
      %998 = vmatprep.subr.bf16.mxu0 0
      %999 = vmatpush1.bf16.msra.mxu0 %v994
      %1000 = vmatprep.subr.bf16.mxu0 0
      %1001 = vmatpush1.bf16.msra.mxu0 %v995
      %1002 = vmatprep.subr.bf16.mxu0 0
      %1003 = vmatpush1.bf16.msra.mxu0 0
      %1004 = vmatprep.subr.bf16.mxu0 0
      %1005 = vmatpush1.bf16.msra.mxu0 0
      %1006 = vmatprep.subr.bf16.mxu0 0
      %1007 = vmatpush1.bf16.msra.mxu0 0
      %1008 = vmatprep.subr.bf16.mxu0 0
      %1009 = vmatpush1.bf16.msra.mxu0 0
      %1010 = vmatprep.subr.bf16.mxu0 0
      %1011 = vmatpush1.bf16.msra.mxu0 0
      %1012 = vmatprep.subr.bf16.mxu0 0
      %1013 = vmatpush1.bf16.msra.mxu0 0
      %1014 = vmatprep.subr.bf16.mxu0 0
      %1015 = vmatpush1.bf16.msra.mxu0 0
      %1016 = vmatprep.subr.bf16.mxu0 0
      %1017 = vmatpush1.bf16.msra.mxu0 0
      %1018 = vmatprep.subr.bf16.mxu0 0
      %1019 = vmatpush1.bf16.msra.mxu0 0
      %1020 = vmatprep.subr.bf16.mxu0 0
      %1021 = vmatpush1.bf16.msra.mxu0 0
      %1022 = vmatprep.subr.bf16.mxu0 0
      %1023 = vmatpush1.bf16.msra.mxu0 0
      %1024 = vmatprep.subr.bf16.mxu0 0
      %1025 = vmatpush1.bf16.msra.mxu0 0
      %1026 = vmatprep.subr.bf16.mxu0 0
      %1027 = vmatpush1.bf16.msra.mxu0 0
      %1028 = vmatprep.subr.bf16.mxu0 0
      %1029 = vmatpush1.bf16.msra.mxu0 0
      %1030 = vmatprep.mubr.bf16.mxu0 0
      %1031 = vmatmul.mubr.bf16.gmra.mrb[0].mxu0 %v744
      %v1032 = vpop.f32.mrb[0].mxu0
      %v1033 = vadd.f32 %v969, %v1032
      %v1034 = vpop.f32.mrb[0].mxu0
      %v1035 = vpop.f32.mrb[0].mxu0
      %v1036 = vpop.f32.mrb[0].mxu0
      %1037 = vdwg.mxu0
      %v1042 = vunpack.c.l.b16 %v946
      %v1043 = vunpack.c.l.b16 %v947
      %v1044 = vunpack.c.l.b16 %v948
      %v1045 = vunpack.c.l.b16 %v949
      %v1046 = vpack.c.b16 %v1043, %v1042
      %v1047 = vpack.c.b16 %v1045, %v1044
      %1050 = vmatprep.subr.bf16.mxu0 0
      %1051 = vmatpush1.bf16.msra.mxu0 %v1046
      %1052 = vmatprep.subr.bf16.mxu0 0
      %1053 = vmatpush1.bf16.msra.mxu0 %v1047
      %1054 = vmatprep.subr.bf16.mxu0 0
      %1055 = vmatpush1.bf16.msra.mxu0 0
      %1056 = vmatprep.subr.bf16.mxu0 0
      %1057 = vmatpush1.bf16.msra.mxu0 0
      %1058 = vmatprep.subr.bf16.mxu0 0
      %1059 = vmatpush1.bf16.msra.mxu0 0
      %1060 = vmatprep.subr.bf16.mxu0 0
      %1061 = vmatpush1.bf16.msra.mxu0 0
      %1062 = vmatprep.subr.bf16.mxu0 0
      %1063 = vmatpush1.bf16.msra.mxu0 0
      %1064 = vmatprep.subr.bf16.mxu0 0
      %1065 = vmatpush1.bf16.msra.mxu0 0
      %1066 = vmatprep.subr.bf16.mxu0 0
      %1067 = vmatpush1.bf16.msra.mxu0 0
      %1068 = vmatprep.subr.bf16.mxu0 0
      %1069 = vmatpush1.bf16.msra.mxu0 0
      %1070 = vmatprep.subr.bf16.mxu0 0
      %1071 = vmatpush1.bf16.msra.mxu0 0
      %1072 = vmatprep.subr.bf16.mxu0 0
      %1073 = vmatpush1.bf16.msra.mxu0 0
      %1074 = vmatprep.subr.bf16.mxu0 0
      %1075 = vmatpush1.bf16.msra.mxu0 0
      %1076 = vmatprep.subr.bf16.mxu0 0
      %1077 = vmatpush1.bf16.msra.mxu0 0
      %1078 = vmatprep.subr.bf16.mxu0 0
      %1079 = vmatpush1.bf16.msra.mxu0 0
      %1080 = vmatprep.subr.bf16.mxu0 0
      %1081 = vmatpush1.bf16.msra.mxu0 0
      %1082 = vmatprep.mubr.bf16.mxu0 0
      %1083 = vmatmul.mubr.bf16.gmra.mrb[0].mxu0 %v744
      %v1084 = vpop.f32.mrb[0].mxu0
      %v1085 = vadd.f32 %v973, %v1084
      %v1086 = vpop.f32.mrb[0].mxu0
      %v1087 = vpop.f32.mrb[0].mxu0
      %v1088 = vpop.f32.mrb[0].mxu0
      %1089 = vdwg.mxu0
      %v1094 = vunpack.c.l.b16 %v950
      %v1095 = vunpack.c.l.b16 %v951
      %v1096 = vunpack.c.l.b16 %v952
      %v1097 = vunpack.c.l.b16 %v953
      %v1098 = vpack.c.b16 %v1095, %v1094
      %v1099 = vpack.c.b16 %v1097, %v1096
      %1102 = vmatprep.subr.bf16.mxu0 0
      %1103 = vmatpush1.bf16.msra.mxu0 %v1098
      %1104 = vmatprep.subr.bf16.mxu0 0
      %1105 = vmatpush1.bf16.msra.mxu0 %v1099
      %1106 = vmatprep.subr.bf16.mxu0 0
      %1107 = vmatpush1.bf16.msra.mxu0 0
      %1108 = vmatprep.subr.bf16.mxu0 0
      %1109 = vmatpush1.bf16.msra.mxu0 0
      %1110 = vmatprep.subr.bf16.mxu0 0
      %1111 = vmatpush1.bf16.msra.mxu0 0
      %1112 = vmatprep.subr.bf16.mxu0 0
      %1113 = vmatpush1.bf16.msra.mxu0 0
      %1114 = vmatprep.subr.bf16.mxu0 0
      %1115 = vmatpush1.bf16.msra.mxu0 0
      %1116 = vmatprep.subr.bf16.mxu0 0
      %1117 = vmatpush1.bf16.msra.mxu0 0
      %1118 = vmatprep.subr.bf16.mxu0 0
      %1119 = vmatpush1.bf16.msra.mxu0 0
      %1120 = vmatprep.subr.bf16.mxu0 0
      %1121 = vmatpush1.bf16.msra.mxu0 0
      %1122 = vmatprep.subr.bf16.mxu0 0
      %1123 = vmatpush1.bf16.msra.mxu0 0
      %1124 = vmatprep.subr.bf16.mxu0 0
      %1125 = vmatpush1.bf16.msra.mxu0 0
      %1126 = vmatprep.subr.bf16.mxu0 0
      %1127 = vmatpush1.bf16.msra.mxu0 0
      %1128 = vmatprep.subr.bf16.mxu0 0
      %1129 = vmatpush1.bf16.msra.mxu0 0
      %1130 = vmatprep.subr.bf16.mxu0 0
      %1131 = vmatpush1.bf16.msra.mxu0 0
      %1132 = vmatprep.subr.bf16.mxu0 0
      %1133 = vmatpush1.bf16.msra.mxu0 0
      %1134 = vmatprep.mubr.bf16.mxu0 0
      %1135 = vmatmul.mubr.bf16.gmra.mrb[0].mxu0 %v744
      %v1136 = vpop.f32.mrb[0].mxu0
      %v1137 = vadd.f32 %v977, %v1136
      %v1138 = vpop.f32.mrb[0].mxu0
      %v1139 = vpop.f32.mrb[0].mxu0
      %v1140 = vpop.f32.mrb[0].mxu0
      %1141 = vdwg.mxu0
      %v1146 = vunpack.c.l.b16 %v954
      %v1147 = vunpack.c.l.b16 %v955
      %v1148 = vunpack.c.l.b16 %v956
      %v1149 = vunpack.c.l.b16 %v957
      %v1150 = vpack.c.b16 %v1147, %v1146
      %v1151 = vpack.c.b16 %v1149, %v1148
      %1154 = vmatprep.subr.bf16.mxu0 0
      %1155 = vmatpush1.bf16.msra.mxu0 %v1150
      %1156 = vmatprep.subr.bf16.mxu0 0
      %1157 = vmatpush1.bf16.msra.mxu0 %v1151
      %1158 = vmatprep.subr.bf16.mxu0 0
      %1159 = vmatpush1.bf16.msra.mxu0 0
      %1160 = vmatprep.subr.bf16.mxu0 0
      %1161 = vmatpush1.bf16.msra.mxu0 0
      %1162 = vmatprep.subr.bf16.mxu0 0
      %1163 = vmatpush1.bf16.msra.mxu0 0
      %1164 = vmatprep.subr.bf16.mxu0 0
      %1165 = vmatpush1.bf16.msra.mxu0 0
      %1166 = vmatprep.subr.bf16.mxu0 0
      %1167 = vmatpush1.bf16.msra.mxu0 0
      %1168 = vmatprep.subr.bf16.mxu0 0
      %1169 = vmatpush1.bf16.msra.mxu0 0
      %1170 = vmatprep.subr.bf16.mxu0 0
      %1171 = vmatpush1.bf16.msra.mxu0 0
      %1172 = vmatprep.subr.bf16.mxu0 0
      %1173 = vmatpush1.bf16.msra.mxu0 0
      %1174 = vmatprep.subr.bf16.mxu0 0
      %1175 = vmatpush1.bf16.msra.mxu0 0
      %1176 = vmatprep.subr.bf16.mxu0 0
      %1177 = vmatpush1.bf16.msra.mxu0 0
      %1178 = vmatprep.subr.bf16.mxu0 0
      %1179 = vmatpush1.bf16.msra.mxu0 0
      %1180 = vmatprep.subr.bf16.mxu0 0
      %1181 = vmatpush1.bf16.msra.mxu0 0
      %1182 = vmatprep.subr.bf16.mxu0 0
      %1183 = vmatpush1.bf16.msra.mxu0 0
      %1184 = vmatprep.subr.bf16.mxu0 0
      %1185 = vmatpush1.bf16.msra.mxu0 0
      %1186 = vmatprep.mubr.bf16.mxu0 0
      %1187 = vmatmul.mubr.bf16.gmra.mrb[0].mxu0 %v744
      %v1188 = vpop.f32.mrb[0].mxu0
      %v1189 = vadd.f32 %v981, %v1188
      %v1190 = vpop.f32.mrb[0].mxu0
      %v1191 = vpop.f32.mrb[0].mxu0
      %v1192 = vpop.f32.mrb[0].mxu0
      %1193 = vdwg.mxu0
      %v1194 = vpack.c.bf16 %v526, %v526
      %v1195 = vpack.c.bf16 %v578, %v578
      %v1196 = vpack.c.bf16 %v630, %v630
      %v1197 = vpack.c.bf16 %v682, %v682
      %v1198 = vpack.c.bf16 %v781, %v781
      %v1199 = vpack.c.bf16 %v833, %v833
      %v1200 = vpack.c.bf16 %v885, %v885
      %v1201 = vpack.c.bf16 %v937, %v937
      %vm1202 = vcmask 64512
      %v1204 = vsel %vm1202, %v1194, 0
      %v1207 = vsel %vm1202, %v1198, 0
      %1209 = vmatprep.subr.bf16.mxu0 0
      %1210 = vmatpush1.bf16.xpose.msra.mxu0 %v1207
      %1211 = vmatprep.subr.bf16.mxu0 0
      %1212 = vmatpush1.bf16.xpose.msra.mxu0 0
      %1213 = vmatprep.subr.bf16.mxu0 0
      %1214 = vmatpush1.bf16.xpose.msra.mxu0 0
      %1215 = vmatprep.subr.bf16.mxu0 0
      %1216 = vmatpush1.bf16.xpose.msra.mxu0 0
      %1217 = vmatprep.subr.bf16.mxu0 0
      %1218 = vmatpush1.bf16.xpose.msra.mxu0 0
      %1219 = vmatprep.subr.bf16.mxu0 0
      %1220 = vmatpush1.bf16.xpose.msra.mxu0 0
      %1221 = vmatprep.subr.bf16.mxu0 0
      %1222 = vmatpush1.bf16.xpose.msra.mxu0 0
      %1223 = vmatprep.subr.bf16.mxu0 0
      %1224 = vmatpush1.bf16.xpose.msra.mxu0 0
      %1225 = vmatprep.subr.bf16.mxu0 0
      %1226 = vmatpush1.bf16.xpose.msra.mxu0 0
      %1227 = vmatprep.subr.bf16.mxu0 0
      %1228 = vmatpush1.bf16.xpose.msra.mxu0 0
      %1229 = vmatprep.subr.bf16.mxu0 0
      %1230 = vmatpush1.bf16.xpose.msra.mxu0 0
      %1231 = vmatprep.subr.bf16.mxu0 0
      %1232 = vmatpush1.bf16.xpose.msra.mxu0 0
      %1233 = vmatprep.subr.bf16.mxu0 0
      %1234 = vmatpush1.bf16.xpose.msra.mxu0 0
      %1235 = vmatprep.subr.bf16.mxu0 0
      %1236 = vmatpush1.bf16.xpose.msra.mxu0 0
      %1237 = vmatprep.subr.bf16.mxu0 0
      %1238 = vmatpush1.bf16.xpose.msra.mxu0 0
      %1239 = vmatprep.subr.bf16.mxu0 0
      %1240 = vmatpush1.bf16.xpose.msra.mxu0 0
      %1241 = vmatprep.mubr.bf16.mxu0 0
      %1242 = vmatmul.mubr.bf16.gmra.mrb[0].mxu0 %v1204
      %v1243 = vpop.f32.mrb[0].mxu0
      %v1244 = vadd.f32 0.0, %v1243
      %v1245 = vpop.f32.mrb[0].mxu0
      %v1246 = vpop.f32.mrb[0].mxu0
      %v1247 = vpop.f32.mrb[0].mxu0
      %1248 = vdwg.mxu0
      %v1250 = vsel %vm1202, %v1195, 0
      %v1253 = vsel %vm1202, %v1199, 0
      %1255 = vmatprep.subr.bf16.mxu0 0
      %1256 = vmatpush1.bf16.xpose.msra.mxu0 %v1253
      %1257 = vmatprep.subr.bf16.mxu0 0
      %1258 = vmatpush1.bf16.xpose.msra.mxu0 0
      %1259 = vmatprep.subr.bf16.mxu0 0
      %1260 = vmatpush1.bf16.xpose.msra.mxu0 0
      %1261 = vmatprep.subr.bf16.mxu0 0
      %1262 = vmatpush1.bf16.xpose.msra.mxu0 0
      %1263 = vmatprep.subr.bf16.mxu0 0
      %1264 = vmatpush1.bf16.xpose.msra.mxu0 0
      %1265 = vmatprep.subr.bf16.mxu0 0
      %1266 = vmatpush1.bf16.xpose.msra.mxu0 0
      %1267 = vmatprep.subr.bf16.mxu0 0
      %1268 = vmatpush1.bf16.xpose.msra.mxu0 0
      %1269 = vmatprep.subr.bf16.mxu0 0
      %1270 = vmatpush1.bf16.xpose.msra.mxu0 0
      %1271 = vmatprep.subr.bf16.mxu0 0
      %1272 = vmatpush1.bf16.xpose.msra.mxu0 0
      %1273 = vmatprep.subr.bf16.mxu0 0
      %1274 = vmatpush1.bf16.xpose.msra.mxu0 0
      %1275 = vmatprep.subr.bf16.mxu0 0
      %1276 = vmatpush1.bf16.xpose.msra.mxu0 0
      %1277 = vmatprep.subr.bf16.mxu0 0
      %1278 = vmatpush1.bf16.xpose.msra.mxu0 0
      %1279 = vmatprep.subr.bf16.mxu0 0
      %1280 = vmatpush1.bf16.xpose.msra.mxu0 0
      %1281 = vmatprep.subr.bf16.mxu0 0
      %1282 = vmatpush1.bf16.xpose.msra.mxu0 0
      %1283 = vmatprep.subr.bf16.mxu0 0
      %1284 = vmatpush1.bf16.xpose.msra.mxu0 0
      %1285 = vmatprep.subr.bf16.mxu0 0
      %1286 = vmatpush1.bf16.xpose.msra.mxu0 0
      %1287 = vmatprep.mubr.bf16.mxu0 0
      %1288 = vmatmul.mubr.bf16.gmra.mrb[0].mxu0 %v1250
      %v1289 = vpop.f32.mrb[0].mxu0
      %v1290 = vadd.f32 0.0, %v1289
      %v1291 = vpop.f32.mrb[0].mxu0
      %v1292 = vpop.f32.mrb[0].mxu0
      %v1293 = vpop.f32.mrb[0].mxu0
      %1294 = vdwg.mxu0
      %v1296 = vsel %vm1202, %v1196, 0
      %v1299 = vsel %vm1202, %v1200, 0
      %1301 = vmatprep.subr.bf16.mxu0 0
      %1302 = vmatpush1.bf16.xpose.msra.mxu0 %v1299
      %1303 = vmatprep.subr.bf16.mxu0 0
      %1304 = vmatpush1.bf16.xpose.msra.mxu0 0
      %1305 = vmatprep.subr.bf16.mxu0 0
      %1306 = vmatpush1.bf16.xpose.msra.mxu0 0
      %1307 = vmatprep.subr.bf16.mxu0 0
      %1308 = vmatpush1.bf16.xpose.msra.mxu0 0
      %1309 = vmatprep.subr.bf16.mxu0 0
      %1310 = vmatpush1.bf16.xpose.msra.mxu0 0
      %1311 = vmatprep.subr.bf16.mxu0 0
      %1312 = vmatpush1.bf16.xpose.msra.mxu0 0
      %1313 = vmatprep.subr.bf16.mxu0 0
      %1314 = vmatpush1.bf16.xpose.msra.mxu0 0
      %1315 = vmatprep.subr.bf16.mxu0 0
      %1316 = vmatpush1.bf16.xpose.msra.mxu0 0
      %1317 = vmatprep.subr.bf16.mxu0 0
      %1318 = vmatpush1.bf16.xpose.msra.mxu0 0
      %1319 = vmatprep.subr.bf16.mxu0 0
      %1320 = vmatpush1.bf16.xpose.msra.mxu0 0
      %1321 = vmatprep.subr.bf16.mxu0 0
      %1322 = vmatpush1.bf16.xpose.msra.mxu0 0
      %1323 = vmatprep.subr.bf16.mxu0 0
      %1324 = vmatpush1.bf16.xpose.msra.mxu0 0
      %1325 = vmatprep.subr.bf16.mxu0 0
      %1326 = vmatpush1.bf16.xpose.msra.mxu0 0
      %1327 = vmatprep.subr.bf16.mxu0 0
      %1328 = vmatpush1.bf16.xpose.msra.mxu0 0
      %1329 = vmatprep.subr.bf16.mxu0 0
      %1330 = vmatpush1.bf16.xpose.msra.mxu0 0
      %1331 = vmatprep.subr.bf16.mxu0 0
      %1332 = vmatpush1.bf16.xpose.msra.mxu0 0
      %1333 = vmatprep.mubr.bf16.mxu0 0
      %1334 = vmatmul.mubr.bf16.gmra.mrb[0].mxu0 %v1296
      %v1335 = vpop.f32.mrb[0].mxu0
      %v1336 = vadd.f32 0.0, %v1335
      %v1337 = vpop.f32.mrb[0].mxu0
      %v1338 = vpop.f32.mrb[0].mxu0
      %v1339 = vpop.f32.mrb[0].mxu0
      %1340 = vdwg.mxu0
      %v1342 = vsel %vm1202, %v1197, 0
      %v1345 = vsel %vm1202, %v1201, 0
      %1347 = vmatprep.subr.bf16.mxu0 0
      %1348 = vmatpush1.bf16.xpose.msra.mxu0 %v1345
      %1349 = vmatprep.subr.bf16.mxu0 0
      %1350 = vmatpush1.bf16.xpose.msra.mxu0 0
      %1351 = vmatprep.subr.bf16.mxu0 0
      %1352 = vmatpush1.bf16.xpose.msra.mxu0 0
      %1353 = vmatprep.subr.bf16.mxu0 0
      %1354 = vmatpush1.bf16.xpose.msra.mxu0 0
      %1355 = vmatprep.subr.bf16.mxu0 0
      %1356 = vmatpush1.bf16.xpose.msra.mxu0 0
      %1357 = vmatprep.subr.bf16.mxu0 0
      %1358 = vmatpush1.bf16.xpose.msra.mxu0 0
      %1359 = vmatprep.subr.bf16.mxu0 0
      %1360 = vmatpush1.bf16.xpose.msra.mxu0 0
      %1361 = vmatprep.subr.bf16.mxu0 0
      %1362 = vmatpush1.bf16.xpose.msra.mxu0 0
      %1363 = vmatprep.subr.bf16.mxu0 0
      %1364 = vmatpush1.bf16.xpose.msra.mxu0 0
      %1365 = vmatprep.subr.bf16.mxu0 0
      %1366 = vmatpush1.bf16.xpose.msra.mxu0 0
      %1367 = vmatprep.subr.bf16.mxu0 0
      %1368 = vmatpush1.bf16.xpose.msra.mxu0 0
      %1369 = vmatprep.subr.bf16.mxu0 0
      %1370 = vmatpush1.bf16.xpose.msra.mxu0 0
      %1371 = vmatprep.subr.bf16.mxu0 0
      %1372 = vmatpush1.bf16.xpose.msra.mxu0 0
      %1373 = vmatprep.subr.bf16.mxu0 0
      %1374 = vmatpush1.bf16.xpose.msra.mxu0 0
      %1375 = vmatprep.subr.bf16.mxu0 0
      %1376 = vmatpush1.bf16.xpose.msra.mxu0 0
      %1377 = vmatprep.subr.bf16.mxu0 0
      %1378 = vmatpush1.bf16.xpose.msra.mxu0 0
      %1379 = vmatprep.mubr.bf16.mxu0 0
      %1380 = vmatmul.mubr.bf16.gmra.mrb[0].mxu0 %v1342
      %v1381 = vpop.f32.mrb[0].mxu0
      %v1382 = vadd.f32 0.0, %v1381
      %v1383 = vpop.f32.mrb[0].mxu0
      %v1384 = vpop.f32.mrb[0].mxu0
      %v1385 = vpop.f32.mrb[0].mxu0
      %1386 = vdwg.mxu0
      %v1387 = vmul.f32 %v1244, 0.35355338
      %v1388 = vmul.f32 %v1290, 0.35355338
      %v1389 = vmul.f32 %v1336, 0.35355338
      %v1390 = vmul.f32 %v1382, 0.35355338
      %v1391 = vlaneseq
      %v1392 = vshrl.u32 %v1391, 7
      %v1393 = vlaneseq
      %v1394 = vand.u32 %v1393, 127
      %vm1395 = vcmp.le.s32.totalorder %v1394, %v1392
      %v1396 = vsel %vm1395, %v1387, -1e+09
      %v1397 = vsel %vm1395, %v1388, -1e+09
      %v1398 = vsel %vm1395, %v1389, -1e+09
      %v1399 = vsel %vm1395, %v1390, -1e+09
      %v1400 = vsel %vm1202, %v1396, -inf
      %1401 = vmax.xlane.f32.xlu0 %v1400
      %v1402 = vpop.xlane.xlu0 %1401
      %v1403 = vsel %vm1202, %v1397, -inf
      %1404 = vmax.xlane.f32.xlu0 %v1403
      %v1405 = vpop.xlane.xlu0 %1404
      %v1406 = vsel %vm1202, %v1398, -inf
      %1407 = vmax.xlane.f32.xlu0 %v1406
      %v1408 = vpop.xlane.xlu0 %1407
      %v1409 = vsel %vm1202, %v1399, -inf
      %1410 = vmax.xlane.f32.xlu0 %v1409
      %v1411 = vpop.xlane.xlu0 %1410
      %v1412 = vsub.f32 %v1396, %v1402
      %v1413 = vsub.f32 %v1397, %v1405
      %v1414 = vsub.f32 %v1398, %v1408
      %v1415 = vsub.f32 %v1399, %v1411
      %v1416 = vmul.f32 %v1412, 1.442695
      %v1417 = vpow.pop %v1416
      %v1418 = vmul.f32 %v1413, 1.442695
      %v1419 = vpow.pop %v1418
      %v1420 = vmul.f32 %v1414, 1.442695
      %v1421 = vpow.pop %v1420
      %v1422 = vmul.f32 %v1415, 1.442695
      %v1423 = vpow.pop %v1422
      %v1424 = vsel %vm1202, %v1417, 0.0
      %1425 = vadd.xlane.f32.xlu0 %v1424
      %v1426 = vpop.xlane.xlu0 %1425
      %v1427 = vsel %vm1202, %v1419, 0.0
      %1428 = vadd.xlane.f32.xlu0 %v1427
      %v1429 = vpop.xlane.xlu0 %1428
      %v1430 = vsel %vm1202, %v1421, 0.0
      %1431 = vadd.xlane.f32.xlu0 %v1430
      %v1432 = vpop.xlane.xlu0 %1431
      %v1433 = vsel %vm1202, %v1423, 0.0
      %1434 = vadd.xlane.f32.xlu0 %v1433
      %v1435 = vpop.xlane.xlu0 %1434
      %v1436 = vrcp.pop %v1426
      %v1437 = vrcp.pop %v1429
      %v1438 = vrcp.pop %v1432
      %v1439 = vrcp.pop %v1435
      %v1440 = vmul.f32 %v1417, %v1436
      %v1441 = vmul.f32 %v1419, %v1437
      %v1442 = vmul.f32 %v1421, %v1438
      %v1443 = vmul.f32 %v1423, %v1439
      %v1444 = vpack.c.bf16 %v1440, %v1440
      %v1445 = vpack.c.bf16 %v1441, %v1441
      %v1446 = vpack.c.bf16 %v1442, %v1442
      %v1447 = vpack.c.bf16 %v1443, %v1443
      %v1448 = vpack.c.bf16 %v1033, %v1033
      %v1449 = vpack.c.bf16 %v1085, %v1085
      %v1450 = vpack.c.bf16 %v1137, %v1137
      %v1451 = vpack.c.bf16 %v1189, %v1189
      %v1453 = vsel %vm1202, %v1444, 0
      %vm1455 = vcmask 1043456
      %v1457 = vsel %vm1455, %v1448, 0
      %1459 = vmatprep.subr.bf16.mxu0 0
      %1460 = vmatpush1.bf16.msra.mxu0 %v1457
      %1461 = vmatprep.subr.bf16.mxu0 0
      %1462 = vmatpush1.bf16.msra.mxu0 0
      %1463 = vmatprep.subr.bf16.mxu0 0
      %1464 = vmatpush1.bf16.msra.mxu0 0
      %1465 = vmatprep.subr.bf16.mxu0 0
      %1466 = vmatpush1.bf16.msra.mxu0 0
      %1467 = vmatprep.subr.bf16.mxu0 0
      %1468 = vmatpush1.bf16.msra.mxu0 0
      %1469 = vmatprep.subr.bf16.mxu0 0
      %1470 = vmatpush1.bf16.msra.mxu0 0
      %1471 = vmatprep.subr.bf16.mxu0 0
      %1472 = vmatpush1.bf16.msra.mxu0 0
      %1473 = vmatprep.subr.bf16.mxu0 0
      %1474 = vmatpush1.bf16.msra.mxu0 0
      %1475 = vmatprep.subr.bf16.mxu0 0
      %1476 = vmatpush1.bf16.msra.mxu0 0
      %1477 = vmatprep.subr.bf16.mxu0 0
      %1478 = vmatpush1.bf16.msra.mxu0 0
      %1479 = vmatprep.subr.bf16.mxu0 0
      %1480 = vmatpush1.bf16.msra.mxu0 0
      %1481 = vmatprep.subr.bf16.mxu0 0
      %1482 = vmatpush1.bf16.msra.mxu0 0
      %1483 = vmatprep.subr.bf16.mxu0 0
      %1484 = vmatpush1.bf16.msra.mxu0 0
      %1485 = vmatprep.subr.bf16.mxu0 0
      %1486 = vmatpush1.bf16.msra.mxu0 0
      %1487 = vmatprep.subr.bf16.mxu0 0
      %1488 = vmatpush1.bf16.msra.mxu0 0
      %1489 = vmatprep.subr.bf16.mxu0 0
      %1490 = vmatpush1.bf16.msra.mxu0 0
      %1491 = vmatprep.mubr.bf16.mxu0 0
      %1492 = vmatmul.mubr.bf16.gmra.mrb[0].mxu0 %v1453
      %v1493 = vpop.f32.mrb[0].mxu0
      %v1494 = vadd.f32 0.0, %v1493
      %v1495 = vpop.f32.mrb[0].mxu0
      %v1496 = vpop.f32.mrb[0].mxu0
      %v1497 = vpop.f32.mrb[0].mxu0
      %1498 = vdwg.mxu0
      %v1500 = vsel %vm1202, %v1445, 0
      %v1503 = vsel %vm1455, %v1449, 0
      %1505 = vmatprep.subr.bf16.mxu0 0
      %1506 = vmatpush1.bf16.msra.mxu0 %v1503
      %1507 = vmatprep.subr.bf16.mxu0 0
      %1508 = vmatpush1.bf16.msra.mxu0 0
      %1509 = vmatprep.subr.bf16.mxu0 0
      %1510 = vmatpush1.bf16.msra.mxu0 0
      %1511 = vmatprep.subr.bf16.mxu0 0
      %1512 = vmatpush1.bf16.msra.mxu0 0
      %1513 = vmatprep.subr.bf16.mxu0 0
      %1514 = vmatpush1.bf16.msra.mxu0 0
      %1515 = vmatprep.subr.bf16.mxu0 0
      %1516 = vmatpush1.bf16.msra.mxu0 0
      %1517 = vmatprep.subr.bf16.mxu0 0
      %1518 = vmatpush1.bf16.msra.mxu0 0
      %1519 = vmatprep.subr.bf16.mxu0 0
      %1520 = vmatpush1.bf16.msra.mxu0 0
      %1521 = vmatprep.subr.bf16.mxu0 0
      %1522 = vmatpush1.bf16.msra.mxu0 0
      %1523 = vmatprep.subr.bf16.mxu0 0
      %1524 = vmatpush1.bf16.msra.mxu0 0
      %1525 = vmatprep.subr.bf16.mxu0 0
      %1526 = vmatpush1.bf16.msra.mxu0 0
      %1527 = vmatprep.subr.bf16.mxu0 0
      %1528 = vmatpush1.bf16.msra.mxu0 0
      %1529 = vmatprep.subr.bf16.mxu0 0
      %1530 = vmatpush1.bf16.msra.mxu0 0
      %1531 = vmatprep.subr.bf16.mxu0 0
      %1532 = vmatpush1.bf16.msra.mxu0 0
      %1533 = vmatprep.subr.bf16.mxu0 0
      %1534 = vmatpush1.bf16.msra.mxu0 0
      %1535 = vmatprep.subr.bf16.mxu0 0
      %1536 = vmatpush1.bf16.msra.mxu0 0
      %1537 = vmatprep.mubr.bf16.mxu0 0
      %1538 = vmatmul.mubr.bf16.gmra.mrb[0].mxu0 %v1500
      %v1539 = vpop.f32.mrb[0].mxu0
      %v1540 = vadd.f32 0.0, %v1539
      %v1541 = vpop.f32.mrb[0].mxu0
      %v1542 = vpop.f32.mrb[0].mxu0
      %v1543 = vpop.f32.mrb[0].mxu0
      %1544 = vdwg.mxu0
      %v1546 = vsel %vm1202, %v1446, 0
      %v1549 = vsel %vm1455, %v1450, 0
      %1551 = vmatprep.subr.bf16.mxu0 0
      %1552 = vmatpush1.bf16.msra.mxu0 %v1549
      %1553 = vmatprep.subr.bf16.mxu0 0
      %1554 = vmatpush1.bf16.msra.mxu0 0
      %1555 = vmatprep.subr.bf16.mxu0 0
      %1556 = vmatpush1.bf16.msra.mxu0 0
      %1557 = vmatprep.subr.bf16.mxu0 0
      %1558 = vmatpush1.bf16.msra.mxu0 0
      %1559 = vmatprep.subr.bf16.mxu0 0
      %1560 = vmatpush1.bf16.msra.mxu0 0
      %1561 = vmatprep.subr.bf16.mxu0 0
      %1562 = vmatpush1.bf16.msra.mxu0 0
      %1563 = vmatprep.subr.bf16.mxu0 0
      %1564 = vmatpush1.bf16.msra.mxu0 0
      %1565 = vmatprep.subr.bf16.mxu0 0
      %1566 = vmatpush1.bf16.msra.mxu0 0
      %1567 = vmatprep.subr.bf16.mxu0 0
      %1568 = vmatpush1.bf16.msra.mxu0 0
      %1569 = vmatprep.subr.bf16.mxu0 0
      %1570 = vmatpush1.bf16.msra.mxu0 0
      %1571 = vmatprep.subr.bf16.mxu0 0
      %1572 = vmatpush1.bf16.msra.mxu0 0
      %1573 = vmatprep.subr.bf16.mxu0 0
      %1574 = vmatpush1.bf16.msra.mxu0 0
      %1575 = vmatprep.subr.bf16.mxu0 0
      %1576 = vmatpush1.bf16.msra.mxu0 0
      %1577 = vmatprep.subr.bf16.mxu0 0
      %1578 = vmatpush1.bf16.msra.mxu0 0
      %1579 = vmatprep.subr.bf16.mxu0 0
      %1580 = vmatpush1.bf16.msra.mxu0 0
      %1581 = vmatprep.subr.bf16.mxu0 0
      %1582 = vmatpush1.bf16.msra.mxu0 0
      %1583 = vmatprep.mubr.bf16.mxu0 0
      %1584 = vmatmul.mubr.bf16.gmra.mrb[0].mxu0 %v1546
      %v1585 = vpop.f32.mrb[0].mxu0
      %v1586 = vadd.f32 0.0, %v1585
      %v1587 = vpop.f32.mrb[0].mxu0
      %v1588 = vpop.f32.mrb[0].mxu0
      %v1589 = vpop.f32.mrb[0].mxu0
      %1590 = vdwg.mxu0
      %v1592 = vsel %vm1202, %v1447, 0
      %v1595 = vsel %vm1455, %v1451, 0
      %1597 = vmatprep.subr.bf16.mxu0 0
      %1598 = vmatpush1.bf16.msra.mxu0 %v1595
      %1599 = vmatprep.subr.bf16.mxu0 0
      %1600 = vmatpush1.bf16.msra.mxu0 0
      %1601 = vmatprep.subr.bf16.mxu0 0
      %1602 = vmatpush1.bf16.msra.mxu0 0
      %1603 = vmatprep.subr.bf16.mxu0 0
      %1604 = vmatpush1.bf16.msra.mxu0 0
      %1605 = vmatprep.subr.bf16.mxu0 0
      %1606 = vmatpush1.bf16.msra.mxu0 0
      %1607 = vmatprep.subr.bf16.mxu0 0
      %1608 = vmatpush1.bf16.msra.mxu0 0
      %1609 = vmatprep.subr.bf16.mxu0 0
      %1610 = vmatpush1.bf16.msra.mxu0 0
      %1611 = vmatprep.subr.bf16.mxu0 0
      %1612 = vmatpush1.bf16.msra.mxu0 0
      %1613 = vmatprep.subr.bf16.mxu0 0
      %1614 = vmatpush1.bf16.msra.mxu0 0
      %1615 = vmatprep.subr.bf16.mxu0 0
      %1616 = vmatpush1.bf16.msra.mxu0 0
      %1617 = vmatprep.subr.bf16.mxu0 0
      %1618 = vmatpush1.bf16.msra.mxu0 0
      %1619 = vmatprep.subr.bf16.mxu0 0
      %1620 = vmatpush1.bf16.msra.mxu0 0
      %1621 = vmatprep.subr.bf16.mxu0 0
      %1622 = vmatpush1.bf16.msra.mxu0 0
      %1623 = vmatprep.subr.bf16.mxu0 0
      %1624 = vmatpush1.bf16.msra.mxu0 0
      %1625 = vmatprep.subr.bf16.mxu0 0
      %1626 = vmatpush1.bf16.msra.mxu0 0
      %1627 = vmatprep.subr.bf16.mxu0 0
      %1628 = vmatpush1.bf16.msra.mxu0 0
      %1629 = vmatprep.mubr.bf16.mxu0 0
      %1630 = vmatmul.mubr.bf16.gmra.mrb[0].mxu0 %v1592
      %v1631 = vpop.f32.mrb[0].mxu0
      %v1632 = vadd.f32 0.0, %v1631
      %v1633 = vpop.f32.mrb[0].mxu0
      %v1634 = vpop.f32.mrb[0].mxu0
      %v1635 = vpop.f32.mrb[0].mxu0
      %1636 = vdwg.mxu0
      %v1637 = vpack.c.bf16 %v1494, %v1494
      %v1638 = vpack.c.bf16 %v1540, %v1540
      %v1639 = vpack.c.bf16 %v1586, %v1586
      %v1640 = vpack.c.bf16 %v1632, %v1632
      %v1641 = vld [vmem:[%s8] sm:$0xf]
      %v1642 = vld [vmem:[%s8 + $0x4] sm:$0xf]
      %v1643 = vld [vmem:[%s8 + $0x8] sm:$0xf]
      %v1644 = vld [vmem:[%s8 + $0xc] sm:$0xf]
      %v1646 = vsel %vm1202, %v1637, 0
      %v1649 = vsel %vm1455, %v1641, 0
      %1651 = vmatprep.subr.bf16.mxu0 0
      %1652 = vmatpush1.bf16.msra.mxu0 %v1649
      %1653 = vmatprep.subr.bf16.mxu0 0
      %1654 = vmatpush1.bf16.msra.mxu0 0
      %1655 = vmatprep.subr.bf16.mxu0 0
      %1656 = vmatpush1.bf16.msra.mxu0 0
      %1657 = vmatprep.subr.bf16.mxu0 0
      %1658 = vmatpush1.bf16.msra.mxu0 0
      %1659 = vmatprep.subr.bf16.mxu0 0
      %1660 = vmatpush1.bf16.msra.mxu0 0
      %1661 = vmatprep.subr.bf16.mxu0 0
      %1662 = vmatpush1.bf16.msra.mxu0 0
      %1663 = vmatprep.subr.bf16.mxu0 0
      %1664 = vmatpush1.bf16.msra.mxu0 0
      %1665 = vmatprep.subr.bf16.mxu0 0
      %1666 = vmatpush1.bf16.msra.mxu0 0
      %1667 = vmatprep.subr.bf16.mxu0 0
      %1668 = vmatpush1.bf16.msra.mxu0 0
      %1669 = vmatprep.subr.bf16.mxu0 0
      %1670 = vmatpush1.bf16.msra.mxu0 0
      %1671 = vmatprep.subr.bf16.mxu0 0
      %1672 = vmatpush1.bf16.msra.mxu0 0
      %1673 = vmatprep.subr.bf16.mxu0 0
      %1674 = vmatpush1.bf16.msra.mxu0 0
      %1675 = vmatprep.subr.bf16.mxu0 0
      %1676 = vmatpush1.bf16.msra.mxu0 0
      %1677 = vmatprep.subr.bf16.mxu0 0
      %1678 = vmatpush1.bf16.msra.mxu0 0
      %1679 = vmatprep.subr.bf16.mxu0 0
      %1680 = vmatpush1.bf16.msra.mxu0 0
      %1681 = vmatprep.subr.bf16.mxu0 0
      %1682 = vmatpush1.bf16.msra.mxu0 0
      %1683 = vmatprep.mubr.bf16.mxu0 0
      %1684 = vmatmul.mubr.bf16.gmra.mrb[0].mxu0 %v1646
      %v1685 = vpop.f32.mrb[0].mxu0
      %v1686 = vadd.f32 0.0, %v1685
      %v1687 = vpop.f32.mrb[0].mxu0
      %v1688 = vpop.f32.mrb[0].mxu0
      %v1689 = vpop.f32.mrb[0].mxu0
      %1690 = vdwg.mxu0
      %v1692 = vsel %vm1202, %v1638, 0
      %v1695 = vsel %vm1455, %v1642, 0
      %1697 = vmatprep.subr.bf16.mxu0 0
      %1698 = vmatpush1.bf16.msra.mxu0 %v1695
      %1699 = vmatprep.subr.bf16.mxu0 0
      %1700 = vmatpush1.bf16.msra.mxu0 0
      %1701 = vmatprep.subr.bf16.mxu0 0
      %1702 = vmatpush1.bf16.msra.mxu0 0
      %1703 = vmatprep.subr.bf16.mxu0 0
      %1704 = vmatpush1.bf16.msra.mxu0 0
      %1705 = vmatprep.subr.bf16.mxu0 0
      %1706 = vmatpush1.bf16.msra.mxu0 0
      %1707 = vmatprep.subr.bf16.mxu0 0
      %1708 = vmatpush1.bf16.msra.mxu0 0
      %1709 = vmatprep.subr.bf16.mxu0 0
      %1710 = vmatpush1.bf16.msra.mxu0 0
      %1711 = vmatprep.subr.bf16.mxu0 0
      %1712 = vmatpush1.bf16.msra.mxu0 0
      %1713 = vmatprep.subr.bf16.mxu0 0
      %1714 = vmatpush1.bf16.msra.mxu0 0
      %1715 = vmatprep.subr.bf16.mxu0 0
      %1716 = vmatpush1.bf16.msra.mxu0 0
      %1717 = vmatprep.subr.bf16.mxu0 0
      %1718 = vmatpush1.bf16.msra.mxu0 0
      %1719 = vmatprep.subr.bf16.mxu0 0
      %1720 = vmatpush1.bf16.msra.mxu0 0
      %1721 = vmatprep.subr.bf16.mxu0 0
      %1722 = vmatpush1.bf16.msra.mxu0 0
      %1723 = vmatprep.subr.bf16.mxu0 0
      %1724 = vmatpush1.bf16.msra.mxu0 0
      %1725 = vmatprep.subr.bf16.mxu0 0
      %1726 = vmatpush1.bf16.msra.mxu0 0
      %1727 = vmatprep.subr.bf16.mxu0 0
      %1728 = vmatpush1.bf16.msra.mxu0 0
      %1729 = vmatprep.mubr.bf16.mxu0 0
      %1730 = vmatmul.mubr.bf16.gmra.mrb[0].mxu0 %v1692
      %v1731 = vpop.f32.mrb[0].mxu0
      %v1732 = vadd.f32 0.0, %v1731
      %v1733 = vpop.f32.mrb[0].mxu0
      %v1734 = vpop.f32.mrb[0].mxu0
      %v1735 = vpop.f32.mrb[0].mxu0
      %1736 = vdwg.mxu0
      %v1738 = vsel %vm1202, %v1639, 0
      %v1741 = vsel %vm1455, %v1643, 0
      %1743 = vmatprep.subr.bf16.mxu0 0
      %1744 = vmatpush1.bf16.msra.mxu0 %v1741
      %1745 = vmatprep.subr.bf16.mxu0 0
      %1746 = vmatpush1.bf16.msra.mxu0 0
      %1747 = vmatprep.subr.bf16.mxu0 0
      %1748 = vmatpush1.bf16.msra.mxu0 0
      %1749 = vmatprep.subr.bf16.mxu0 0
      %1750 = vmatpush1.bf16.msra.mxu0 0
      %1751 = vmatprep.subr.bf16.mxu0 0
      %1752 = vmatpush1.bf16.msra.mxu0 0
      %1753 = vmatprep.subr.bf16.mxu0 0
      %1754 = vmatpush1.bf16.msra.mxu0 0
      %1755 = vmatprep.subr.bf16.mxu0 0
      %1756 = vmatpush1.bf16.msra.mxu0 0
      %1757 = vmatprep.subr.bf16.mxu0 0
      %1758 = vmatpush1.bf16.msra.mxu0 0
      %1759 = vmatprep.subr.bf16.mxu0 0
      %1760 = vmatpush1.bf16.msra.mxu0 0
      %1761 = vmatprep.subr.bf16.mxu0 0
      %1762 = vmatpush1.bf16.msra.mxu0 0
      %1763 = vmatprep.subr.bf16.mxu0 0
      %1764 = vmatpush1.bf16.msra.mxu0 0
      %1765 = vmatprep.subr.bf16.mxu0 0
      %1766 = vmatpush1.bf16.msra.mxu0 0
      %1767 = vmatprep.subr.bf16.mxu0 0
      %1768 = vmatpush1.bf16.msra.mxu0 0
      %1769 = vmatprep.subr.bf16.mxu0 0
      %1770 = vmatpush1.bf16.msra.mxu0 0
      %1771 = vmatprep.subr.bf16.mxu0 0
      %1772 = vmatpush1.bf16.msra.mxu0 0
      %1773 = vmatprep.subr.bf16.mxu0 0
      %1774 = vmatpush1.bf16.msra.mxu0 0
      %1775 = vmatprep.mubr.bf16.mxu0 0
      %1776 = vmatmul.mubr.bf16.gmra.mrb[0].mxu0 %v1738
      %v1777 = vpop.f32.mrb[0].mxu0
      %v1778 = vadd.f32 0.0, %v1777
      %v1779 = vpop.f32.mrb[0].mxu0
      %v1780 = vpop.f32.mrb[0].mxu0
      %v1781 = vpop.f32.mrb[0].mxu0
      %1782 = vdwg.mxu0
      %v1784 = vsel %vm1202, %v1640, 0
      %v1787 = vsel %vm1455, %v1644, 0
      %1789 = vmatprep.subr.bf16.mxu0 0
      %1790 = vmatpush1.bf16.msra.mxu0 %v1787
      %1791 = vmatprep.subr.bf16.mxu0 0
      %1792 = vmatpush1.bf16.msra.mxu0 0
      %1793 = vmatprep.subr.bf16.mxu0 0
      %1794 = vmatpush1.bf16.msra.mxu0 0
      %1795 = vmatprep.subr.bf16.mxu0 0
      %1796 = vmatpush1.bf16.msra.mxu0 0
      %1797 = vmatprep.subr.bf16.mxu0 0
      %1798 = vmatpush1.bf16.msra.mxu0 0
      %1799 = vmatprep.subr.bf16.mxu0 0
      %1800 = vmatpush1.bf16.msra.mxu0 0
      %1801 = vmatprep.subr.bf16.mxu0 0
      %1802 = vmatpush1.bf16.msra.mxu0 0
      %1803 = vmatprep.subr.bf16.mxu0 0
      %1804 = vmatpush1.bf16.msra.mxu0 0
      %1805 = vmatprep.subr.bf16.mxu0 0
      %1806 = vmatpush1.bf16.msra.mxu0 0
      %1807 = vmatprep.subr.bf16.mxu0 0
      %1808 = vmatpush1.bf16.msra.mxu0 0
      %1809 = vmatprep.subr.bf16.mxu0 0
      %1810 = vmatpush1.bf16.msra.mxu0 0
      %1811 = vmatprep.subr.bf16.mxu0 0
      %1812 = vmatpush1.bf16.msra.mxu0 0
      %1813 = vmatprep.subr.bf16.mxu0 0
      %1814 = vmatpush1.bf16.msra.mxu0 0
      %1815 = vmatprep.subr.bf16.mxu0 0
      %1816 = vmatpush1.bf16.msra.mxu0 0
      %1817 = vmatprep.subr.bf16.mxu0 0
      %1818 = vmatpush1.bf16.msra.mxu0 0
      %1819 = vmatprep.subr.bf16.mxu0 0
      %1820 = vmatpush1.bf16.msra.mxu0 0
      %1821 = vmatprep.mubr.bf16.mxu0 0
      %1822 = vmatmul.mubr.bf16.gmra.mrb[0].mxu0 %v1784
      %v1823 = vpop.f32.mrb[0].mxu0
      %v1824 = vadd.f32 0.0, %v1823
      %v1825 = vpop.f32.mrb[0].mxu0
      %v1826 = vpop.f32.mrb[0].mxu0
      %v1827 = vpop.f32.mrb[0].mxu0
      %1828 = vdwg.mxu0
      %v1829 = vsel %vm487, %v1686, 0.0
      %v1830 = vsel %vm487, %v1732, 0.0
      %v1831 = vadd.f32 %v1829, %v1830
      %v1832 = vsel %vm487, %v1778, 0.0
      %v1833 = vadd.f32 %v1831, %v1832
      %v1834 = vsel %vm487, %v1824, 0.0
      %v1835 = vadd.f32 %v1833, %v1834
      %v1836 = vld [vmem:[%s9] sm:$0x1]
      %v1838 = vlaneseq
      %v1839 = vshrl.u32 %v1838, 7
      %v1840 = vsub.s32 0, %v1839
      %v1841 = vrot.slane %v1836, %v1840
      %v1843 = vadd.f32 %v1835, %v1841
      %v1844 = vadd.f32 %v1843, %v427
      %v1845 = vld [vmem:[%s10] sm:$0x1]
      %v1846 = vld [vmem:[%s11] sm:$0x1]
      %v1847 = vsel %vm487, %v1844, 0.0
      %1848 = vadd.xlane.f32.xlu0 %v1847
      %v1849 = vpop.xlane.xlu0 %1848
      %v1850 = vrcp.pop 32.0
      %v1851 = vmul.f32 %v1849, %v1850
      %v1852 = vsub.f32 %v1844, %v1851
      %v1853 = vmul.f32 %v1852, %v1852
      %v1854 = vsel %vm487, %v1853, 0.0
      %1855 = vadd.xlane.f32.xlu0 %v1854
      %v1856 = vpop.xlane.xlu0 %1855
      %v1857 = vmul.f32 %v1856, %v1850
      %v1858 = vadd.f32 %v1857, 1e-05
      %v1859 = vrsqrt.pop %v1858
      %v1860 = vmul.f32 %v1852, %v1859
      %v1862 = vlaneseq
      %v1863 = vshrl.u32 %v1862, 7
      %v1864 = vsub.s32 0, %v1863
      %v1865 = vrot.slane %v1845, %v1864
      %v1867 = vmul.f32 %v1860, %v1865
      %v1869 = vlaneseq
      %v1870 = vshrl.u32 %v1869, 7
      %v1871 = vsub.s32 0, %v1870
      %v1872 = vrot.slane %v1846, %v1871
      %v1874 = vadd.f32 %v1867, %v1872
      %1875 = vst.msk [vmem:[%s425] sm:$0xff] %vm487, %v1874
      %p1876 = scmp.lt.s32.totalorder %s23, 1
      %s1877 = scalar_select %p1876, %s23, 1
      %s1878 = smul.addr %s1877, 8
      %s1879 = scalar_lea.vmem %s12, %s1878
      // Predicated region
      $region69: #{transformer_forward.9} parent=67 // pred_check
        %p1880 = pneg %p303
      $region70: #{transformer_forward.9} parent=67 // pred_check_branch
        %1882 = sbr.rel (%p1880) target = $region72
      $region71: #{transformer_forward.9} parent=67 // pred_region
        _
      $region72: #{transformer_forward.9} parent=67 // pred_fallthru
        _
    $region68: #{transformer_forward.9} parent=5 // pred_fallthru
      _
    %p1883 = scmp.le.s32.totalorder 2, %s18
    // Predicated region
    $region73: #{transformer_forward.9} parent=5 // pred_check
      %p1884 = pneg %p1883
    $region74: #{transformer_forward.9} parent=5 // pred_check_branch
      %1886 = sbr.rel (%p1884) target = $region76
    $region75: #{transformer_forward.9} parent=5 // pred_region
      %s1887 = ssub.s32 %s18, 2
      // Predicated region
      $region77: #{transformer_forward.9} parent=75 // pred_check
        %p1888 = pneg %p309
      $region78: #{transformer_forward.9} parent=75 // pred_check_branch
        %1890 = sbr.rel (%p1888) target = $region80
      $region79: #{transformer_forward.9} parent=75 // pred_region
        %p1891 = scmp.lt.s32.totalorder %s24, 1
        %s1892 = scalar_select %p1891, %s24, 1
        %s1893 = smul.addr %s1892, 8
        %s1894 = scalar_lea.vmem %s12, %s1893
      $region80: #{transformer_forward.9} parent=75 // pred_fallthru
        _
    $region76: #{transformer_forward.9} parent=5 // pred_fallthru
      _
  $region6: #{transformer_forward.9} parent=0 // loop_footer
    %s22 = sadd.s32 1, %s18
  $region7: #{transformer_forward.9} parent=0 // loop_footer_branch
    %17 = sbr.rel target = $region3
  $region8: #{transformer_forward.9} parent=0 // loop_exit
    _

// kernel: transformer_forward.7
$region0: #{transformer_forward.7}
  #allocation0 [shape = 'u32[]', space=smem, size = 0x4, offset = 0x4, fixed_abs, tag = 'smem constant byte address 0x4 - core index']
  #allocation1 [shape = 'u32[144,128]{1,0:T(1,128)}', space=vmem, size = 0x12000, scoped, tag = 'internal scratch']
  %s0 = inlined_call_operand.vmem [shape: f32[2,8,32], index: 0, kind: input, shape index: {}, may-alias: {0,1}]
  %s1 = inlined_call_operand.vmem [shape: f32[2,8,32], index: 1, kind: input, shape index: {}, may-alias: {0,1}]
  %s2 = inlined_call_operand.vmem [shape: bf16[4,32,8], index: 2, kind: input, shape index: {}]
  %s3 = inlined_call_operand.vmem [shape: f32[4,1,8], index: 3, kind: input, shape index: {}]
  %s4 = inlined_call_operand.vmem [shape: bf16[4,32,8], index: 4, kind: input, shape index: {}]
  %s5 = inlined_call_operand.vmem [shape: f32[4,1,8], index: 5, kind: input, shape index: {}]
  %s6 = inlined_call_operand.vmem [shape: bf16[4,32,8], index: 6, kind: input, shape index: {}]
  %s7 = inlined_call_operand.vmem [shape: f32[4,1,8], index: 7, kind: input, shape index: {}]
  %s8 = inlined_call_operand.vmem [shape: bf16[4,8,32], index: 8, kind: input, shape index: {}]
  %s9 = inlined_call_operand.vmem [shape: f32[1,32], index: 9, kind: input, shape index: {}]
  %s10 = inlined_call_operand.vmem [shape: f32[1,32], index: 10, kind: input, shape index: {}]
  %s11 = inlined_call_operand.vmem [shape: f32[1,32], index: 11, kind: input, shape index: {}]
  %s12 = inlined_call_operand.vmem [shape: bf16[32,128], index: 12, kind: input, shape index: {}]
  %s13 = inlined_call_operand.vmem [shape: f32[1,128], index: 13, kind: input, shape index: {}]
  %s14 = inlined_call_operand.vmem [shape: bf16[128,32], index: 14, kind: input, shape index: {}]
  %s15 = inlined_call_operand.vmem [shape: f32[1,32], index: 15, kind: input, shape index: {}]
  %s16 = inlined_call_operand.vmem [shape: f32[1,32], index: 16, kind: input, shape index: {}]
  %s17 = inlined_call_operand.vmem [shape: f32[1,32], index: 17, kind: input, shape index: {}]
  %s18 = inlined_call_operand.vmem [shape: f32[2,8,32], index: 18, kind: output, shape index: {}]
  %s19 = sld [smem:[#allocation0]]
  $region105: #{transformer_forward.7} parent=0
    _
  %s21 = ssub.s32 1, %s19
  %s22 = scalar_select 0, %s21, %s19
  loop: start=0, step=1, limit=4
  $region2: #{transformer_forward.7} parent=0 // loop_pre_header
    _
  $region3: #{transformer_forward.7} parent=0 // loop_header
    %s24 = sphi 0, %s28
    %p25 = scmp.ge.s32.totalorder %s24, 4
    %s34 = sphi 0, %s36
    %s37 = sphi 0, %s34
    %s38 = sphi 0, %s37
    %s54 = sphi 0, %s38
    %s60 = sphi 0, %s62
    %s63 = sphi 0, %s60
    %s64 = sphi 0, %s63
    %s80 = sphi 0, %s64
    %s84 = sphi 0, %s84
    %s86 = sphi 0, %s84
    %s87 = sphi 0, %s86
    %s101 = sphi 0, %s87
    %s105 = sphi 0, %s105
    %s107 = sphi 0, %s105
    %s108 = sphi 0, %s107
    %s122 = sphi 0, %s108
    %s126 = sphi 0, %s126
    %s128 = sphi 0, %s126
    %s129 = sphi 0, %s128
    %s143 = sphi 0, %s129
    %s147 = sphi 0, %s147
    %s149 = sphi 0, %s147
    %s150 = sphi 0, %s149
    %s164 = sphi 0, %s150
    %s168 = sphi 0, %s168
    %s170 = sphi 0, %s168
    %s171 = sphi 0, %s170
    %s185 = sphi 0, %s171
    %s189 = sphi 0, %s189
    %s191 = sphi 0, %s189
    %s192 = sphi 0, %s191
    %s206 = sphi 0, %s192
    %s210 = sphi 0, %s210
    %s212 = sphi 0, %s210
    %s213 = sphi 0, %s212
    %s227 = sphi 0, %s213
    %s231 = sphi 0, %s231
    %s233 = sphi 0, %s231
    %s234 = sphi 0, %s233
    %s248 = sphi 0, %s234
    %s252 = sphi 0, %s252
    %s254 = sphi 0, %s252
    %s255 = sphi 0, %s254
    %s269 = sphi 0, %s255
    %s273 = sphi 0, %s273
    %s275 = sphi 0, %s273
    %s276 = sphi 0, %s275
    %s290 = sphi 0, %s276
    %s294 = sphi 0, %s294
    %s296 = sphi 0, %s294
    %s297 = sphi 0, %s296
    %s311 = sphi 0, %s297
    %s315 = sphi 0, %s315
    %s317 = sphi 0, %s315
    %s318 = sphi 0, %s317
    %s332 = sphi 0, %s318
    %s336 = sphi 0, %s336
    %s338 = sphi 0, %s336
    %s339 = sphi 0, %s338
    %s353 = sphi 0, %s339
    %s357 = sphi 0, %s357
    %s359 = sphi 0, %s357
    %s360 = sphi 0, %s359
    %s374 = sphi 0, %s360
    %s378 = sphi 0, %s378
    %s380 = sphi 0, %s378
    %s381 = sphi 0, %s380
    %s395 = sphi 0, %s381
    %s399 = sphi 0, %s399
    %s401 = sphi 0, %s399
    %s402 = sphi 0, %s401
    %s416 = sphi 0, %s402
    %s422 = sphi 0, %s424
    %s425 = sphi 0, %s422
    %s426 = sphi 0, %s425
    %s442 = sphi 0, %s426
  $region4: #{transformer_forward.7} parent=0 // loop_header_branch
    %27 = sbr.rel (%p25) target = $region8
  $region5: #{transformer_forward.7} parent=0 // loop_body
    %s29 = ssub.s32 %s24, 1
    %s30 = ssub.s32 %s24, 2
    %s31 = sadd.s32 %s24, 1
    %s32 = ssub.s32 %s24, %s31
    %p33 = scmp.eq.s32.totalorder %s32, 0
    %s35 = sadd.s32 %s34, 1
    %s36 = scalar_select %p33, %s34, %s35
    %p39 = pneg %p33
    %p40 = scmp.eq.s32.totalorder %s24, 1
    %p41 = por %p39, %p40
    %p42 = scmp.ne.s32.totalorder %s34, %s37
    %p43 = scmp.eq.s32.totalorder %s24, 0
    %p44 = por %p42, %p43
    %p45 = scmp.ne.s32.totalorder %s34, %s37
    %p46 = scmp.eq.s32.totalorder %s29, 1
    %p47 = por %p45, %p46
    %p48 = scmp.ne.s32.totalorder %s37, %s38
    %p49 = scmp.eq.s32.totalorder %s29, 0
    %p50 = por %p48, %p49
    %p51 = scmp.ne.s32.totalorder %s37, %s38
    %p52 = scmp.eq.s32.totalorder %s30, 1
    %p53 = por %p51, %p52
    %p55 = scmp.ne.s32.totalorder %s38, %s54
    %p56 = scmp.eq.s32.totalorder %s30, 0
    %p57 = por %p55, %p56
    %s58 = ssub.s32 %s24, %s31
    %p59 = scmp.eq.s32.totalorder %s58, 0
    %s61 = sadd.s32 %s60, 1
    %s62 = scalar_select %p59, %s60, %s61
    %p65 = pneg %p59
    %p66 = scmp.eq.s32.totalorder %s24, 1
    %p67 = por %p65, %p66
    %p68 = scmp.ne.s32.totalorder %s60, %s63
    %p69 = scmp.eq.s32.totalorder %s24, 0
    %p70 = por %p68, %p69
    %p71 = scmp.ne.s32.totalorder %s60, %s63
    %p72 = scmp.eq.s32.totalorder %s29, 1
    %p73 = por %p71, %p72
    %p74 = scmp.ne.s32.totalorder %s63, %s64
    %p75 = scmp.eq.s32.totalorder %s29, 0
    %p76 = por %p74, %p75
    %p77 = scmp.ne.s32.totalorder %s63, %s64
    %p78 = scmp.eq.s32.totalorder %s30, 1
    %p79 = por %p77, %p78
    %p81 = scmp.ne.s32.totalorder %s64, %s80
    %p82 = scmp.eq.s32.totalorder %s30, 0
    %p83 = por %p81, %p82
    %s85 = sadd.s32 %s84, 1
    %p88 = scmp.eq.s32.totalorder %s24, 1
    %p89 = scmp.ne.s32.totalorder %s84, %s86
    %p90 = scmp.eq.s32.totalorder %s24, 0
    %p91 = por %p89, %p90
    %p92 = scmp.ne.s32.totalorder %s84, %s86
    %p93 = scmp.eq.s32.totalorder %s29, 1
    %p94 = por %p92, %p93
    %p95 = scmp.ne.s32.totalorder %s86, %s87
    %p96 = scmp.eq.s32.totalorder %s29, 0
    %p97 = por %p95, %p96
    %p98 = scmp.ne.s32.totalorder %s86, %s87
    %p99 = scmp.eq.s32.totalorder %s30, 1
    %p100 = por %p98, %p99
    %p102 = scmp.ne.s32.totalorder %s87, %s101
    %p103 = scmp.eq.s32.totalorder %s30, 0
    %p104 = por %p102, %p103
    %s106 = sadd.s32 %s105, 1
    %p109 = scmp.eq.s32.totalorder %s24, 1
    %p110 = scmp.ne.s32.totalorder %s105, %s107
    %p111 = scmp.eq.s32.totalorder %s24, 0
    %p112 = por %p110, %p111
    %p113 = scmp.ne.s32.totalorder %s105, %s107
    %p114 = scmp.eq.s32.totalorder %s29, 1
    %p115 = por %p113, %p114
    %p116 = scmp.ne.s32.totalorder %s107, %s108
    %p117 = scmp.eq.s32.totalorder %s29, 0
    %p118 = por %p116, %p117
    %p119 = scmp.ne.s32.totalorder %s107, %s108
    %p120 = scmp.eq.s32.totalorder %s30, 1
    %p121 = por %p119, %p120
    %p123 = scmp.ne.s32.totalorder %s108, %s122
    %p124 = scmp.eq.s32.totalorder %s30, 0
    %p125 = por %p123, %p124
    %s127 = sadd.s32 %s126, 1
    %p130 = scmp.eq.s32.totalorder %s24, 1
    %p131 = scmp.ne.s32.totalorder %s126, %s128
    %p132 = scmp.eq.s32.totalorder %s24, 0
    %p133 = por %p131, %p132
    %p134 = scmp.ne.s32.totalorder %s126, %s128
    %p135 = scmp.eq.s32.totalorder %s29, 1
    %p136 = por %p134, %p135
    %p137 = scmp.ne.s32.totalorder %s128, %s129
    %p138 = scmp.eq.s32.totalorder %s29, 0
    %p139 = por %p137, %p138
    %p140 = scmp.ne.s32.totalorder %s128, %s129
    %p141 = scmp.eq.s32.totalorder %s30, 1
    %p142 = por %p140, %p141
    %p144 = scmp.ne.s32.totalorder %s129, %s143
    %p145 = scmp.eq.s32.totalorder %s30, 0
    %p146 = por %p144, %p145
    %s148 = sadd.s32 %s147, 1
    %p151 = scmp.eq.s32.totalorder %s24, 1
    %p152 = scmp.ne.s32.totalorder %s147, %s149
    %p153 = scmp.eq.s32.totalorder %s24, 0
    %p154 = por %p152, %p153
    %p155 = scmp.ne.s32.totalorder %s147, %s149
    %p156 = scmp.eq.s32.totalorder %s29, 1
    %p157 = por %p155, %p156
    %p158 = scmp.ne.s32.totalorder %s149, %s150
    %p159 = scmp.eq.s32.totalorder %s29, 0
    %p160 = por %p158, %p159
    %p161 = scmp.ne.s32.totalorder %s149, %s150
    %p162 = scmp.eq.s32.totalorder %s30, 1
    %p163 = por %p161, %p162
    %p165 = scmp.ne.s32.totalorder %s150, %s164
    %p166 = scmp.eq.s32.totalorder %s30, 0
    %p167 = por %p165, %p166
    %s169 = sadd.s32 %s168, 1
    %p172 = scmp.eq.s32.totalorder %s24, 1
    %p173 = scmp.ne.s32.totalorder %s168, %s170
    %p174 = scmp.eq.s32.totalorder %s24, 0
    %p175 = por %p173, %p174
    %p176 = scmp.ne.s32.totalorder %s168, %s170
    %p177 = scmp.eq.s32.totalorder %s29, 1
    %p178 = por %p176, %p177
    %p179 = scmp.ne.s32.totalorder %s170, %s171
    %p180 = scmp.eq.s32.totalorder %s29, 0
    %p181 = por %p179, %p180
    %p182 = scmp.ne.s32.totalorder %s170, %s171
    %p183 = scmp.eq.s32.totalorder %s30, 1
    %p184 = por %p182, %p183
    %p186 = scmp.ne.s32.totalorder %s171, %s185
    %p187 = scmp.eq.s32.totalorder %s30, 0
    %p188 = por %p186, %p187
    %s190 = sadd.s32 %s189, 1
    %p193 = scmp.eq.s32.totalorder %s24, 1
    %p194 = scmp.ne.s32.totalorder %s189, %s191
    %p195 = scmp.eq.s32.totalorder %s24, 0
    %p196 = por %p194, %p195
    %p197 = scmp.ne.s32.totalorder %s189, %s191
    %p198 = scmp.eq.s32.totalorder %s29, 1
    %p199 = por %p197, %p198
    %p200 = scmp.ne.s32.totalorder %s191, %s192
    %p201 = scmp.eq.s32.totalorder %s29, 0
    %p202 = por %p200, %p201
    %p203 = scmp.ne.s32.totalorder %s191, %s192
    %p204 = scmp.eq.s32.totalorder %s30, 1
    %p205 = por %p203, %p204
    %p207 = scmp.ne.s32.totalorder %s192, %s206
    %p208 = scmp.eq.s32.totalorder %s30, 0
    %p209 = por %p207, %p208
    %s211 = sadd.s32 %s210, 1
    %p214 = scmp.eq.s32.totalorder %s24, 1
    %p215 = scmp.ne.s32.totalorder %s210, %s212
    %p216 = scmp.eq.s32.totalorder %s24, 0
    %p217 = por %p215, %p216
    %p218 = scmp.ne.s32.totalorder %s210, %s212
    %p219 = scmp.eq.s32.totalorder %s29, 1
    %p220 = por %p218, %p219
    %p221 = scmp.ne.s32.totalorder %s212, %s213
    %p222 = scmp.eq.s32.totalorder %s29, 0
    %p223 = por %p221, %p222
    %p224 = scmp.ne.s32.totalorder %s212, %s213
    %p225 = scmp.eq.s32.totalorder %s30, 1
    %p226 = por %p224, %p225
    %p228 = scmp.ne.s32.totalorder %s213, %s227
    %p229 = scmp.eq.s32.totalorder %s30, 0
    %p230 = por %p228, %p229
    %s232 = sadd.s32 %s231, 1
    %p235 = scmp.eq.s32.totalorder %s24, 1
    %p236 = scmp.ne.s32.totalorder %s231, %s233
    %p237 = scmp.eq.s32.totalorder %s24, 0
    %p238 = por %p236, %p237
    %p239 = scmp.ne.s32.totalorder %s231, %s233
    %p240 = scmp.eq.s32.totalorder %s29, 1
    %p241 = por %p239, %p240
    %p242 = scmp.ne.s32.totalorder %s233, %s234
    %p243 = scmp.eq.s32.totalorder %s29, 0
    %p244 = por %p242, %p243
    %p245 = scmp.ne.s32.totalorder %s233, %s234
    %p246 = scmp.eq.s32.totalorder %s30, 1
    %p247 = por %p245, %p246
    %p249 = scmp.ne.s32.totalorder %s234, %s248
    %p250 = scmp.eq.s32.totalorder %s30, 0
    %p251 = por %p249, %p250
    %s253 = sadd.s32 %s252, 1
    %p256 = scmp.eq.s32.totalorder %s24, 1
    %p257 = scmp.ne.s32.totalorder %s252, %s254
    %p258 = scmp.eq.s32.totalorder %s24, 0
    %p259 = por %p257, %p258
    %p260 = scmp.ne.s32.totalorder %s252, %s254
    %p261 = scmp.eq.s32.totalorder %s29, 1
    %p262 = por %p260, %p261
    %p263 = scmp.ne.s32.totalorder %s254, %s255
    %p264 = scmp.eq.s32.totalorder %s29, 0
    %p265 = por %p263, %p264
    %p266 = scmp.ne.s32.totalorder %s254, %s255
    %p267 = scmp.eq.s32.totalorder %s30, 1
    %p268 = por %p266, %p267
    %p270 = scmp.ne.s32.totalorder %s255, %s269
    %p271 = scmp.eq.s32.totalorder %s30, 0
    %p272 = por %p270, %p271
    %s274 = sadd.s32 %s273, 1
    %p277 = scmp.eq.s32.totalorder %s24, 1
    %p278 = scmp.ne.s32.totalorder %s273, %s275
    %p279 = scmp.eq.s32.totalorder %s24, 0
    %p280 = por %p278, %p279
    %p281 = scmp.ne.s32.totalorder %s273, %s275
    %p282 = scmp.eq.s32.totalorder %s29, 1
    %p283 = por %p281, %p282
    %p284 = scmp.ne.s32.totalorder %s275, %s276
    %p285 = scmp.eq.s32.totalorder %s29, 0
    %p286 = por %p284, %p285
    %p287 = scmp.ne.s32.totalorder %s275, %s276
    %p288 = scmp.eq.s32.totalorder %s30, 1
    %p289 = por %p287, %p288
    %p291 = scmp.ne.s32.totalorder %s276, %s290
    %p292 = scmp.eq.s32.totalorder %s30, 0
    %p293 = por %p291, %p292
    %s295 = sadd.s32 %s294, 1
    %p298 = scmp.eq.s32.totalorder %s24, 1
    %p299 = scmp.ne.s32.totalorder %s294, %s296
    %p300 = scmp.eq.s32.totalorder %s24, 0
    %p301 = por %p299, %p300
    %p302 = scmp.ne.s32.totalorder %s294, %s296
    %p303 = scmp.eq.s32.totalorder %s29, 1
    %p304 = por %p302, %p303
    %p305 = scmp.ne.s32.totalorder %s296, %s297
    %p306 = scmp.eq.s32.totalorder %s29, 0
    %p307 = por %p305, %p306
    %p308 = scmp.ne.s32.totalorder %s296, %s297
    %p309 = scmp.eq.s32.totalorder %s30, 1
    %p310 = por %p308, %p309
    %p312 = scmp.ne.s32.totalorder %s297, %s311
    %p313 = scmp.eq.s32.totalorder %s30, 0
    %p314 = por %p312, %p313
    %s316 = sadd.s32 %s315, 1
    %p319 = scmp.eq.s32.totalorder %s24, 1
    %p320 = scmp.ne.s32.totalorder %s315, %s317
    %p321 = scmp.eq.s32.totalorder %s24, 0
    %p322 = por %p320, %p321
    %p323 = scmp.ne.s32.totalorder %s315, %s317
    %p324 = scmp.eq.s32.totalorder %s29, 1
    %p325 = por %p323, %p324
    %p326 = scmp.ne.s32.totalorder %s317, %s318
    %p327 = scmp.eq.s32.totalorder %s29, 0
    %p328 = por %p326, %p327
    %p329 = scmp.ne.s32.totalorder %s317, %s318
    %p330 = scmp.eq.s32.totalorder %s30, 1
    %p331 = por %p329, %p330
    %p333 = scmp.ne.s32.totalorder %s318, %s332
    %p334 = scmp.eq.s32.totalorder %s30, 0
    %p335 = por %p333, %p334
    %s337 = sadd.s32 %s336, 1
    %p340 = scmp.eq.s32.totalorder %s24, 1
    %p341 = scmp.ne.s32.totalorder %s336, %s338
    %p342 = scmp.eq.s32.totalorder %s24, 0
    %p343 = por %p341, %p342
    %p344 = scmp.ne.s32.totalorder %s336, %s338
    %p345 = scmp.eq.s32.totalorder %s29, 1
    %p346 = por %p344, %p345
    %p347 = scmp.ne.s32.totalorder %s338, %s339
    %p348 = scmp.eq.s32.totalorder %s29, 0
    %p349 = por %p347, %p348
    %p350 = scmp.ne.s32.totalorder %s338, %s339
    %p351 = scmp.eq.s32.totalorder %s30, 1
    %p352 = por %p350, %p351
    %p354 = scmp.ne.s32.totalorder %s339, %s353
    %p355 = scmp.eq.s32.totalorder %s30, 0
    %p356 = por %p354, %p355
    %s358 = sadd.s32 %s357, 1
    %p361 = scmp.eq.s32.totalorder %s24, 1
    %p362 = scmp.ne.s32.totalorder %s357, %s359
    %p363 = scmp.eq.s32.totalorder %s24, 0
    %p364 = por %p362, %p363
    %p365 = scmp.ne.s32.totalorder %s357, %s359
    %p366 = scmp.eq.s32.totalorder %s29, 1
    %p367 = por %p365, %p366
    %p368 = scmp.ne.s32.totalorder %s359, %s360
    %p369 = scmp.eq.s32.totalorder %s29, 0
    %p370 = por %p368, %p369
    %p371 = scmp.ne.s32.totalorder %s359, %s360
    %p372 = scmp.eq.s32.totalorder %s30, 1
    %p373 = por %p371, %p372
    %p375 = scmp.ne.s32.totalorder %s360, %s374
    %p376 = scmp.eq.s32.totalorder %s30, 0
    %p377 = por %p375, %p376
    %s379 = sadd.s32 %s378, 1
    %p382 = scmp.eq.s32.totalorder %s24, 1
    %p383 = scmp.ne.s32.totalorder %s378, %s380
    %p384 = scmp.eq.s32.totalorder %s24, 0
    %p385 = por %p383, %p384
    %p386 = scmp.ne.s32.totalorder %s378, %s380
    %p387 = scmp.eq.s32.totalorder %s29, 1
    %p388 = por %p386, %p387
    %p389 = scmp.ne.s32.totalorder %s380, %s381
    %p390 = scmp.eq.s32.totalorder %s29, 0
    %p391 = por %p389, %p390
    %p392 = scmp.ne.s32.totalorder %s380, %s381
    %p393 = scmp.eq.s32.totalorder %s30, 1
    %p394 = por %p392, %p393
    %p396 = scmp.ne.s32.totalorder %s381, %s395
    %p397 = scmp.eq.s32.totalorder %s30, 0
    %p398 = por %p396, %p397
    %s400 = sadd.s32 %s399, 1
    %p403 = scmp.eq.s32.totalorder %s24, 1
    %p404 = scmp.ne.s32.totalorder %s399, %s401
    %p405 = scmp.eq.s32.totalorder %s24, 0
    %p406 = por %p404, %p405
    %p407 = scmp.ne.s32.totalorder %s399, %s401
    %p408 = scmp.eq.s32.totalorder %s29, 1
    %p409 = por %p407, %p408
    %p410 = scmp.ne.s32.totalorder %s401, %s402
    %p411 = scmp.eq.s32.totalorder %s29, 0
    %p412 = por %p410, %p411
    %p413 = scmp.ne.s32.totalorder %s401, %s402
    %p414 = scmp.eq.s32.totalorder %s30, 1
    %p415 = por %p413, %p414
    %p417 = scmp.ne.s32.totalorder %s402, %s416
    %p418 = scmp.eq.s32.totalorder %s30, 0
    %p419 = por %p417, %p418
    %s420 = ssub.s32 %s24, %s31
    %p421 = scmp.eq.s32.totalorder %s420, 0
    %s423 = sadd.s32 %s422, 1
    %s424 = scalar_select %p421, %s422, %s423
    %p427 = pneg %p421
    %p428 = scmp.eq.s32.totalorder %s24, 1
    %p429 = por %p427, %p428
    %p430 = scmp.ne.s32.totalorder %s422, %s425
    %p431 = scmp.eq.s32.totalorder %s24, 0
    %p432 = por %p430, %p431
    %p433 = scmp.ne.s32.totalorder %s422, %s425
    %p434 = scmp.eq.s32.totalorder %s29, 1
    %p435 = por %p433, %p434
    %p436 = scmp.ne.s32.totalorder %s425, %s426
    %p437 = scmp.eq.s32.totalorder %s29, 0
    %p438 = por %p436, %p437
    %p439 = scmp.ne.s32.totalorder %s425, %s426
    %p440 = scmp.eq.s32.totalorder %s30, 1
    %p441 = por %p439, %p440
    %p443 = scmp.ne.s32.totalorder %s426, %s442
    %p444 = scmp.eq.s32.totalorder %s30, 0
    %p445 = por %p443, %p444
    %p446 = scmp.le.s32.totalorder 1, %s24
    %p447 = scmp.lt.s32.totalorder %s24, 3
    %p448 = pnand %p446, %p447
    %p449 = pneg %p448
    // Predicated region
    $region9: #{transformer_forward.7} parent=5 // pred_check
      _
    $region10: #{transformer_forward.7} parent=5 // pred_check_branch
      %451 = sbr.rel (%p448) target = $region12
    $region11: #{transformer_forward.7} parent=5 // pred_region
      %s452 = ssub.s32 %s24, 1
      // Predicated region
      $region13: #{transformer_forward.7} parent=11 // pred_check
        %p453 = pneg %p97
      $region14: #{transformer_forward.7} parent=11 // pred_check_branch
        %455 = sbr.rel (%p453) target = $region16
      $region15: #{transformer_forward.7} parent=11 // pred_region
        _
      $region16: #{transformer_forward.7} parent=11 // pred_fallthru
        _
      // Predicated region
      $region17: #{transformer_forward.7} parent=11 // pred_check
        %p456 = pneg %p118
      $region18: #{transformer_forward.7} parent=11 // pred_check_branch
        %458 = sbr.rel (%p456) target = $region20
      $region19: #{transformer_forward.7} parent=11 // pred_region
        _
      $region20: #{transformer_forward.7} parent=11 // pred_fallthru
        _
      // Predicated region
      $region21: #{transformer_forward.7} parent=11 // pred_check
        %p459 = pneg %p139
      $region22: #{transformer_forward.7} parent=11 // pred_check_branch
        %461 = sbr.rel (%p459) target = $region24
      $region23: #{transformer_forward.7} parent=11 // pred_region
        _
      $region24: #{transformer_forward.7} parent=11 // pred_fallthru
        _
      // Predicated region
      $region25: #{transformer_forward.7} parent=11 // pred_check
        %p462 = pneg %p160
      $region26: #{transformer_forward.7} parent=11 // pred_check_branch
        %464 = sbr.rel (%p462) target = $region28
      $region27: #{transformer_forward.7} parent=11 // pred_region
        _
      $region28: #{transformer_forward.7} parent=11 // pred_fallthru
        _
      // Predicated region
      $region29: #{transformer_forward.7} parent=11 // pred_check
        %p465 = pneg %p181
      $region30: #{transformer_forward.7} parent=11 // pred_check_branch
        %467 = sbr.rel (%p465) target = $region32
      $region31: #{transformer_forward.7} parent=11 // pred_region
        _
      $region32: #{transformer_forward.7} parent=11 // pred_fallthru
        _
      // Predicated region
      $region33: #{transformer_forward.7} parent=11 // pred_check
        %p468 = pneg %p202
      $region34: #{transformer_forward.7} parent=11 // pred_check_branch
        %470 = sbr.rel (%p468) target = $region36
      $region35: #{transformer_forward.7} parent=11 // pred_region
        _
      $region36: #{transformer_forward.7} parent=11 // pred_fallthru
        _
      // Predicated region
      $region37: #{transformer_forward.7} parent=11 // pred_check
        %p471 = pneg %p223
      $region38: #{transformer_forward.7} parent=11 // pred_check_branch
        %473 = sbr.rel (%p471) target = $region40
      $region39: #{transformer_forward.7} parent=11 // pred_region
        _
      $region40: #{transformer_forward.7} parent=11 // pred_fallthru
        _
      // Predicated region
      $region41: #{transformer_forward.7} parent=11 // pred_check
        %p474 = pneg %p244
      $region42: #{transformer_forward.7} parent=11 // pred_check_branch
        %476 = sbr.rel (%p474) target = $region44
      $region43: #{transformer_forward.7} parent=11 // pred_region
        _
      $region44: #{transformer_forward.7} parent=11 // pred_fallthru
        _
      // Predicated region
      $region45: #{transformer_forward.7} parent=11 // pred_check
        %p477 = pneg %p265
      $region46: #{transformer_forward.7} parent=11 // pred_check_branch
        %479 = sbr.rel (%p477) target = $region48
      $region47: #{transformer_forward.7} parent=11 // pred_region
        _
      $region48: #{transformer_forward.7} parent=11 // pred_fallthru
        _
      // Predicated region
      $region49: #{transformer_forward.7} parent=11 // pred_check
        %p480 = pneg %p286
      $region50: #{transformer_forward.7} parent=11 // pred_check_branch
        %482 = sbr.rel (%p480) target = $region52
      $region51: #{transformer_forward.7} parent=11 // pred_region
        _
      $region52: #{transformer_forward.7} parent=11 // pred_fallthru
        _
      // Predicated region
      $region53: #{transformer_forward.7} parent=11 // pred_check
        %p483 = pneg %p307
      $region54: #{transformer_forward.7} parent=11 // pred_check_branch
        %485 = sbr.rel (%p483) target = $region56
      $region55: #{transformer_forward.7} parent=11 // pred_region
        _
      $region56: #{transformer_forward.7} parent=11 // pred_fallthru
        _
      // Predicated region
      $region57: #{transformer_forward.7} parent=11 // pred_check
        %p486 = pneg %p328
      $region58: #{transformer_forward.7} parent=11 // pred_check_branch
        %488 = sbr.rel (%p486) target = $region60
      $region59: #{transformer_forward.7} parent=11 // pred_region
        _
      $region60: #{transformer_forward.7} parent=11 // pred_fallthru
        _
      // Predicated region
      $region61: #{transformer_forward.7} parent=11 // pred_check
        %p489 = pneg %p349
      $region62: #{transformer_forward.7} parent=11 // pred_check_branch
        %491 = sbr.rel (%p489) target = $region64
      $region63: #{transformer_forward.7} parent=11 // pred_region
        _
      $region64: #{transformer_forward.7} parent=11 // pred_fallthru
        _
      // Predicated region
      $region65: #{transformer_forward.7} parent=11 // pred_check
        %p492 = pneg %p370
      $region66: #{transformer_forward.7} parent=11 // pred_check_branch
        %494 = sbr.rel (%p492) target = $region68
      $region67: #{transformer_forward.7} parent=11 // pred_region
        _
      $region68: #{transformer_forward.7} parent=11 // pred_fallthru
        _
      // Predicated region
      $region69: #{transformer_forward.7} parent=11 // pred_check
        %p495 = pneg %p391
      $region70: #{transformer_forward.7} parent=11 // pred_check_branch
        %497 = sbr.rel (%p495) target = $region72
      $region71: #{transformer_forward.7} parent=11 // pred_region
        _
      $region72: #{transformer_forward.7} parent=11 // pred_fallthru
        _
      // Predicated region
      $region73: #{transformer_forward.7} parent=11 // pred_check
        %p498 = pneg %p412
      $region74: #{transformer_forward.7} parent=11 // pred_check_branch
        %500 = sbr.rel (%p498) target = $region76
      $region75: #{transformer_forward.7} parent=11 // pred_region
        _
      $region76: #{transformer_forward.7} parent=11 // pred_fallthru
        _
    $region12: #{transformer_forward.7} parent=5 // pred_fallthru
      _
    %p501 = scmp.lt.s32.totalorder %s24, 2
    // Predicated region
    $region77: #{transformer_forward.7} parent=5 // pred_check
      %p502 = pneg %p501
    $region78: #{transformer_forward.7} parent=5 // pred_check_branch
      %504 = sbr.rel (%p502) target = $region80
    $region79: #{transformer_forward.7} parent=5 // pred_region
      // Predicated region
      $region81: #{transformer_forward.7} parent=79 // pred_check
        %p505 = pneg %p44
      $region82: #{transformer_forward.7} parent=79 // pred_check_branch
        %507 = sbr.rel (%p505) target = $region84
      $region83: #{transformer_forward.7} parent=79 // pred_region
        %p508 = scmp.lt.s32.totalorder %s24, 1
        %s509 = scalar_select %p508, %s24, 1
        %s510 = smul.addr %s509, 8
        %s511 = scalar_lea.vmem %s0, %s510
      $region84: #{transformer_forward.7} parent=79 // pred_fallthru
        _
      // Predicated region
      $region85: #{transformer_forward.7} parent=79 // pred_check
        %p512 = pneg %p70
      $region86: #{transformer_forward.7} parent=79 // pred_check_branch
        %514 = sbr.rel (%p512) target = $region88
      $region87: #{transformer_forward.7} parent=79 // pred_region
        %p515 = scmp.lt.s32.totalorder %s24, 1
        %s516 = scalar_select %p515, %s24, 1
        %s517 = smul.addr %s516, 8
        %s518 = scalar_lea.vmem %s1, %s517
      $region88: #{transformer_forward.7} parent=79 // pred_fallthru
        _
    $region80: #{transformer_forward.7} parent=5 // pred_fallthru
      _
    %p519 = scmp.le.s32.totalorder 1, %s24
    %p520 = scmp.lt.s32.totalorder %s24, 3
    %p521 = pnand %p519, %p520
    %p522 = pneg %p521
    // Predicated region
    $region89: #{transformer_forward.7} parent=5 // pred_check
      _
    $region90: #{transformer_forward.7} parent=5 // pred_check_branch
      %524 = sbr.rel (%p521) target = $region92
    $region91: #{transformer_forward.7} parent=5 // pred_region
      %s525 = ssub.s32 %s24, 1
      %p526 = scmp.lt.s32.totalorder %s29, 1
      %s527 = scalar_select %p526, %s29, 1
      %s528 = smul.addr %s527, 8
      %s529 = scalar_lea.vmem %s0, %s528
      %p530 = pneg %p50
      %p531 = pneg %p47
      %p532 = scmp.lt.s32.totalorder %s29, 1
      %s533 = scalar_select %p532, %s29, 1
      %s534 = smul.addr %s533, 8
      %s535 = scalar_lea.vmem %s1, %s534
      %p536 = pneg %p76
      %p537 = pneg %p73
      %p538 = pneg %p97
      %p539 = pneg %p94
      %p540 = pneg %p118
      %p541 = pneg %p115
      %p542 = pneg %p139
      %p543 = pneg %p136
      %p544 = pneg %p160
      %p545 = pneg %p157
      %p546 = pneg %p181
      %p547 = pneg %p178
      %p548 = pneg %p202
      %p549 = pneg %p199
      %p550 = pneg %p223
      %p551 = pneg %p220
      %p552 = pneg %p244
      %p553 = pneg %p241
      %p554 = pneg %p265
      %p555 = pneg %p262
      %p556 = pneg %p286
      %p557 = pneg %p283
      %p558 = pneg %p307
      %p559 = pneg %p304
      %p560 = pneg %p328
      %p561 = pneg %p325
      %p562 = pneg %p349
      %p563 = pneg %p346
      %p564 = pneg %p370
      %p565 = pneg %p367
      %p566 = pneg %p391
      %p567 = pneg %p388
      %p568 = pneg %p412
      %p569 = pneg %p409
      %p570 = pneg %p438
      %p571 = pneg %p435
      %p572 = scmp.lt.s32.totalorder %s29, 1
      %s573 = scalar_select %p572, %s29, 1
      %s574 = smul.addr %s573, 8
      %s575 = scalar_lea.vmem %s18, %s574
      %p576 = scmp.lt.s32.totalorder %s29, 1
      %s577 = scalar_select %p576, %s29, 1
      %s578 = smul.addr %s577, 8
      %s579 = scalar_lea.vmem %s0, %s578
      %p580 = scmp.lt.s32.totalorder %s29, 1
      %s581 = scalar_select %p580, %s29, 1
      %s582 = smul.addr %s581, 8
      %s583 = scalar_lea.vmem %s1, %s582
      %p584 = scmp.lt.s32.totalorder %s29, 1
      %s585 = scalar_select %p584, %s29, 1
      %s586 = smul.addr %s585, 8
      %s587 = scalar_lea.vmem %s18, %s586
      %v589 = vld [vmem:[%s579] sm:$0xff]
      %v590 = vld [vmem:[%s583] sm:$0xff]
      %v591 = vpack.c.bf16 %v589, %v589
      %v592 = vpack.c.bf16 %v590, %v590
      %v593 = vld [vmem:[%s2] sm:$0xf]
      %v594 = vld [vmem:[%s2 + $0x4] sm:$0xf]
      %v595 = vld [vmem:[%s2 + $0x8] sm:$0xf]
      %v596 = vld [vmem:[%s2 + $0xc] sm:$0xf]
      %v597 = vld [vmem:[%s2 + $0x10] sm:$0xf]
      %v598 = vld [vmem:[%s2 + $0x14] sm:$0xf]
      %v599 = vld [vmem:[%s2 + $0x18] sm:$0xf]
      %v600 = vld [vmem:[%s2 + $0x1c] sm:$0xf]
      %v601 = vld [vmem:[%s2 + $0x20] sm:$0xf]
      %v602 = vld [vmem:[%s2 + $0x24] sm:$0xf]
      %v603 = vld [vmem:[%s2 + $0x28] sm:$0xf]
      %v604 = vld [vmem:[%s2 + $0x2c] sm:$0xf]
      %v605 = vld [vmem:[%s2 + $0x30] sm:$0xf]
      %v606 = vld [vmem:[%s2 + $0x34] sm:$0xf]
      %v607 = vld [vmem:[%s2 + $0x38] sm:$0xf]
      %v608 = vld [vmem:[%s2 + $0x3c] sm:$0xf]
      %v609 = vld [vmem:[%s3] sm:$0x1]
      %v610 = vld [vmem:[%s3 + $0x1] sm:$0x1]
      %v611 = vld [vmem:[%s3 + $0x2] sm:$0x1]
      %v612 = vld [vmem:[%s3 + $0x3] sm:$0x1]
      %v617 = vlaneseq
      %v618 = vshrl.u32 %v617, 7
      %v619 = vsub.s32 0, %v618
      %v620 = vrot.slane %v609, %v619
      %v621 = vlaneseq
      %v622 = vshrl.u32 %v621, 7
      %v623 = vsub.s32 0, %v622
      %v624 = vrot.slane %v610, %v623
      %v625 = vlaneseq
      %v626 = vshrl.u32 %v625, 7
      %v627 = vsub.s32 0, %v626
      %v628 = vrot.slane %v611, %v627
      %v629 = vlaneseq
      %v630 = vshrl.u32 %v629, 7
      %v631 = vsub.s32 0, %v630
      %v632 = vrot.slane %v612, %v631
      %v641 = vunpack.c.l.b16 %v593
      %v642 = vunpack.c.l.b16 %v594
      %v643 = vunpack.c.l.b16 %v595
      %v644 = vunpack.c.l.b16 %v596
      %v645 = vpack.c.b16 %v642, %v641
      %v646 = vpack.c.b16 %v644, %v643
      %vm649 = vcmask 261120
      %v651 = vsel %vm649, %v591, 0
      %653 = vmatprep.subr.bf16.mxu0 0
      %654 = vmatpush1.bf16.msra.mxu0 %v645
      %655 = vmatprep.subr.bf16.mxu0 0
      %656 = vmatpush1.bf16.msra.mxu0 %v646
      %657 = vmatprep.subr.bf16.mxu0 0
      %658 = vmatpush1.bf16.msra.mxu0 0
      %659 = vmatprep.subr.bf16.mxu0 0
      %660 = vmatpush1.bf16.msra.mxu0 0
      %661 = vmatprep.subr.bf16.mxu0 0
      %662 = vmatpush1.bf16.msra.mxu0 0
      %663 = vmatprep.subr.bf16.mxu0 0
      %664 = vmatpush1.bf16.msra.mxu0 0
      %665 = vmatprep.subr.bf16.mxu0 0
      %666 = vmatpush1.bf16.msra.mxu0 0
      %667 = vmatprep.subr.bf16.mxu0 0
      %668 = vmatpush1.bf16.msra.mxu0 0
      %669 = vmatprep.subr.bf16.mxu0 0
      %670 = vmatpush1.bf16.msra.mxu0 0
      %671 = vmatprep.subr.bf16.mxu0 0
      %672 = vmatpush1.bf16.msra.mxu0 0
      %673 = vmatprep.subr.bf16.mxu0 0
      %674 = vmatpush1.bf16.msra.mxu0 0
      %675 = vmatprep.subr.bf16.mxu0 0
      %676 = vmatpush1.bf16.msra.mxu0 0
      %677 = vmatprep.subr.bf16.mxu0 0
      %678 = vmatpush1.bf16.msra.mxu0 0
      %679 = vmatprep.subr.bf16.mxu0 0
      %680 = vmatpush1.bf16.msra.mxu0 0
      %681 = vmatprep.subr.bf16.mxu0 0
      %682 = vmatpush1.bf16.msra.mxu0 0
      %683 = vmatprep.subr.bf16.mxu0 0
      %684 = vmatpush1.bf16.msra.mxu0 0
      %685 = vmatprep.mubr.bf16.mxu0 0
      %686 = vmatmul.mubr.bf16.gmra.mrb[0].mxu0 %v651
      %v687 = vpop.f32.mrb[0].mxu0
      %v688 = vadd.f32 %v620, %v687
      %v689 = vpop.f32.mrb[0].mxu0
      %v690 = vpop.f32.mrb[0].mxu0
      %v691 = vpop.f32.mrb[0].mxu0
      %692 = vdwg.mxu0
      %v697 = vunpack.c.l.b16 %v597
      %v698 = vunpack.c.l.b16 %v598
      %v699 = vunpack.c.l.b16 %v599
      %v700 = vunpack.c.l.b16 %v600
      %v701 = vpack.c.b16 %v698, %v697
      %v702 = vpack.c.b16 %v700, %v699
      %705 = vmatprep.subr.bf16.mxu0 0
      %706 = vmatpush1.bf16.msra.mxu0 %v701
      %707 = vmatprep.subr.bf16.mxu0 0
      %708 = vmatpush1.bf16.msra.mxu0 %v702
      %709 = vmatprep.subr.bf16.mxu0 0
      %710 = vmatpush1.bf16.msra.mxu0 0
      %711 = vmatprep.subr.bf16.mxu0 0
      %712 = vmatpush1.bf16.msra.mxu0 0
      %713 = vmatprep.subr.bf16.mxu0 0
      %714 = vmatpush1.bf16.msra.mxu0 0
      %715 = vmatprep.subr.bf16.mxu0 0
      %716 = vmatpush1.bf16.msra.mxu0 0
      %717 = vmatprep.subr.bf16.mxu0 0
      %718 = vmatpush1.bf16.msra.mxu0 0
      %719 = vmatprep.subr.bf16.mxu0 0
      %720 = vmatpush1.bf16.msra.mxu0 0
      %721 = vmatprep.subr.bf16.mxu0 0
      %722 = vmatpush1.bf16.msra.mxu0 0
      %723 = vmatprep.subr.bf16.mxu0 0
      %724 = vmatpush1.bf16.msra.mxu0 0
      %725 = vmatprep.subr.bf16.mxu0 0
      %726 = vmatpush1.bf16.msra.mxu0 0
      %727 = vmatprep.subr.bf16.mxu0 0
      %728 = vmatpush1.bf16.msra.mxu0 0
      %729 = vmatprep.subr.bf16.mxu0 0
      %730 = vmatpush1.bf16.msra.mxu0 0
      %731 = vmatprep.subr.bf16.mxu0 0
      %732 = vmatpush1.bf16.msra.mxu0 0
      %733 = vmatprep.subr.bf16.mxu0 0
      %734 = vmatpush1.bf16.msra.mxu0 0
      %735 = vmatprep.subr.bf16.mxu0 0
      %736 = vmatpush1.bf16.msra.mxu0 0
      %737 = vmatprep.mubr.bf16.mxu0 0
      %738 = vmatmul.mubr.bf16.gmra.mrb[0].mxu0 %v651
      %v739 = vpop.f32.mrb[0].mxu0
      %v740 = vadd.f32 %v624, %v739
      %v741 = vpop.f32.mrb[0].mxu0
      %v742 = vpop.f32.mrb[0].mxu0
      %v743 = vpop.f32.mrb[0].mxu0
      %744 = vdwg.mxu0
      %v749 = vunpack.c.l.b16 %v601
      %v750 = vunpack.c.l.b16 %v602
      %v751 = vunpack.c.l.b16 %v603
      %v752 = vunpack.c.l.b16 %v604
      %v753 = vpack.c.b16 %v750, %v749
      %v754 = vpack.c.b16 %v752, %v751
      %757 = vmatprep.subr.bf16.mxu0 0
      %758 = vmatpush1.bf16.msra.mxu0 %v753
      %759 = vmatprep.subr.bf16.mxu0 0
      %760 = vmatpush1.bf16.msra.mxu0 %v754
      %761 = vmatprep.subr.bf16.mxu0 0
      %762 = vmatpush1.bf16.msra.mxu0 0
      %763 = vmatprep.subr.bf16.mxu0 0
      %764 = vmatpush1.bf16.msra.mxu0 0
      %765 = vmatprep.subr.bf16.mxu0 0
      %766 = vmatpush1.bf16.msra.mxu0 0
      %767 = vmatprep.subr.bf16.mxu0 0
      %768 = vmatpush1.bf16.msra.mxu0 0
      %769 = vmatprep.subr.bf16.mxu0 0
      %770 = vmatpush1.bf16.msra.mxu0 0
      %771 = vmatprep.subr.bf16.mxu0 0
      %772 = vmatpush1.bf16.msra.mxu0 0
      %773 = vmatprep.subr.bf16.mxu0 0
      %774 = vmatpush1.bf16.msra.mxu0 0
      %775 = vmatprep.subr.bf16.mxu0 0
      %776 = vmatpush1.bf16.msra.mxu0 0
      %777 = vmatprep.subr.bf16.mxu0 0
      %778 = vmatpush1.bf16.msra.mxu0 0
      %779 = vmatprep.subr.bf16.mxu0 0
      %780 = vmatpush1.bf16.msra.mxu0 0
      %781 = vmatprep.subr.bf16.mxu0 0
      %782 = vmatpush1.bf16.msra.mxu0 0
      %783 = vmatprep.subr.bf16.mxu0 0
      %784 = vmatpush1.bf16.msra.mxu0 0
      %785 = vmatprep.subr.bf16.mxu0 0
      %786 = vmatpush1.bf16.msra.mxu0 0
      %787 = vmatprep.subr.bf16.mxu0 0
      %788 = vmatpush1.bf16.msra.mxu0 0
      %789 = vmatprep.mubr.bf16.mxu0 0
      %790 = vmatmul.mubr.bf16.gmra.mrb[0].mxu0 %v651
      %v791 = vpop.f32.mrb[0].mxu0
      %v792 = vadd.f32 %v628, %v791
      %v793 = vpop.f32.mrb[0].mxu0
      %v794 = vpop.f32.mrb[0].mxu0
      %v795 = vpop.f32.mrb[0].mxu0
      %796 = vdwg.mxu0
      %v801 = vunpack.c.l.b16 %v605
      %v802 = vunpack.c.l.b16 %v606
      %v803 = vunpack.c.l.b16 %v607
      %v804 = vunpack.c.l.b16 %v608
      %v805 = vpack.c.b16 %v802, %v801
      %v806 = vpack.c.b16 %v804, %v803
      %809 = vmatprep.subr.bf16.mxu0 0
      %810 = vmatpush1.bf16.msra.mxu0 %v805
      %811 = vmatprep.subr.bf16.mxu0 0
      %812 = vmatpush1.bf16.msra.mxu0 %v806
      %813 = vmatprep.subr.bf16.mxu0 0
      %814 = vmatpush1.bf16.msra.mxu0 0
      %815 = vmatprep.subr.bf16.mxu0 0
      %816 = vmatpush1.bf16.msra.mxu0 0
      %817 = vmatprep.subr.bf16.mxu0 0
      %818 = vmatpush1.bf16.msra.mxu0 0
      %819 = vmatprep.subr.bf16.mxu0 0
      %820 = vmatpush1.bf16.msra.mxu0 0
      %821 = vmatprep.subr.bf16.mxu0 0
      %822 = vmatpush1.bf16.msra.mxu0 0
      %823 = vmatprep.subr.bf16.mxu0 0
      %824 = vmatpush1.bf16.msra.mxu0 0
      %825 = vmatprep.subr.bf16.mxu0 0
      %826 = vmatpush1.bf16.msra.mxu0 0
      %827 = vmatprep.subr.bf16.mxu0 0
      %828 = vmatpush1.bf16.msra.mxu0 0
      %829 = vmatprep.subr.bf16.mxu0 0
      %830 = vmatpush1.bf16.msra.mxu0 0
      %831 = vmatprep.subr.bf16.mxu0 0
      %832 = vmatpush1.bf16.msra.mxu0 0
      %833 = vmatprep.subr.bf16.mxu0 0
      %834 = vmatpush1.bf16.msra.mxu0 0
      %835 = vmatprep.subr.bf16.mxu0 0
      %836 = vmatpush1.bf16.msra.mxu0 0
      %837 = vmatprep.subr.bf16.mxu0 0
      %838 = vmatpush1.bf16.msra.mxu0 0
      %839 = vmatprep.subr.bf16.mxu0 0
      %840 = vmatpush1.bf16.msra.mxu0 0
      %841 = vmatprep.mubr.bf16.mxu0 0
      %842 = vmatmul.mubr.bf16.gmra.mrb[0].mxu0 %v651
      %v843 = vpop.f32.mrb[0].mxu0
      %v844 = vadd.f32 %v632, %v843
      %v845 = vpop.f32.mrb[0].mxu0
      %v846 = vpop.f32.mrb[0].mxu0
      %v847 = vpop.f32.mrb[0].mxu0
      %848 = vdwg.mxu0
      %v849 = vld [vmem:[%s4] sm:$0xf]
      %v850 = vld [vmem:[%s4 + $0x4] sm:$0xf]
      %v851 = vld [vmem:[%s4 + $0x8] sm:$0xf]
      %v852 = vld [vmem:[%s4 + $0xc] sm:$0xf]
      %v853 = vld [vmem:[%s4 + $0x10] sm:$0xf]
      %v854 = vld [vmem:[%s4 + $0x14] sm:$0xf]
      %v855 = vld [vmem:[%s4 + $0x18] sm:$0xf]
      %v856 = vld [vmem:[%s4 + $0x1c] sm:$0xf]
      %v857 = vld [vmem:[%s4 + $0x20] sm:$0xf]
      %v858 = vld [vmem:[%s4 + $0x24] sm:$0xf]
      %v859 = vld [vmem:[%s4 + $0x28] sm:$0xf]
      %v860 = vld [vmem:[%s4 + $0x2c] sm:$0xf]
      %v861 = vld [vmem:[%s4 + $0x30] sm:$0xf]
      %v862 = vld [vmem:[%s4 + $0x34] sm:$0xf]
      %v863 = vld [vmem:[%s4 + $0x38] sm:$0xf]
      %v864 = vld [vmem:[%s4 + $0x3c] sm:$0xf]
      %v865 = vld [vmem:[%s5] sm:$0x1]
      %v866 = vld [vmem:[%s5 + $0x1] sm:$0x1]
      %v867 = vld [vmem:[%s5 + $0x2] sm:$0x1]
      %v868 = vld [vmem:[%s5 + $0x3] sm:$0x1]
      %v873 = vlaneseq
      %v874 = vshrl.u32 %v873, 7
      %v875 = vsub.s32 0, %v874
      %v876 = vrot.slane %v865, %v875
      %v877 = vlaneseq
      %v878 = vshrl.u32 %v877, 7
      %v879 = vsub.s32 0, %v878
      %v880 = vrot.slane %v866, %v879
      %v881 = vlaneseq
      %v882 = vshrl.u32 %v881, 7
      %v883 = vsub.s32 0, %v882
      %v884 = vrot.slane %v867, %v883
      %v885 = vlaneseq
      %v886 = vshrl.u32 %v885, 7
      %v887 = vsub.s32 0, %v886
      %v888 = vrot.slane %v868, %v887
      %v897 = vunpack.c.l.b16 %v849
      %v898 = vunpack.c.l.b16 %v850
      %v899 = vunpack.c.l.b16 %v851
      %v900 = vunpack.c.l.b16 %v852
      %v901 = vpack.c.b16 %v898, %v897
      %v902 = vpack.c.b16 %v900, %v899
      %v906 = vsel %vm649, %v592, 0
      %908 = vmatprep.subr.bf16.mxu0 0
      %909 = vmatpush1.bf16.msra.mxu0 %v901
      %910 = vmatprep.subr.bf16.mxu0 0
      %911 = vmatpush1.bf16.msra.mxu0 %v902
      %912 = vmatprep.subr.bf16.mxu0 0
      %913 = vmatpush1.bf16.msra.mxu0 0
      %914 = vmatprep.subr.bf16.mxu0 0
      %915 = vmatpush1.bf16.msra.mxu0 0
      %916 = vmatprep.subr.bf16.mxu0 0
      %917 = vmatpush1.bf16.msra.mxu0 0
      %918 = vmatprep.subr.bf16.mxu0 0
      %919 = vmatpush1.bf16.msra.mxu0 0
      %920 = vmatprep.subr.bf16.mxu0 0
      %921 = vmatpush1.bf16.msra.mxu0 0
      %922 = vmatprep.subr.bf16.mxu0 0
      %923 = vmatpush1.bf16.msra.mxu0 0
      %924 = vmatprep.subr.bf16.mxu0 0
      %925 = vmatpush1.bf16.msra.mxu0 0
      %926 = vmatprep.subr.bf16.mxu0 0
      %927 = vmatpush1.bf16.msra.mxu0 0
      %928 = vmatprep.subr.bf16.mxu0 0
      %929 = vmatpush1.bf16.msra.mxu0 0
      %930 = vmatprep.subr.bf16.mxu0 0
      %931 = vmatpush1.bf16.msra.mxu0 0
      %932 = vmatprep.subr.bf16.mxu0 0
      %933 = vmatpush1.bf16.msra.mxu0 0
      %934 = vmatprep.subr.bf16.mxu0 0
      %935 = vmatpush1.bf16.msra.mxu0 0
      %936 = vmatprep.subr.bf16.mxu0 0
      %937 = vmatpush1.bf16.msra.mxu0 0
      %938 = vmatprep.subr.bf16.mxu0 0
      %939 = vmatpush1.bf16.msra.mxu0 0
      %940 = vmatprep.mubr.bf16.mxu0 0
      %941 = vmatmul.mubr.bf16.gmra.mrb[0].mxu0 %v906
      %v942 = vpop.f32.mrb[0].mxu0
      %v943 = vadd.f32 %v876, %v942
      %v944 = vpop.f32.mrb[0].mxu0
      %v945 = vpop.f32.mrb[0].mxu0
      %v946 = vpop.f32.mrb[0].mxu0
      %947 = vdwg.mxu0
      %v952 = vunpack.c.l.b16 %v853
      %v953 = vunpack.c.l.b16 %v854
      %v954 = vunpack.c.l.b16 %v855
      %v955 = vunpack.c.l.b16 %v856
      %v956 = vpack.c.b16 %v953, %v952
      %v957 = vpack.c.b16 %v955, %v954
      %960 = vmatprep.subr.bf16.mxu0 0
      %961 = vmatpush1.bf16.msra.mxu0 %v956
      %962 = vmatprep.subr.bf16.mxu0 0
      %963 = vmatpush1.bf16.msra.mxu0 %v957
      %964 = vmatprep.subr.bf16.mxu0 0
      %965 = vmatpush1.bf16.msra.mxu0 0
      %966 = vmatprep.subr.bf16.mxu0 0
      %967 = vmatpush1.bf16.msra.mxu0 0
      %968 = vmatprep.subr.bf16.mxu0 0
      %969 = vmatpush1.bf16.msra.mxu0 0
      %970 = vmatprep.subr.bf16.mxu0 0
      %971 = vmatpush1.bf16.msra.mxu0 0
      %972 = vmatprep.subr.bf16.mxu0 0
      %973 = vmatpush1.bf16.msra.mxu0 0
      %974 = vmatprep.subr.bf16.mxu0 0
      %975 = vmatpush1.bf16.msra.mxu0 0
      %976 = vmatprep.subr.bf16.mxu0 0
      %977 = vmatpush1.bf16.msra.mxu0 0
      %978 = vmatprep.subr.bf16.mxu0 0
      %979 = vmatpush1.bf16.msra.mxu0 0
      %980 = vmatprep.subr.bf16.mxu0 0
      %981 = vmatpush1.bf16.msra.mxu0 0
      %982 = vmatprep.subr.bf16.mxu0 0
      %983 = vmatpush1.bf16.msra.mxu0 0
      %984 = vmatprep.subr.bf16.mxu0 0
      %985 = vmatpush1.bf16.msra.mxu0 0
      %986 = vmatprep.subr.bf16.mxu0 0
      %987 = vmatpush1.bf16.msra.mxu0 0
      %988 = vmatprep.subr.bf16.mxu0 0
      %989 = vmatpush1.bf16.msra.mxu0 0
      %990 = vmatprep.subr.bf16.mxu0 0
      %991 = vmatpush1.bf16.msra.mxu0 0
      %992 = vmatprep.mubr.bf16.mxu0 0
      %993 = vmatmul.mubr.bf16.gmra.mrb[0].mxu0 %v906
      %v994 = vpop.f32.mrb[0].mxu0
      %v995 = vadd.f32 %v880, %v994
      %v996 = vpop.f32.mrb[0].mxu0
      %v997 = vpop.f32.mrb[0].mxu0
      %v998 = vpop.f32.mrb[0].mxu0
      %999 = vdwg.mxu0
      %v1004 = vunpack.c.l.b16 %v857
      %v1005 = vunpack.c.l.b16 %v858
      %v1006 = vunpack.c.l.b16 %v859
      %v1007 = vunpack.c.l.b16 %v860
      %v1008 = vpack.c.b16 %v1005, %v1004
      %v1009 = vpack.c.b16 %v1007, %v1006
      %1012 = vmatprep.subr.bf16.mxu0 0
      %1013 = vmatpush1.bf16.msra.mxu0 %v1008
      %1014 = vmatprep.subr.bf16.mxu0 0
      %1015 = vmatpush1.bf16.msra.mxu0 %v1009
      %1016 = vmatprep.subr.bf16.mxu0 0
      %1017 = vmatpush1.bf16.msra.mxu0 0
      %1018 = vmatprep.subr.bf16.mxu0 0
      %1019 = vmatpush1.bf16.msra.mxu0 0
      %1020 = vmatprep.subr.bf16.mxu0 0
      %1021 = vmatpush1.bf16.msra.mxu0 0
      %1022 = vmatprep.subr.bf16.mxu0 0
      %1023 = vmatpush1.bf16.msra.mxu0 0
      %1024 = vmatprep.subr.bf16.mxu0 0
      %1025 = vmatpush1.bf16.msra.mxu0 0
      %1026 = vmatprep.subr.bf16.mxu0 0
      %1027 = vmatpush1.bf16.msra.mxu0 0
      %1028 = vmatprep.subr.bf16.mxu0 0
      %1029 = vmatpush1.bf16.msra.mxu0 0
      %1030 = vmatprep.subr.bf16.mxu0 0
      %1031 = vmatpush1.bf16.msra.mxu0 0
      %1032 = vmatprep.subr.bf16.mxu0 0
      %1033 = vmatpush1.bf16.msra.mxu0 0
      %1034 = vmatprep.subr.bf16.mxu0 0
      %1035 = vmatpush1.bf16.msra.mxu0 0
      %1036 = vmatprep.subr.bf16.mxu0 0
      %1037 = vmatpush1.bf16.msra.mxu0 0
      %1038 = vmatprep.subr.bf16.mxu0 0
      %1039 = vmatpush1.bf16.msra.mxu0 0
      %1040 = vmatprep.subr.bf16.mxu0 0
      %1041 = vmatpush1.bf16.msra.mxu0 0
      %1042 = vmatprep.subr.bf16.mxu0 0
      %1043 = vmatpush1.bf16.msra.mxu0 0
      %1044 = vmatprep.mubr.bf16.mxu0 0
      %1045 = vmatmul.mubr.bf16.gmra.mrb[0].mxu0 %v906
      %v1046 = vpop.f32.mrb[0].mxu0
      %v1047 = vadd.f32 %v884, %v1046
      %v1048 = vpop.f32.mrb[0].mxu0
      %v1049 = vpop.f32.mrb[0].mxu0
      %v1050 = vpop.f32.mrb[0].mxu0
      %1051 = vdwg.mxu0
      %v1056 = vunpack.c.l.b16 %v861
      %v1057 = vunpack.c.l.b16 %v862
      %v1058 = vunpack.c.l.b16 %v863
      %v1059 = vunpack.c.l.b16 %v864
      %v1060 = vpack.c.b16 %v1057, %v1056
      %v1061 = vpack.c.b16 %v1059, %v1058
      %1064 = vmatprep.subr.bf16.mxu0 0
      %1065 = vmatpush1.bf16.msra.mxu0 %v1060
      %1066 = vmatprep.subr.bf16.mxu0 0
      %1067 = vmatpush1.bf16.msra.mxu0 %v1061
      %1068 = vmatprep.subr.bf16.mxu0 0
      %1069 = vmatpush1.bf16.msra.mxu0 0
      %1070 = vmatprep.subr.bf16.mxu0 0
      %1071 = vmatpush1.bf16.msra.mxu0 0
      %1072 = vmatprep.subr.bf16.mxu0 0
      %1073 = vmatpush1.bf16.msra.mxu0 0
      %1074 = vmatprep.subr.bf16.mxu0 0
      %1075 = vmatpush1.bf16.msra.mxu0 0
      %1076 = vmatprep.subr.bf16.mxu0 0
      %1077 = vmatpush1.bf16.msra.mxu0 0
      %1078 = vmatprep.subr.bf16.mxu0 0
      %1079 = vmatpush1.bf16.msra.mxu0 0
      %1080 = vmatprep.subr.bf16.mxu0 0
      %1081 = vmatpush1.bf16.msra.mxu0 0
      %1082 = vmatprep.subr.bf16.mxu0 0
      %1083 = vmatpush1.bf16.msra.mxu0 0
      %1084 = vmatprep.subr.bf16.mxu0 0
      %1085 = vmatpush1.bf16.msra.mxu0 0
      %1086 = vmatprep.subr.bf16.mxu0 0
      %1087 = vmatpush1.bf16.msra.mxu0 0
      %1088 = vmatprep.subr.bf16.mxu0 0
      %1089 = vmatpush1.bf16.msra.mxu0 0
      %1090 = vmatprep.subr.bf16.mxu0 0
      %1091 = vmatpush1.bf16.msra.mxu0 0
      %1092 = vmatprep.subr.bf16.mxu0 0
      %1093 = vmatpush1.bf16.msra.mxu0 0
      %1094 = vmatprep.subr.bf16.mxu0 0
      %1095 = vmatpush1.bf16.msra.mxu0 0
      %1096 = vmatprep.mubr.bf16.mxu0 0
      %1097 = vmatmul.mubr.bf16.gmra.mrb[0].mxu0 %v906
      %v1098 = vpop.f32.mrb[0].mxu0
      %v1099 = vadd.f32 %v888, %v1098
      %v1100 = vpop.f32.mrb[0].mxu0
      %v1101 = vpop.f32.mrb[0].mxu0
      %v1102 = vpop.f32.mrb[0].mxu0
      %1103 = vdwg.mxu0
      %v1104 = vld [vmem:[%s6] sm:$0xf]
      %v1105 = vld [vmem:[%s6 + $0x4] sm:$0xf]
      %v1106 = vld [vmem:[%s6 + $0x8] sm:$0xf]
      %v1107 = vld [vmem:[%s6 + $0xc] sm:$0xf]
      %v1108 = vld [vmem:[%s6 + $0x10] sm:$0xf]
      %v1109 = vld [vmem:[%s6 + $0x14] sm:$0xf]
      %v1110 = vld [vmem:[%s6 + $0x18] sm:$0xf]
      %v1111 = vld [vmem:[%s6 + $0x1c] sm:$0xf]
      %v1112 = vld [vmem:[%s6 + $0x20] sm:$0xf]
      %v1113 = vld [vmem:[%s6 + $0x24] sm:$0xf]
      %v1114 = vld [vmem:[%s6 + $0x28] sm:$0xf]
      %v1115 = vld [vmem:[%s6 + $0x2c] sm:$0xf]
      %v1116 = vld [vmem:[%s6 + $0x30] sm:$0xf]
      %v1117 = vld [vmem:[%s6 + $0x34] sm:$0xf]
      %v1118 = vld [vmem:[%s6 + $0x38] sm:$0xf]
      %v1119 = vld [vmem:[%s6 + $0x3c] sm:$0xf]
      %v1120 = vld [vmem:[%s7] sm:$0x1]
      %v1121 = vld [vmem:[%s7 + $0x1] sm:$0x1]
      %v1122 = vld [vmem:[%s7 + $0x2] sm:$0x1]
      %v1123 = vld [vmem:[%s7 + $0x3] sm:$0x1]
      %v1128 = vlaneseq
      %v1129 = vshrl.u32 %v1128, 7
      %v1130 = vsub.s32 0, %v1129
      %v1131 = vrot.slane %v1120, %v1130
      %v1132 = vlaneseq
      %v1133 = vshrl.u32 %v1132, 7
      %v1134 = vsub.s32 0, %v1133
      %v1135 = vrot.slane %v1121, %v1134
      %v1136 = vlaneseq
      %v1137 = vshrl.u32 %v1136, 7
      %v1138 = vsub.s32 0, %v1137
      %v1139 = vrot.slane %v1122, %v1138
      %v1140 = vlaneseq
      %v1141 = vshrl.u32 %v1140, 7
      %v1142 = vsub.s32 0, %v1141
      %v1143 = vrot.slane %v1123, %v1142
      %v1152 = vunpack.c.l.b16 %v1104
      %v1153 = vunpack.c.l.b16 %v1105
      %v1154 = vunpack.c.l.b16 %v1106
      %v1155 = vunpack.c.l.b16 %v1107
      %v1156 = vpack.c.b16 %v1153, %v1152
      %v1157 = vpack.c.b16 %v1155, %v1154
      %1160 = vmatprep.subr.bf16.mxu0 0
      %1161 = vmatpush1.bf16.msra.mxu0 %v1156
      %1162 = vmatprep.subr.bf16.mxu0 0
      %1163 = vmatpush1.bf16.msra.mxu0 %v1157
      %1164 = vmatprep.subr.bf16.mxu0 0
      %1165 = vmatpush1.bf16.msra.mxu0 0
      %1166 = vmatprep.subr.bf16.mxu0 0
      %1167 = vmatpush1.bf16.msra.mxu0 0
      %1168 = vmatprep.subr.bf16.mxu0 0
      %1169 = vmatpush1.bf16.msra.mxu0 0
      %1170 = vmatprep.subr.bf16.mxu0 0
      %1171 = vmatpush1.bf16.msra.mxu0 0
      %1172 = vmatprep.subr.bf16.mxu0 0
      %1173 = vmatpush1.bf16.msra.mxu0 0
      %1174 = vmatprep.subr.bf16.mxu0 0
      %1175 = vmatpush1.bf16.msra.mxu0 0
      %1176 = vmatprep.subr.bf16.mxu0 0
      %1177 = vmatpush1.bf16.msra.mxu0 0
      %1178 = vmatprep.subr.bf16.mxu0 0
      %1179 = vmatpush1.bf16.msra.mxu0 0
      %1180 = vmatprep.subr.bf16.mxu0 0
      %1181 = vmatpush1.bf16.msra.mxu0 0
      %1182 = vmatprep.subr.bf16.mxu0 0
      %1183 = vmatpush1.bf16.msra.mxu0 0
      %1184 = vmatprep.subr.bf16.mxu0 0
      %1185 = vmatpush1.bf16.msra.mxu0 0
      %1186 = vmatprep.subr.bf16.mxu0 0
      %1187 = vmatpush1.bf16.msra.mxu0 0
      %1188 = vmatprep.subr.bf16.mxu0 0
      %1189 = vmatpush1.bf16.msra.mxu0 0
      %1190 = vmatprep.subr.bf16.mxu0 0
      %1191 = vmatpush1.bf16.msra.mxu0 0
      %1192 = vmatprep.mubr.bf16.mxu0 0
      %1193 = vmatmul.mubr.bf16.gmra.mrb[0].mxu0 %v906
      %v1194 = vpop.f32.mrb[0].mxu0
      %v1195 = vadd.f32 %v1131, %v1194
      %v1196 = vpop.f32.mrb[0].mxu0
      %v1197 = vpop.f32.mrb[0].mxu0
      %v1198 = vpop.f32.mrb[0].mxu0
      %1199 = vdwg.mxu0
      %v1204 = vunpack.c.l.b16 %v1108
      %v1205 = vunpack.c.l.b16 %v1109
      %v1206 = vunpack.c.l.b16 %v1110
      %v1207 = vunpack.c.l.b16 %v1111
      %v1208 = vpack.c.b16 %v1205, %v1204
      %v1209 = vpack.c.b16 %v1207, %v1206
      %1212 = vmatprep.subr.bf16.mxu0 0
      %1213 = vmatpush1.bf16.msra.mxu0 %v1208
      %1214 = vmatprep.subr.bf16.mxu0 0
      %1215 = vmatpush1.bf16.msra.mxu0 %v1209
      %1216 = vmatprep.subr.bf16.mxu0 0
      %1217 = vmatpush1.bf16.msra.mxu0 0
      %1218 = vmatprep.subr.bf16.mxu0 0
      %1219 = vmatpush1.bf16.msra.mxu0 0
      %1220 = vmatprep.subr.bf16.mxu0 0
      %1221 = vmatpush1.bf16.msra.mxu0 0
      %1222 = vmatprep.subr.bf16.mxu0 0
      %1223 = vmatpush1.bf16.msra.mxu0 0
      %1224 = vmatprep.subr.bf16.mxu0 0
      %1225 = vmatpush1.bf16.msra.mxu0 0
      %1226 = vmatprep.subr.bf16.mxu0 0
      %1227 = vmatpush1.bf16.msra.mxu0 0
      %1228 = vmatprep.subr.bf16.mxu0 0
      %1229 = vmatpush1.bf16.msra.mxu0 0
      %1230 = vmatprep.subr.bf16.mxu0 0
      %1231 = vmatpush1.bf16.msra.mxu0 0
      %1232 = vmatprep.subr.bf16.mxu0 0
      %1233 = vmatpush1.bf16.msra.mxu0 0
      %1234 = vmatprep.subr.bf16.mxu0 0
      %1235 = vmatpush1.bf16.msra.mxu0 0
      %1236 = vmatprep.subr.bf16.mxu0 0
      %1237 = vmatpush1.bf16.msra.mxu0 0
      %1238 = vmatprep.subr.bf16.mxu0 0
      %1239 = vmatpush1.bf16.msra.mxu0 0
      %1240 = vmatprep.subr.bf16.mxu0 0
      %1241 = vmatpush1.bf16.msra.mxu0 0
      %1242 = vmatprep.subr.bf16.mxu0 0
      %1243 = vmatpush1.bf16.msra.mxu0 0
      %1244 = vmatprep.mubr.bf16.mxu0 0
      %1245 = vmatmul.mubr.bf16.gmra.mrb[0].mxu0 %v906
      %v1246 = vpop.f32.mrb[0].mxu0
      %v1247 = vadd.f32 %v1135, %v1246
      %v1248 = vpop.f32.mrb[0].mxu0
      %v1249 = vpop.f32.mrb[0].mxu0
      %v1250 = vpop.f32.mrb[0].mxu0
      %1251 = vdwg.mxu0
      %v1256 = vunpack.c.l.b16 %v1112
      %v1257 = vunpack.c.l.b16 %v1113
      %v1258 = vunpack.c.l.b16 %v1114
      %v1259 = vunpack.c.l.b16 %v1115
      %v1260 = vpack.c.b16 %v1257, %v1256
      %v1261 = vpack.c.b16 %v1259, %v1258
      %1264 = vmatprep.subr.bf16.mxu0 0
      %1265 = vmatpush1.bf16.msra.mxu0 %v1260
      %1266 = vmatprep.subr.bf16.mxu0 0
      %1267 = vmatpush1.bf16.msra.mxu0 %v1261
      %1268 = vmatprep.subr.bf16.mxu0 0
      %1269 = vmatpush1.bf16.msra.mxu0 0
      %1270 = vmatprep.subr.bf16.mxu0 0
      %1271 = vmatpush1.bf16.msra.mxu0 0
      %1272 = vmatprep.subr.bf16.mxu0 0
      %1273 = vmatpush1.bf16.msra.mxu0 0
      %1274 = vmatprep.subr.bf16.mxu0 0
      %1275 = vmatpush1.bf16.msra.mxu0 0
      %1276 = vmatprep.subr.bf16.mxu0 0
      %1277 = vmatpush1.bf16.msra.mxu0 0
      %1278 = vmatprep.subr.bf16.mxu0 0
      %1279 = vmatpush1.bf16.msra.mxu0 0
      %1280 = vmatprep.subr.bf16.mxu0 0
      %1281 = vmatpush1.bf16.msra.mxu0 0
      %1282 = vmatprep.subr.bf16.mxu0 0
      %1283 = vmatpush1.bf16.msra.mxu0 0
      %1284 = vmatprep.subr.bf16.mxu0 0
      %1285 = vmatpush1.bf16.msra.mxu0 0
      %1286 = vmatprep.subr.bf16.mxu0 0
      %1287 = vmatpush1.bf16.msra.mxu0 0
      %1288 = vmatprep.subr.bf16.mxu0 0
      %1289 = vmatpush1.bf16.msra.mxu0 0
      %1290 = vmatprep.subr.bf16.mxu0 0
      %1291 = vmatpush1.bf16.msra.mxu0 0
      %1292 = vmatprep.subr.bf16.mxu0 0
      %1293 = vmatpush1.bf16.msra.mxu0 0
      %1294 = vmatprep.subr.bf16.mxu0 0
      %1295 = vmatpush1.bf16.msra.mxu0 0
      %1296 = vmatprep.mubr.bf16.mxu0 0
      %1297 = vmatmul.mubr.bf16.gmra.mrb[0].mxu0 %v906
      %v1298 = vpop.f32.mrb[0].mxu0
      %v1299 = vadd.f32 %v1139, %v1298
      %v1300 = vpop.f32.mrb[0].mxu0
      %v1301 = vpop.f32.mrb[0].mxu0
      %v1302 = vpop.f32.mrb[0].mxu0
      %1303 = vdwg.mxu0
      %v1308 = vunpack.c.l.b16 %v1116
      %v1309 = vunpack.c.l.b16 %v1117
      %v1310 = vunpack.c.l.b16 %v1118
      %v1311 = vunpack.c.l.b16 %v1119
      %v1312 = vpack.c.b16 %v1309, %v1308
      %v1313 = vpack.c.b16 %v1311, %v1310
      %1316 = vmatprep.subr.bf16.mxu0 0
      %1317 = vmatpush1.bf16.msra.mxu0 %v1312
      %1318 = vmatprep.subr.bf16.mxu0 0
      %1319 = vmatpush1.bf16.msra.mxu0 %v1313
      %1320 = vmatprep.subr.bf16.mxu0 0
      %1321 = vmatpush1.bf16.msra.mxu0 0
      %1322 = vmatprep.subr.bf16.mxu0 0
      %1323 = vmatpush1.bf16.msra.mxu0 0
      %1324 = vmatprep.subr.bf16.mxu0 0
      %1325 = vmatpush1.bf16.msra.mxu0 0
      %1326 = vmatprep.subr.bf16.mxu0 0
      %1327 = vmatpush1.bf16.msra.mxu0 0
      %1328 = vmatprep.subr.bf16.mxu0 0
      %1329 = vmatpush1.bf16.msra.mxu0 0
      %1330 = vmatprep.subr.bf16.mxu0 0
      %1331 = vmatpush1.bf16.msra.mxu0 0
      %1332 = vmatprep.subr.bf16.mxu0 0
      %1333 = vmatpush1.bf16.msra.mxu0 0
      %1334 = vmatprep.subr.bf16.mxu0 0
      %1335 = vmatpush1.bf16.msra.mxu0 0
      %1336 = vmatprep.subr.bf16.mxu0 0
      %1337 = vmatpush1.bf16.msra.mxu0 0
      %1338 = vmatprep.subr.bf16.mxu0 0
      %1339 = vmatpush1.bf16.msra.mxu0 0
      %1340 = vmatprep.subr.bf16.mxu0 0
      %1341 = vmatpush1.bf16.msra.mxu0 0
      %1342 = vmatprep.subr.bf16.mxu0 0
      %1343 = vmatpush1.bf16.msra.mxu0 0
      %1344 = vmatprep.subr.bf16.mxu0 0
      %1345 = vmatpush1.bf16.msra.mxu0 0
      %1346 = vmatprep.subr.bf16.mxu0 0
      %1347 = vmatpush1.bf16.msra.mxu0 0
      %1348 = vmatprep.mubr.bf16.mxu0 0
      %1349 = vmatmul.mubr.bf16.gmra.mrb[0].mxu0 %v906
      %v1350 = vpop.f32.mrb[0].mxu0
      %v1351 = vadd.f32 %v1143, %v1350
      %v1352 = vpop.f32.mrb[0].mxu0
      %v1353 = vpop.f32.mrb[0].mxu0
      %v1354 = vpop.f32.mrb[0].mxu0
      %1355 = vdwg.mxu0
      %v1356 = vpack.c.bf16 %v688, %v688
      %v1357 = vpack.c.bf16 %v740, %v740
      %v1358 = vpack.c.bf16 %v792, %v792
      %v1359 = vpack.c.bf16 %v844, %v844
      %v1360 = vpack.c.bf16 %v943, %v943
      %v1361 = vpack.c.bf16 %v995, %v995
      %v1362 = vpack.c.bf16 %v1047, %v1047
      %v1363 = vpack.c.bf16 %v1099, %v1099
      %vm1364 = vcmask 64512
      %v1366 = vsel %vm1364, %v1356, 0
      %v1369 = vsel %vm1364, %v1360, 0
      %1371 = vmatprep.subr.bf16.mxu0 0
      %1372 = vmatpush1.bf16.xpose.msra.mxu0 %v1369
      %1373 = vmatprep.subr.bf16.mxu0 0
      %1374 = vmatpush1.bf16.xpose.msra.mxu0 0
      %1375 = vmatprep.subr.bf16.mxu0 0
      %1376 = vmatpush1.bf16.xpose.msra.mxu0 0
      %1377 = vmatprep.subr.bf16.mxu0 0
      %1378 = vmatpush1.bf16.xpose.msra.mxu0 0
      %1379 = vmatprep.subr.bf16.mxu0 0
      %1380 = vmatpush1.bf16.xpose.msra.mxu0 0
      %1381 = vmatprep.subr.bf16.mxu0 0
      %1382 = vmatpush1.bf16.xpose.msra.mxu0 0
      %1383 = vmatprep.subr.bf16.mxu0 0
      %1384 = vmatpush1.bf16.xpose.msra.mxu0 0
      %1385 = vmatprep.subr.bf16.mxu0 0
      %1386 = vmatpush1.bf16.xpose.msra.mxu0 0
      %1387 = vmatprep.subr.bf16.mxu0 0
      %1388 = vmatpush1.bf16.xpose.msra.mxu0 0
      %1389 = vmatprep.subr.bf16.mxu0 0
      %1390 = vmatpush1.bf16.xpose.msra.mxu0 0
      %1391 = vmatprep.subr.bf16.mxu0 0
      %1392 = vmatpush1.bf16.xpose.msra.mxu0 0
      %1393 = vmatprep.subr.bf16.mxu0 0
      %1394 = vmatpush1.bf16.xpose.msra.mxu0 0
      %1395 = vmatprep.subr.bf16.mxu0 0
      %1396 = vmatpush1.bf16.xpose.msra.mxu0 0
      %1397 = vmatprep.subr.bf16.mxu0 0
      %1398 = vmatpush1.bf16.xpose.msra.mxu0 0
      %1399 = vmatprep.subr.bf16.mxu0 0
      %1400 = vmatpush1.bf16.xpose.msra.mxu0 0
      %1401 = vmatprep.subr.bf16.mxu0 0
      %1402 = vmatpush1.bf16.xpose.msra.mxu0 0
      %1403 = vmatprep.mubr.bf16.mxu0 0
      %1404 = vmatmul.mubr.bf16.gmra.mrb[0].mxu0 %v1366
      %v1405 = vpop.f32.mrb[0].mxu0
      %v1406 = vadd.f32 0.0, %v1405
      %v1407 = vpop.f32.mrb[0].mxu0
      %v1408 = vpop.f32.mrb[0].mxu0
      %v1409 = vpop.f32.mrb[0].mxu0
      %1410 = vdwg.mxu0
      %v1412 = vsel %vm1364, %v1357, 0
      %v1415 = vsel %vm1364, %v1361, 0
      %1417 = vmatprep.subr.bf16.mxu0 0
      %1418 = vmatpush1.bf16.xpose.msra.mxu0 %v1415
      %1419 = vmatprep.subr.bf16.mxu0 0
      %1420 = vmatpush1.bf16.xpose.msra.mxu0 0
      %1421 = vmatprep.subr.bf16.mxu0 0
      %1422 = vmatpush1.bf16.xpose.msra.mxu0 0
      %1423 = vmatprep.subr.bf16.mxu0 0
      %1424 = vmatpush1.bf16.xpose.msra.mxu0 0
      %1425 = vmatprep.subr.bf16.mxu0 0
      %1426 = vmatpush1.bf16.xpose.msra.mxu0 0
      %1427 = vmatprep.subr.bf16.mxu0 0
      %1428 = vmatpush1.bf16.xpose.msra.mxu0 0
      %1429 = vmatprep.subr.bf16.mxu0 0
      %1430 = vmatpush1.bf16.xpose.msra.mxu0 0
      %1431 = vmatprep.subr.bf16.mxu0 0
      %1432 = vmatpush1.bf16.xpose.msra.mxu0 0
      %1433 = vmatprep.subr.bf16.mxu0 0
      %1434 = vmatpush1.bf16.xpose.msra.mxu0 0
      %1435 = vmatprep.subr.bf16.mxu0 0
      %1436 = vmatpush1.bf16.xpose.msra.mxu0 0
      %1437 = vmatprep.subr.bf16.mxu0 0
      %1438 = vmatpush1.bf16.xpose.msra.mxu0 0
      %1439 = vmatprep.subr.bf16.mxu0 0
      %1440 = vmatpush1.bf16.xpose.msra.mxu0 0
      %1441 = vmatprep.subr.bf16.mxu0 0
      %1442 = vmatpush1.bf16.xpose.msra.mxu0 0
      %1443 = vmatprep.subr.bf16.mxu0 0
      %1444 = vmatpush1.bf16.xpose.msra.mxu0 0
      %1445 = vmatprep.subr.bf16.mxu0 0
      %1446 = vmatpush1.bf16.xpose.msra.mxu0 0
      %1447 = vmatprep.subr.bf16.mxu0 0
      %1448 = vmatpush1.bf16.xpose.msra.mxu0 0
      %1449 = vmatprep.mubr.bf16.mxu0 0
      %1450 = vmatmul.mubr.bf16.gmra.mrb[0].mxu0 %v1412
      %v1451 = vpop.f32.mrb[0].mxu0
      %v1452 = vadd.f32 0.0, %v1451
      %v1453 = vpop.f32.mrb[0].mxu0
      %v1454 = vpop.f32.mrb[0].mxu0
      %v1455 = vpop.f32.mrb[0].mxu0
      %1456 = vdwg.mxu0
      %v1458 = vsel %vm1364, %v1358, 0
      %v1461 = vsel %vm1364, %v1362, 0
      %1463 = vmatprep.subr.bf16.mxu0 0
      %1464 = vmatpush1.bf16.xpose.msra.mxu0 %v1461
      %1465 = vmatprep.subr.bf16.mxu0 0
      %1466 = vmatpush1.bf16.xpose.msra.mxu0 0
      %1467 = vmatprep.subr.bf16.mxu0 0
      %1468 = vmatpush1.bf16.xpose.msra.mxu0 0
      %1469 = vmatprep.subr.bf16.mxu0 0
      %1470 = vmatpush1.bf16.xpose.msra.mxu0 0
      %1471 = vmatprep.subr.bf16.mxu0 0
      %1472 = vmatpush1.bf16.xpose.msra.mxu0 0
      %1473 = vmatprep.subr.bf16.mxu0 0
      %1474 = vmatpush1.bf16.xpose.msra.mxu0 0
      %1475 = vmatprep.subr.bf16.mxu0 0
      %1476 = vmatpush1.bf16.xpose.msra.mxu0 0
      %1477 = vmatprep.subr.bf16.mxu0 0
      %1478 = vmatpush1.bf16.xpose.msra.mxu0 0
      %1479 = vmatprep.subr.bf16.mxu0 0
      %1480 = vmatpush1.bf16.xpose.msra.mxu0 0
      %1481 = vmatprep.subr.bf16.mxu0 0
      %1482 = vmatpush1.bf16.xpose.msra.mxu0 0
      %1483 = vmatprep.subr.bf16.mxu0 0
      %1484 = vmatpush1.bf16.xpose.msra.mxu0 0
      %1485 = vmatprep.subr.bf16.mxu0 0
      %1486 = vmatpush1.bf16.xpose.msra.mxu0 0
      %1487 = vmatprep.subr.bf16.mxu0 0
      %1488 = vmatpush1.bf16.xpose.msra.mxu0 0
      %1489 = vmatprep.subr.bf16.mxu0 0
      %1490 = vmatpush1.bf16.xpose.msra.mxu0 0
      %1491 = vmatprep.subr.bf16.mxu0 0
      %1492 = vmatpush1.bf16.xpose.msra.mxu0 0
      %1493 = vmatprep.subr.bf16.mxu0 0
      %1494 = vmatpush1.bf16.xpose.msra.mxu0 0
      %1495 = vmatprep.mubr.bf16.mxu0 0
      %1496 = vmatmul.mubr.bf16.gmra.mrb[0].mxu0 %v1458
      %v1497 = vpop.f32.mrb[0].mxu0
      %v1498 = vadd.f32 0.0, %v1497
      %v1499 = vpop.f32.mrb[0].mxu0
      %v1500 = vpop.f32.mrb[0].mxu0
      %v1501 = vpop.f32.mrb[0].mxu0
      %1502 = vdwg.mxu0
      %v1504 = vsel %vm1364, %v1359, 0
      %v1507 = vsel %vm1364, %v1363, 0
      %1509 = vmatprep.subr.bf16.mxu0 0
      %1510 = vmatpush1.bf16.xpose.msra.mxu0 %v1507
      %1511 = vmatprep.subr.bf16.mxu0 0
      %1512 = vmatpush1.bf16.xpose.msra.mxu0 0
      %1513 = vmatprep.subr.bf16.mxu0 0
      %1514 = vmatpush1.bf16.xpose.msra.mxu0 0
      %1515 = vmatprep.subr.bf16.mxu0 0
      %1516 = vmatpush1.bf16.xpose.msra.mxu0 0
      %1517 = vmatprep.subr.bf16.mxu0 0
      %1518 = vmatpush1.bf16.xpose.msra.mxu0 0
      %1519 = vmatprep.subr.bf16.mxu0 0
      %1520 = vmatpush1.bf16.xpose.msra.mxu0 0
      %1521 = vmatprep.subr.bf16.mxu0 0
      %1522 = vmatpush1.bf16.xpose.msra.mxu0 0
      %1523 = vmatprep.subr.bf16.mxu0 0
      %1524 = vmatpush1.bf16.xpose.msra.mxu0 0
      %1525 = vmatprep.subr.bf16.mxu0 0
      %1526 = vmatpush1.bf16.xpose.msra.mxu0 0
      %1527 = vmatprep.subr.bf16.mxu0 0
      %1528 = vmatpush1.bf16.xpose.msra.mxu0 0
      %1529 = vmatprep.subr.bf16.mxu0 0
      %1530 = vmatpush1.bf16.xpose.msra.mxu0 0
      %1531 = vmatprep.subr.bf16.mxu0 0
      %1532 = vmatpush1.bf16.xpose.msra.mxu0 0
      %1533 = vmatprep.subr.bf16.mxu0 0
      %1534 = vmatpush1.bf16.xpose.msra.mxu0 0
      %1535 = vmatprep.subr.bf16.mxu0 0
      %1536 = vmatpush1.bf16.xpose.msra.mxu0 0
      %1537 = vmatprep.subr.bf16.mxu0 0
      %1538 = vmatpush1.bf16.xpose.msra.mxu0 0
      %1539 = vmatprep.subr.bf16.mxu0 0
      %1540 = vmatpush1.bf16.xpose.msra.mxu0 0
      %1541 = vmatprep.mubr.bf16.mxu0 0
      %1542 = vmatmul.mubr.bf16.gmra.mrb[0].mxu0 %v1504
      %v1543 = vpop.f32.mrb[0].mxu0
      %v1544 = vadd.f32 0.0, %v1543
      %v1545 = vpop.f32.mrb[0].mxu0
      %v1546 = vpop.f32.mrb[0].mxu0
      %v1547 = vpop.f32.mrb[0].mxu0
      %1548 = vdwg.mxu0
      %v1549 = vmul.f32 %v1406, 0.35355338
      %v1550 = vmul.f32 %v1452, 0.35355338
      %v1551 = vmul.f32 %v1498, 0.35355338
      %v1552 = vmul.f32 %v1544, 0.35355338
      %v1553 = vsel %vm1364, %v1549, -inf
      %1554 = vmax.xlane.f32.xlu0 %v1553
      %v1555 = vpop.xlane.xlu0 %1554
      %v1556 = vsel %vm1364, %v1550, -inf
      %1557 = vmax.xlane.f32.xlu0 %v1556
      %v1558 = vpop.xlane.xlu0 %1557
      %v1559 = vsel %vm1364, %v1551, -inf
      %1560 = vmax.xlane.f32.xlu0 %v1559
      %v1561 = vpop.xlane.xlu0 %1560
      %v1562 = vsel %vm1364, %v1552, -inf
      %1563 = vmax.xlane.f32.xlu0 %v1562
      %v1564 = vpop.xlane.xlu0 %1563
      %v1565 = vsub.f32 %v1549, %v1555
      %v1566 = vsub.f32 %v1550, %v1558
      %v1567 = vsub.f32 %v1551, %v1561
      %v1568 = vsub.f32 %v1552, %v1564
      %v1569 = vmul.f32 %v1565, 1.442695
      %v1570 = vpow.pop %v1569
      %v1571 = vmul.f32 %v1566, 1.442695
      %v1572 = vpow.pop %v1571
      %v1573 = vmul.f32 %v1567, 1.442695
      %v1574 = vpow.pop %v1573
      %v1575 = vmul.f32 %v1568, 1.442695
      %v1576 = vpow.pop %v1575
      %v1577 = vsel %vm1364, %v1570, 0.0
      %1578 = vadd.xlane.f32.xlu0 %v1577
      %v1579 = vpop.xlane.xlu0 %1578
      %v1580 = vsel %vm1364, %v1572, 0.0
      %1581 = vadd.xlane.f32.xlu0 %v1580
      %v1582 = vpop.xlane.xlu0 %1581
      %v1583 = vsel %vm1364, %v1574, 0.0
      %1584 = vadd.xlane.f32.xlu0 %v1583
      %v1585 = vpop.xlane.xlu0 %1584
      %v1586 = vsel %vm1364, %v1576, 0.0
      %1587 = vadd.xlane.f32.xlu0 %v1586
      %v1588 = vpop.xlane.xlu0 %1587
      %v1589 = vrcp.pop %v1579
      %v1590 = vrcp.pop %v1582
      %v1591 = vrcp.pop %v1585
      %v1592 = vrcp.pop %v1588
      %v1593 = vmul.f32 %v1570, %v1589
      %v1594 = vmul.f32 %v1572, %v1590
      %v1595 = vmul.f32 %v1574, %v1591
      %v1596 = vmul.f32 %v1576, %v1592
      %v1597 = vpack.c.bf16 %v1593, %v1593
      %v1598 = vpack.c.bf16 %v1594, %v1594
      %v1599 = vpack.c.bf16 %v1595, %v1595
      %v1600 = vpack.c.bf16 %v1596, %v1596
      %v1601 = vpack.c.bf16 %v1195, %v1195
      %v1602 = vpack.c.bf16 %v1247, %v1247
      %v1603 = vpack.c.bf16 %v1299, %v1299
      %v1604 = vpack.c.bf16 %v1351, %v1351
      %v1606 = vsel %vm1364, %v1597, 0
      %vm1608 = vcmask 1043456
      %v1610 = vsel %vm1608, %v1601, 0
      %1612 = vmatprep.subr.bf16.mxu0 0
      %1613 = vmatpush1.bf16.msra.mxu0 %v1610
      %1614 = vmatprep.subr.bf16.mxu0 0
      %1615 = vmatpush1.bf16.msra.mxu0 0
      %1616 = vmatprep.subr.bf16.mxu0 0
      %1617 = vmatpush1.bf16.msra.mxu0 0
      %1618 = vmatprep.subr.bf16.mxu0 0
      %1619 = vmatpush1.bf16.msra.mxu0 0
      %1620 = vmatprep.subr.bf16.mxu0 0
      %1621 = vmatpush1.bf16.msra.mxu0 0
      %1622 = vmatprep.subr.bf16.mxu0 0
      %1623 = vmatpush1.bf16.msra.mxu0 0
      %1624 = vmatprep.subr.bf16.mxu0 0
      %1625 = vmatpush1.bf16.msra.mxu0 0
      %1626 = vmatprep.subr.bf16.mxu0 0
      %1627 = vmatpush1.bf16.msra.mxu0 0
      %1628 = vmatprep.subr.bf16.mxu0 0
      %1629 = vmatpush1.bf16.msra.mxu0 0
      %1630 = vmatprep.subr.bf16.mxu0 0
      %1631 = vmatpush1.bf16.msra.mxu0 0
      %1632 = vmatprep.subr.bf16.mxu0 0
      %1633 = vmatpush1.bf16.msra.mxu0 0
      %1634 = vmatprep.subr.bf16.mxu0 0
      %1635 = vmatpush1.bf16.msra.mxu0 0
      %1636 = vmatprep.subr.bf16.mxu0 0
      %1637 = vmatpush1.bf16.msra.mxu0 0
      %1638 = vmatprep.subr.bf16.mxu0 0
      %1639 = vmatpush1.bf16.msra.mxu0 0
      %1640 = vmatprep.subr.bf16.mxu0 0
      %1641 = vmatpush1.bf16.msra.mxu0 0
      %1642 = vmatprep.subr.bf16.mxu0 0
      %1643 = vmatpush1.bf16.msra.mxu0 0
      %1644 = vmatprep.mubr.bf16.mxu0 0
      %1645 = vmatmul.mubr.bf16.gmra.mrb[0].mxu0 %v1606
      %v1646 = vpop.f32.mrb[0].mxu0
      %v1647 = vadd.f32 0.0, %v1646
      %v1648 = vpop.f32.mrb[0].mxu0
      %v1649 = vpop.f32.mrb[0].mxu0
      %v1650 = vpop.f32.mrb[0].mxu0
      %1651 = vdwg.mxu0
      %v1653 = vsel %vm1364, %v1598, 0
      %v1656 = vsel %vm1608, %v1602, 0
      %1658 = vmatprep.subr.bf16.mxu0 0
      %1659 = vmatpush1.bf16.msra.mxu0 %v1656
      %1660 = vmatprep.subr.bf16.mxu0 0
      %1661 = vmatpush1.bf16.msra.mxu0 0
      %1662 = vmatprep.subr.bf16.mxu0 0
      %1663 = vmatpush1.bf16.msra.mxu0 0
      %1664 = vmatprep.subr.bf16.mxu0 0
      %1665 = vmatpush1.bf16.msra.mxu0 0
      %1666 = vmatprep.subr.bf16.mxu0 0
      %1667 = vmatpush1.bf16.msra.mxu0 0
      %1668 = vmatprep.subr.bf16.mxu0 0
      %1669 = vmatpush1.bf16.msra.mxu0 0
      %1670 = vmatprep.subr.bf16.mxu0 0
      %1671 = vmatpush1.bf16.msra.mxu0 0
      %1672 = vmatprep.subr.bf16.mxu0 0
      %1673 = vmatpush1.bf16.msra.mxu0 0
      %1674 = vmatprep.subr.bf16.mxu0 0
      %1675 = vmatpush1.bf16.msra.mxu0 0
      %1676 = vmatprep.subr.bf16.mxu0 0
      %1677 = vmatpush1.bf16.msra.mxu0 0
      %1678 = vmatprep.subr.bf16.mxu0 0
      %1679 = vmatpush1.bf16.msra.mxu0 0
      %1680 = vmatprep.subr.bf16.mxu0 0
      %1681 = vmatpush1.bf16.msra.mxu0 0
      %1682 = vmatprep.subr.bf16.mxu0 0
      %1683 = vmatpush1.bf16.msra.mxu0 0
      %1684 = vmatprep.subr.bf16.mxu0 0
      %1685 = vmatpush1.bf16.msra.mxu0 0
      %1686 = vmatprep.subr.bf16.mxu0 0
      %1687 = vmatpush1.bf16.msra.mxu0 0
      %1688 = vmatprep.subr.bf16.mxu0 0
      %1689 = vmatpush1.bf16.msra.mxu0 0
      %1690 = vmatprep.mubr.bf16.mxu0 0
      %1691 = vmatmul.mubr.bf16.gmra.mrb[0].mxu0 %v1653
      %v1692 = vpop.f32.mrb[0].mxu0
      %v1693 = vadd.f32 0.0, %v1692
      %v1694 = vpop.f32.mrb[0].mxu0
      %v1695 = vpop.f32.mrb[0].mxu0
      %v1696 = vpop.f32.mrb[0].mxu0
      %1697 = vdwg.mxu0
      %v1699 = vsel %vm1364, %v1599, 0
      %v1702 = vsel %vm1608, %v1603, 0
      %1704 = vmatprep.subr.bf16.mxu0 0
      %1705 = vmatpush1.bf16.msra.mxu0 %v1702
      %1706 = vmatprep.subr.bf16.mxu0 0
      %1707 = vmatpush1.bf16.msra.mxu0 0
      %1708 = vmatprep.subr.bf16.mxu0 0
      %1709 = vmatpush1.bf16.msra.mxu0 0
      %1710 = vmatprep.subr.bf16.mxu0 0
      %1711 = vmatpush1.bf16.msra.mxu0 0
      %1712 = vmatprep.subr.bf16.mxu0 0
      %1713 = vmatpush1.bf16.msra.mxu0 0
      %1714 = vmatprep.subr.bf16.mxu0 0
      %1715 = vmatpush1.bf16.msra.mxu0 0
      %1716 = vmatprep.subr.bf16.mxu0 0
      %1717 = vmatpush1.bf16.msra.mxu0 0
      %1718 = vmatprep.subr.bf16.mxu0 0
      %1719 = vmatpush1.bf16.msra.mxu0 0
      %1720 = vmatprep.subr.bf16.mxu0 0
      %1721 = vmatpush1.bf16.msra.mxu0 0
      %1722 = vmatprep.subr.bf16.mxu0 0
      %1723 = vmatpush1.bf16.msra.mxu0 0
      %1724 = vmatprep.subr.bf16.mxu0 0
      %1725 = vmatpush1.bf16.msra.mxu0 0
      %1726 = vmatprep.subr.bf16.mxu0 0
      %1727 = vmatpush1.bf16.msra.mxu0 0
      %1728 = vmatprep.subr.bf16.mxu0 0
      %1729 = vmatpush1.bf16.msra.mxu0 0
      %1730 = vmatprep.subr.bf16.mxu0 0
      %1731 = vmatpush1.bf16.msra.mxu0 0
      %1732 = vmatprep.subr.bf16.mxu0 0
      %1733 = vmatpush1.bf16.msra.mxu0 0
      %1734 = vmatprep.subr.bf16.mxu0 0
      %1735 = vmatpush1.bf16.msra.mxu0 0
      %1736 = vmatprep.mubr.bf16.mxu0 0
      %1737 = vmatmul.mubr.bf16.gmra.mrb[0].mxu0 %v1699
      %v1738 = vpop.f32.mrb[0].mxu0
      %v1739 = vadd.f32 0.0, %v1738
      %v1740 = vpop.f32.mrb[0].mxu0
      %v1741 = vpop.f32.mrb[0].mxu0
      %v1742 = vpop.f32.mrb[0].mxu0
      %1743 = vdwg.mxu0
      %v1745 = vsel %vm1364, %v1600, 0
      %v1748 = vsel %vm1608, %v1604, 0
      %1750 = vmatprep.subr.bf16.mxu0 0
      %1751 = vmatpush1.bf16.msra.mxu0 %v1748
      %1752 = vmatprep.subr.bf16.mxu0 0
      %1753 = vmatpush1.bf16.msra.mxu0 0
      %1754 = vmatprep.subr.bf16.mxu0 0
      %1755 = vmatpush1.bf16.msra.mxu0 0
      %1756 = vmatprep.subr.bf16.mxu0 0
      %1757 = vmatpush1.bf16.msra.mxu0 0
      %1758 = vmatprep.subr.bf16.mxu0 0
      %1759 = vmatpush1.bf16.msra.mxu0 0
      %1760 = vmatprep.subr.bf16.mxu0 0
      %1761 = vmatpush1.bf16.msra.mxu0 0
      %1762 = vmatprep.subr.bf16.mxu0 0
      %1763 = vmatpush1.bf16.msra.mxu0 0
      %1764 = vmatprep.subr.bf16.mxu0 0
      %1765 = vmatpush1.bf16.msra.mxu0 0
      %1766 = vmatprep.subr.bf16.mxu0 0
      %1767 = vmatpush1.bf16.msra.mxu0 0
      %1768 = vmatprep.subr.bf16.mxu0 0
      %1769 = vmatpush1.bf16.msra.mxu0 0
      %1770 = vmatprep.subr.bf16.mxu0 0
      %1771 = vmatpush1.bf16.msra.mxu0 0
      %1772 = vmatprep.subr.bf16.mxu0 0
      %1773 = vmatpush1.bf16.msra.mxu0 0
      %1774 = vmatprep.subr.bf16.mxu0 0
      %1775 = vmatpush1.bf16.msra.mxu0 0
      %1776 = vmatprep.subr.bf16.mxu0 0
      %1777 = vmatpush1.bf16.msra.mxu0 0
      %1778 = vmatprep.subr.bf16.mxu0 0
      %1779 = vmatpush1.bf16.msra.mxu0 0
      %1780 = vmatprep.subr.bf16.mxu0 0
      %1781 = vmatpush1.bf16.msra.mxu0 0
      %1782 = vmatprep.mubr.bf16.mxu0 0
      %1783 = vmatmul.mubr.bf16.gmra.mrb[0].mxu0 %v1745
      %v1784 = vpop.f32.mrb[0].mxu0
      %v1785 = vadd.f32 0.0, %v1784
      %v1786 = vpop.f32.mrb[0].mxu0
      %v1787 = vpop.f32.mrb[0].mxu0
      %v1788 = vpop.f32.mrb[0].mxu0
      %1789 = vdwg.mxu0
      %v1790 = vpack.c.bf16 %v1647, %v1647
      %v1791 = vpack.c.bf16 %v1693, %v1693
      %v1792 = vpack.c.bf16 %v1739, %v1739
      %v1793 = vpack.c.bf16 %v1785, %v1785
      %v1794 = vld [vmem:[%s8] sm:$0xf]
      %v1795 = vld [vmem:[%s8 + $0x4] sm:$0xf]
      %v1796 = vld [vmem:[%s8 + $0x8] sm:$0xf]
      %v1797 = vld [vmem:[%s8 + $0xc] sm:$0xf]
      %v1799 = vsel %vm1364, %v1790, 0
      %v1802 = vsel %vm1608, %v1794, 0
      %1804 = vmatprep.subr.bf16.mxu0 0
      %1805 = vmatpush1.bf16.msra.mxu0 %v1802
      %1806 = vmatprep.subr.bf16.mxu0 0
      %1807 = vmatpush1.bf16.msra.mxu0 0
      %1808 = vmatprep.subr.bf16.mxu0 0
      %1809 = vmatpush1.bf16.msra.mxu0 0
      %1810 = vmatprep.subr.bf16.mxu0 0
      %1811 = vmatpush1.bf16.msra.mxu0 0
      %1812 = vmatprep.subr.bf16.mxu0 0
      %1813 = vmatpush1.bf16.msra.mxu0 0
      %1814 = vmatprep.subr.bf16.mxu0 0
      %1815 = vmatpush1.bf16.msra.mxu0 0
      %1816 = vmatprep.subr.bf16.mxu0 0
      %1817 = vmatpush1.bf16.msra.mxu0 0
      %1818 = vmatprep.subr.bf16.mxu0 0
      %1819 = vmatpush1.bf16.msra.mxu0 0
      %1820 = vmatprep.subr.bf16.mxu0 0
      %1821 = vmatpush1.bf16.msra.mxu0 0
      %1822 = vmatprep.subr.bf16.mxu0 0
      %1823 = vmatpush1.bf16.msra.mxu0 0
      %1824 = vmatprep.subr.bf16.mxu0 0
      %1825 = vmatpush1.bf16.msra.mxu0 0
      %1826 = vmatprep.subr.bf16.mxu0 0
      %1827 = vmatpush1.bf16.msra.mxu0 0
      %1828 = vmatprep.subr.bf16.mxu0 0
      %1829 = vmatpush1.bf16.msra.mxu0 0
      %1830 = vmatprep.subr.bf16.mxu0 0
      %1831 = vmatpush1.bf16.msra.mxu0 0
      %1832 = vmatprep.subr.bf16.mxu0 0
      %1833 = vmatpush1.bf16.msra.mxu0 0
      %1834 = vmatprep.subr.bf16.mxu0 0
      %1835 = vmatpush1.bf16.msra.mxu0 0
      %1836 = vmatprep.mubr.bf16.mxu0 0
      %1837 = vmatmul.mubr.bf16.gmra.mrb[0].mxu0 %v1799
      %v1838 = vpop.f32.mrb[0].mxu0
      %v1839 = vadd.f32 0.0, %v1838
      %v1840 = vpop.f32.mrb[0].mxu0
      %v1841 = vpop.f32.mrb[0].mxu0
      %v1842 = vpop.f32.mrb[0].mxu0
      %1843 = vdwg.mxu0
      %v1845 = vsel %vm1364, %v1791, 0
      %v1848 = vsel %vm1608, %v1795, 0
      %1850 = vmatprep.subr.bf16.mxu0 0
      %1851 = vmatpush1.bf16.msra.mxu0 %v1848
      %1852 = vmatprep.subr.bf16.mxu0 0
      %1853 = vmatpush1.bf16.msra.mxu0 0
      %1854 = vmatprep.subr.bf16.mxu0 0
      %1855 = vmatpush1.bf16.msra.mxu0 0
      %1856 = vmatprep.subr.bf16.mxu0 0
      %1857 = vmatpush1.bf16.msra.mxu0 0
      %1858 = vmatprep.subr.bf16.mxu0 0
      %1859 = vmatpush1.bf16.msra.mxu0 0
      %1860 = vmatprep.subr.bf16.mxu0 0
      %1861 = vmatpush1.bf16.msra.mxu0 0
      %1862 = vmatprep.subr.bf16.mxu0 0
      %1863 = vmatpush1.bf16.msra.mxu0 0
      %1864 = vmatprep.subr.bf16.mxu0 0
      %1865 = vmatpush1.bf16.msra.mxu0 0
      %1866 = vmatprep.subr.bf16.mxu0 0
      %1867 = vmatpush1.bf16.msra.mxu0 0
      %1868 = vmatprep.subr.bf16.mxu0 0
      %1869 = vmatpush1.bf16.msra.mxu0 0
      %1870 = vmatprep.subr.bf16.mxu0 0
      %1871 = vmatpush1.bf16.msra.mxu0 0
      %1872 = vmatprep.subr.bf16.mxu0 0
      %1873 = vmatpush1.bf16.msra.mxu0 0
      %1874 = vmatprep.subr.bf16.mxu0 0
      %1875 = vmatpush1.bf16.msra.mxu0 0
      %1876 = vmatprep.subr.bf16.mxu0 0
      %1877 = vmatpush1.bf16.msra.mxu0 0
      %1878 = vmatprep.subr.bf16.mxu0 0
      %1879 = vmatpush1.bf16.msra.mxu0 0
      %1880 = vmatprep.subr.bf16.mxu0 0
      %1881 = vmatpush1.bf16.msra.mxu0 0
      %1882 = vmatprep.mubr.bf16.mxu0 0
      %1883 = vmatmul.mubr.bf16.gmra.mrb[0].mxu0 %v1845
      %v1884 = vpop.f32.mrb[0].mxu0
      %v1885 = vadd.f32 0.0, %v1884
      %v1886 = vpop.f32.mrb[0].mxu0
      %v1887 = vpop.f32.mrb[0].mxu0
      %v1888 = vpop.f32.mrb[0].mxu0
      %1889 = vdwg.mxu0
      %v1891 = vsel %vm1364, %v1792, 0
      %v1894 = vsel %vm1608, %v1796, 0
      %1896 = vmatprep.subr.bf16.mxu0 0
      %1897 = vmatpush1.bf16.msra.mxu0 %v1894
      %1898 = vmatprep.subr.bf16.mxu0 0
      %1899 = vmatpush1.bf16.msra.mxu0 0
      %1900 = vmatprep.subr.bf16.mxu0 0
      %1901 = vmatpush1.bf16.msra.mxu0 0
      %1902 = vmatprep.subr.bf16.mxu0 0
      %1903 = vmatpush1.bf16.msra.mxu0 0
      %1904 = vmatprep.subr.bf16.mxu0 0
      %1905 = vmatpush1.bf16.msra.mxu0 0
      %1906 = vmatprep.subr.bf16.mxu0 0
      %1907 = vmatpush1.bf16.msra.mxu0 0
      %1908 = vmatprep.subr.bf16.mxu0 0
      %1909 = vmatpush1.bf16.msra.mxu0 0
      %1910 = vmatprep.subr.bf16.mxu0 0
      %1911 = vmatpush1.bf16.msra.mxu0 0
      %1912 = vmatprep.subr.bf16.mxu0 0
      %1913 = vmatpush1.bf16.msra.mxu0 0
      %1914 = vmatprep.subr.bf16.mxu0 0
      %1915 = vmatpush1.bf16.msra.mxu0 0
      %1916 = vmatprep.subr.bf16.mxu0 0
      %1917 = vmatpush1.bf16.msra.mxu0 0
      %1918 = vmatprep.subr.bf16.mxu0 0
      %1919 = vmatpush1.bf16.msra.mxu0 0
      %1920 = vmatprep.subr.bf16.mxu0 0
      %1921 = vmatpush1.bf16.msra.mxu0 0
      %1922 = vmatprep.subr.bf16.mxu0 0
      %1923 = vmatpush1.bf16.msra.mxu0 0
      %1924 = vmatprep.subr.bf16.mxu0 0
      %1925 = vmatpush1.bf16.msra.mxu0 0
      %1926 = vmatprep.subr.bf16.mxu0 0
      %1927 = vmatpush1.bf16.msra.mxu0 0
      %1928 = vmatprep.mubr.bf16.mxu0 0
      %1929 = vmatmul.mubr.bf16.gmra.mrb[0].mxu0 %v1891
      %v1930 = vpop.f32.mrb[0].mxu0
      %v1931 = vadd.f32 0.0, %v1930
      %v1932 = vpop.f32.mrb[0].mxu0
      %v1933 = vpop.f32.mrb[0].mxu0
      %v1934 = vpop.f32.mrb[0].mxu0
      %1935 = vdwg.mxu0
      %v1937 = vsel %vm1364, %v1793, 0
      %v1940 = vsel %vm1608, %v1797, 0
      %1942 = vmatprep.subr.bf16.mxu0 0
      %1943 = vmatpush1.bf16.msra.mxu0 %v1940
      %1944 = vmatprep.subr.bf16.mxu0 0
      %1945 = vmatpush1.bf16.msra.mxu0 0
      %1946 = vmatprep.subr.bf16.mxu0 0
      %1947 = vmatpush1.bf16.msra.mxu0 0
      %1948 = vmatprep.subr.bf16.mxu0 0
      %1949 = vmatpush1.bf16.msra.mxu0 0
      %1950 = vmatprep.subr.bf16.mxu0 0
      %1951 = vmatpush1.bf16.msra.mxu0 0
      %1952 = vmatprep.subr.bf16.mxu0 0
      %1953 = vmatpush1.bf16.msra.mxu0 0
      %1954 = vmatprep.subr.bf16.mxu0 0
      %1955 = vmatpush1.bf16.msra.mxu0 0
      %1956 = vmatprep.subr.bf16.mxu0 0
      %1957 = vmatpush1.bf16.msra.mxu0 0
      %1958 = vmatprep.subr.bf16.mxu0 0
      %1959 = vmatpush1.bf16.msra.mxu0 0
      %1960 = vmatprep.subr.bf16.mxu0 0
      %1961 = vmatpush1.bf16.msra.mxu0 0
      %1962 = vmatprep.subr.bf16.mxu0 0
      %1963 = vmatpush1.bf16.msra.mxu0 0
      %1964 = vmatprep.subr.bf16.mxu0 0
      %1965 = vmatpush1.bf16.msra.mxu0 0
      %1966 = vmatprep.subr.bf16.mxu0 0
      %1967 = vmatpush1.bf16.msra.mxu0 0
      %1968 = vmatprep.subr.bf16.mxu0 0
      %1969 = vmatpush1.bf16.msra.mxu0 0
      %1970 = vmatprep.subr.bf16.mxu0 0
      %1971 = vmatpush1.bf16.msra.mxu0 0
      %1972 = vmatprep.subr.bf16.mxu0 0
      %1973 = vmatpush1.bf16.msra.mxu0 0
      %1974 = vmatprep.mubr.bf16.mxu0 0
      %1975 = vmatmul.mubr.bf16.gmra.mrb[0].mxu0 %v1937
      %v1976 = vpop.f32.mrb[0].mxu0
      %v1977 = vadd.f32 0.0, %v1976
      %v1978 = vpop.f32.mrb[0].mxu0
      %v1979 = vpop.f32.mrb[0].mxu0
      %v1980 = vpop.f32.mrb[0].mxu0
      %1981 = vdwg.mxu0
      %v1982 = vsel %vm649, %v1839, 0.0
      %v1983 = vsel %vm649, %v1885, 0.0
      %v1984 = vadd.f32 %v1982, %v1983
      %v1985 = vsel %vm649, %v1931, 0.0
      %v1986 = vadd.f32 %v1984, %v1985
      %v1987 = vsel %vm649, %v1977, 0.0
      %v1988 = vadd.f32 %v1986, %v1987
      %v1989 = vld [vmem:[%s9] sm:$0x1]
      %v1991 = vlaneseq
      %v1992 = vshrl.u32 %v1991, 7
      %v1993 = vsub.s32 0, %v1992
      %v1994 = vrot.slane %v1989, %v1993
      %v1996 = vadd.f32 %v1988, %v1994
      %v1997 = vadd.f32 %v1996, %v589
      %v1998 = vld [vmem:[%s10] sm:$0x1]
      %v1999 = vld [vmem:[%s11] sm:$0x1]
      %v2000 = vsel %vm649, %v1997, 0.0
      %2001 = vadd.xlane.f32.xlu0 %v2000
      %v2002 = vpop.xlane.xlu0 %2001
      %v2003 = vrcp.pop 32.0
      %v2004 = vmul.f32 %v2002, %v2003
      %v2005 = vsub.f32 %v1997, %v2004
      %v2006 = vmul.f32 %v2005, %v2005
      %v2007 = vsel %vm649, %v2006, 0.0
      %2008 = vadd.xlane.f32.xlu0 %v2007
      %v2009 = vpop.xlane.xlu0 %2008
      %v2010 = vmul.f32 %v2009, %v2003
      %v2011 = vadd.f32 %v2010, 1e-05
      %v2012 = vrsqrt.pop %v2011
      %v2013 = vmul.f32 %v2005, %v2012
      %v2015 = vlaneseq
      %v2016 = vshrl.u32 %v2015, 7
      %v2017 = vsub.s32 0, %v2016
      %v2018 = vrot.slane %v1998, %v2017
      %v2020 = vmul.f32 %v2013, %v2018
      %v2022 = vlaneseq
      %v2023 = vshrl.u32 %v2022, 7
      %v2024 = vsub.s32 0, %v2023
      %v2025 = vrot.slane %v1999, %v2024
      %v2027 = vadd.f32 %v2020, %v2025
      %v2028 = vpack.c.bf16 %v2027, %v2027
      %v2029 = vld [vmem:[%s12] sm:$0xf]
      %v2030 = vld [vmem:[%s12 + $0x4] sm:$0xf]
      %v2031 = vld [vmem:[%s12 + $0x8] sm:$0xf]
      %v2032 = vld [vmem:[%s12 + $0xc] sm:$0xf]
      %v2033 = vld [vmem:[%s13] sm:$0x1]
      %v2035 = vlaneseq
      %v2036 = vshrl.u32 %v2035, 7
      %v2037 = vsub.s32 0, %v2036
      %v2038 = vrot.slane %v2033, %v2037
      %v2044 = vunpack.c.l.b16 %v2029
      %v2045 = vunpack.c.l.b16 %v2030
      %v2046 = vunpack.c.l.b16 %v2031
      %v2047 = vunpack.c.l.b16 %v2032
      %v2048 = vpack.c.b16 %v2045, %v2044
      %v2049 = vpack.c.b16 %v2047, %v2046
      %v2053 = vsel %vm649, %v2028, 0
      %2055 = vmatprep.subr.bf16.mxu0 0
      %2056 = vmatpush1.bf16.msra.mxu0 %v2048
      %2057 = vmatprep.subr.bf16.mxu0 0
      %2058 = vmatpush1.bf16.msra.mxu0 %v2049
      %2059 = vmatprep.subr.bf16.mxu0 0
      %2060 = vmatpush1.bf16.msra.mxu0 0
      %2061 = vmatprep.subr.bf16.mxu0 0
      %2062 = vmatpush1.bf16.msra.mxu0 0
      %2063 = vmatprep.subr.bf16.mxu0 0
      %2064 = vmatpush1.bf16.msra.mxu0 0
      %2065 = vmatprep.subr.bf16.mxu0 0
      %2066 = vmatpush1.bf16.msra.mxu0 0
      %2067 = vmatprep.subr.bf16.mxu0 0
      %2068 = vmatpush1.bf16.msra.mxu0 0
      %2069 = vmatprep.subr.bf16.mxu0 0
      %2070 = vmatpush1.bf16.msra.mxu0 0
      %2071 = vmatprep.subr.bf16.mxu0 0
      %2072 = vmatpush1.bf16.msra.mxu0 0
      %2073 = vmatprep.subr.bf16.mxu0 0
      %2074 = vmatpush1.bf16.msra.mxu0 0
      %2075 = vmatprep.subr.bf16.mxu0 0
      %2076 = vmatpush1.bf16.msra.mxu0 0
      %2077 = vmatprep.subr.bf16.mxu0 0
      %2078 = vmatpush1.bf16.msra.mxu0 0
      %2079 = vmatprep.subr.bf16.mxu0 0
      %2080 = vmatpush1.bf16.msra.mxu0 0
      %2081 = vmatprep.subr.bf16.mxu0 0
      %2082 = vmatpush1.bf16.msra.mxu0 0
      %2083 = vmatprep.subr.bf16.mxu0 0
      %2084 = vmatpush1.bf16.msra.mxu0 0
      %2085 = vmatprep.subr.bf16.mxu0 0
      %2086 = vmatpush1.bf16.msra.mxu0 0
      %2087 = vmatprep.mubr.bf16.mxu0 0
      %2088 = vmatmul.mubr.bf16.gmra.mrb[0].mxu0 %v2053
      %v2089 = vpop.f32.mrb[0].mxu0
      %v2090 = vadd.f32 %v2038, %v2089
      %v2091 = vpop.f32.mrb[0].mxu0
      %v2092 = vpop.f32.mrb[0].mxu0
      %v2093 = vpop.f32.mrb[0].mxu0
      %2094 = vdwg.mxu0
      %v2095 = vmax.f32 %v2090, 0.0
      %v2096 = vpack.c.bf16 %v2095, %v2095
      %v2097 = vld [vmem:[%s14] sm:$0xf]
      %v2098 = vld [vmem:[%s14 + $0x4] sm:$0xf]
      %v2099 = vld [vmem:[%s14 + $0x8] sm:$0xf]
      %v2100 = vld [vmem:[%s14 + $0xc] sm:$0xf]
      %v2101 = vld [vmem:[%s14 + $0x10] sm:$0xf]
      %v2102 = vld [vmem:[%s14 + $0x14] sm:$0xf]
      %v2103 = vld [vmem:[%s14 + $0x18] sm:$0xf]
      %v2104 = vld [vmem:[%s14 + $0x1c] sm:$0xf]
      %v2105 = vld [vmem:[%s14 + $0x20] sm:$0xf]
      %v2106 = vld [vmem:[%s14 + $0x24] sm:$0xf]
      %v2107 = vld [vmem:[%s14 + $0x28] sm:$0xf]
      %v2108 = vld [vmem:[%s14 + $0x2c] sm:$0xf]
      %v2109 = vld [vmem:[%s14 + $0x30] sm:$0xf]
      %v2110 = vld [vmem:[%s14 + $0x34] sm:$0xf]
      %v2111 = vld [vmem:[%s14 + $0x38] sm:$0xf]
      %v2112 = vld [vmem:[%s14 + $0x3c] sm:$0xf]
      %v2113 = vld [vmem:[%s15] sm:$0x1]
      %v2115 = vlaneseq
      %v2116 = vshrl.u32 %v2115, 7
      %v2117 = vsub.s32 0, %v2116
      %v2118 = vrot.slane %v2113, %v2117
      %v2136 = vunpack.c.l.b16 %v2097
      %v2137 = vunpack.c.l.b16 %v2098
      %v2138 = vunpack.c.l.b16 %v2099
      %v2139 = vunpack.c.l.b16 %v2100
      %v2140 = vunpack.c.l.b16 %v2101
      %v2141 = vunpack.c.l.b16 %v2102
      %v2142 = vunpack.c.l.b16 %v2103
      %v2143 = vunpack.c.l.b16 %v2104
      %v2144 = vunpack.c.l.b16 %v2105
      %v2145 = vunpack.c.l.b16 %v2106
      %v2146 = vunpack.c.l.b16 %v2107
      %v2147 = vunpack.c.l.b16 %v2108
      %v2148 = vunpack.c.l.b16 %v2109
      %v2149 = vunpack.c.l.b16 %v2110
      %v2150 = vunpack.c.l.b16 %v2111
      %v2151 = vunpack.c.l.b16 %v2112
      %v2152 = vpack.c.b16 %v2137, %v2136
      %v2153 = vpack.c.b16 %v2139, %v2138
      %v2154 = vpack.c.b16 %v2141, %v2140
      %v2155 = vpack.c.b16 %v2143, %v2142
      %v2156 = vpack.c.b16 %v2145, %v2144
      %v2157 = vpack.c.b16 %v2147, %v2146
      %v2158 = vpack.c.b16 %v2149, %v2148
      %v2159 = vpack.c.b16 %v2151, %v2150
      %2168 = vmatprep.subr.bf16.mxu0 0
      %2169 = vmatpush1.bf16.msra.mxu0 %v2152
      %2170 = vmatprep.subr.bf16.mxu0 0
      %2171 = vmatpush1.bf16.msra.mxu0 %v2153
      %2172 = vmatprep.subr.bf16.mxu0 0
      %2173 = vmatpush1.bf16.msra.mxu0 %v2154
      %2174 = vmatprep.subr.bf16.mxu0 0
      %2175 = vmatpush1.bf16.msra.mxu0 %v2155
      %2176 = vmatprep.subr.bf16.mxu0 0
      %2177 = vmatpush1.bf16.msra.mxu0 %v2156
      %2178 = vmatprep.subr.bf16.mxu0 0
      %2179 = vmatpush1.bf16.msra.mxu0 %v2157
      %2180 = vmatprep.subr.bf16.mxu0 0
      %2181 = vmatpush1.bf16.msra.mxu0 %v2158
      %2182 = vmatprep.subr.bf16.mxu0 0
      %2183 = vmatpush1.bf16.msra.mxu0 %v2159
      %2184 = vmatprep.subr.bf16.mxu0 0
      %2185 = vmatpush1.bf16.msra.mxu0 0
      %2186 = vmatprep.subr.bf16.mxu0 0
      %2187 = vmatpush1.bf16.msra.mxu0 0
      %2188 = vmatprep.subr.bf16.mxu0 0
      %2189 = vmatpush1.bf16.msra.mxu0 0
      %2190 = vmatprep.subr.bf16.mxu0 0
      %2191 = vmatpush1.bf16.msra.mxu0 0
      %2192 = vmatprep.subr.bf16.mxu0 0
      %2193 = vmatpush1.bf16.msra.mxu0 0
      %2194 = vmatprep.subr.bf16.mxu0 0
      %2195 = vmatpush1.bf16.msra.mxu0 0
      %2196 = vmatprep.subr.bf16.mxu0 0
      %2197 = vmatpush1.bf16.msra.mxu0 0
      %2198 = vmatprep.subr.bf16.mxu0 0
      %2199 = vmatpush1.bf16.msra.mxu0 0
      %2200 = vmatprep.mubr.bf16.mxu0 0
      %2201 = vmatmul.mubr.bf16.gmra.mrb[0].mxu0 %v2096
      %v2202 = vpop.f32.mrb[0].mxu0
      %v2203 = vadd.f32 %v2118, %v2202
      %v2204 = vpop.f32.mrb[0].mxu0
      %v2205 = vpop.f32.mrb[0].mxu0
      %v2206 = vpop.f32.mrb[0].mxu0
      %2207 = vdwg.mxu0
      %v2208 = vadd.f32 %v2203, %v2027
      %v2209 = vld [vmem:[%s16] sm:$0x1]
      %v2210 = vld [vmem:[%s17] sm:$0x1]
      %v2211 = vsel %vm649, %v2208, 0.0
      %2212 = vadd.xlane.f32.xlu0 %v2211
      %v2213 = vpop.xlane.xlu0 %2212
      %v2214 = vmul.f32 %v2213, %v2003
      %v2215 = vsub.f32 %v2208, %v2214
      %v2216 = vmul.f32 %v2215, %v2215
      %v2217 = vsel %vm649, %v2216, 0.0
      %2218 = vadd.xlane.f32.xlu0 %v2217
      %v2219 = vpop.xlane.xlu0 %2218
      %v2220 = vmul.f32 %v2219, %v2003
      %v2221 = vadd.f32 %v2220, 1e-05
      %v2222 = vrsqrt.pop %v2221
      %v2223 = vmul.f32 %v2215, %v2222
      %v2225 = vlaneseq
      %v2226 = vshrl.u32 %v2225, 7
      %v2227 = vsub.s32 0, %v2226
      %v2228 = vrot.slane %v2209, %v2227
      %v2230 = vmul.f32 %v2223, %v2228
      %v2232 = vlaneseq
      %v2233 = vshrl.u32 %v2232, 7
      %v2234 = vsub.s32 0, %v2233
      %v2235 = vrot.slane %v2210, %v2234
      %v2237 = vadd.f32 %v2230, %v2235
      %2238 = vst.msk [vmem:[%s587] sm:$0xff] %vm649, %v2237
      %p2239 = scmp.lt.s32.totalorder %s29, 1
      %s2240 = scalar_select %p2239, %s29, 1
      %s2241 = smul.addr %s2240, 8
      %s2242 = scalar_lea.vmem %s18, %s2241
      // Predicated region
      $region93: #{transformer_forward.7} parent=91 // pred_check
        %p2243 = pneg %p435
      $region94: #{transformer_forward.7} parent=91 // pred_check_branch
        %2245 = sbr.rel (%p2243) target = $region96
      $region95: #{transformer_forward.7} parent=91 // pred_region
        _
      $region96: #{transformer_forward.7} parent=91 // pred_fallthru
        _
    $region92: #{transformer_forward.7} parent=5 // pred_fallthru
      _
    %p2246 = scmp.le.s32.totalorder 2, %s24
    // Predicated region
    $region97: #{transformer_forward.7} parent=5 // pred_check
      %p2247 = pneg %p2246
    $region98: #{transformer_forward.7} parent=5 // pred_check_branch
      %2249 = sbr.rel (%p2247) target = $region100
    $region99: #{transformer_forward.7} parent=5 // pred_region
      %s2250 = ssub.s32 %s24, 2
      // Predicated region
      $region101: #{transformer_forward.7} parent=99 // pred_check
        %p2251 = pneg %p441
      $region102: #{transformer_forward.7} parent=99 // pred_check_branch
        %2253 = sbr.rel (%p2251) target = $region104
      $region103: #{transformer_forward.7} parent=99 // pred_region
        %p2254 = scmp.lt.s32.totalorder %s30, 1
        %s2255 = scalar_select %p2254, %s30, 1
        %s2256 = smul.addr %s2255, 8
        %s2257 = scalar_lea.vmem %s18, %s2256
      $region104: #{transformer_forward.7} parent=99 // pred_fallthru
        _
    $region100: #{transformer_forward.7} parent=5 // pred_fallthru
      _
  $region6: #{transformer_forward.7} parent=0 // loop_footer
    %s28 = sadd.s32 1, %s24
  $region7: #{transformer_forward.7} parent=0 // loop_footer_branch
    %23 = sbr.rel target = $region3
  $region8: #{transformer_forward.7} parent=0 // loop_exit
    _

</llo_original>
